<compile_context>
chip_gen: v6e
topology: v6e:2x2x1
jax: 0.10.0
libtpu: 0.0.40
codegen_flags: <defaults>
</compile_context>

<pallas_src>
import functools

import jax
import jax.numpy as jnp
from jax.experimental import pallas as pl
from jax.experimental.pallas import tpu as pltpu

# Small, forward-consistent sizes (module hardcodes 768/256/32; scaled down).
EMBEDDING_DIM = 64
LSTM_HIDDEN = 32
LINEAR_HIDDEN = 32
VOCAB = 128


# ---------------------------------------------------------------------------
# Fused kernel: BiLSTM over both posts + span representation + MLP head.
#
# adu_idx_ref (SMEM): [B_eff, 2] int32; rows 0..B-1 = post_1 spans,
#                     rows B..2B-1 = post_2 spans.
# x_ref:        [T*B_eff, E] time-major, rows grouped by timestep.
# wih_all_ref:  [E, 8H]  = concat(W_ih_fwd, W_ih_bwd)
# whh_f_ref / whh_b_ref: [H, 4H]
# bias_all_ref: [1, 8H]  = concat(b_ih_f+b_hh_f, b_ih_b+b_hh_b)
# w1_ref: [8H, LH]  b1_ref: [1, LH]  w2_row_ref: [1, LH]  b2_ref: [1, 1]
# out_ref: [B, 1] sigmoid link probability.
# scratch: gx_ref [T*B_eff, 8H], hf_ref [T, B_eff, H], hb_ref [T, B_eff, H]
# ---------------------------------------------------------------------------
def fused_kernel(adu_idx_ref, x_ref, wih_all_ref, whh_f_ref, whh_b_ref,
                 bias_all_ref, w1_ref, b1_ref, w2_row_ref, b2_ref,
                 out_ref, gx_ref, hf_ref, hb_ref, *, T, B, B_eff, H):
    G = 4 * H

    # --- 1) Hoisted input projection: one MXU matmul for all timesteps and
    #        both directions, with the combined bias folded in. ---------------
    gx_ref[...] = (jnp.dot(x_ref[...], wih_all_ref[...],
                           preferred_element_type=jnp.float32)
                   + bias_all_ref[...])

    # Recurrent weights loaded once, resident in vregs for the whole loop.
    whh_f = whh_f_ref[...]
    whh_b = whh_b_ref[...]

    def cell(gx_t, h, c, whh):
        # Gate buffer is [B_eff, 4H] = one 128-lane row; static 32-multiple slices.
        gates = gx_t + jnp.dot(h, whh, preferred_element_type=jnp.float32)
        i = jax.nn.sigmoid(gates[:, 0:H])
        f = jax.nn.sigmoid(gates[:, H:2 * H])
        g = jnp.tanh(gates[:, 2 * H:3 * H])
        o = jax.nn.sigmoid(gates[:, 3 * H:4 * H])
        c_new = f * c + i * g
        h_new = o * jnp.tanh(c_new)
        return h_new, c_new

    zeros = jnp.zeros((B_eff, H), jnp.float32)
    h_f, c_f = zeros, zeros
    h_b, c_b = zeros, zeros

    # --- 2) Fully-unrolled recurrence (T static & small): only the tiny
    #        [B_eff,H] x [H,4H] recurrent dot remains per step/direction. ------
    for t in range(T):
        tb = T - 1 - t
        gx_f = gx_ref[t * B_eff:(t + 1) * B_eff, 0:G]
        gx_b = gx_ref[tb * B_eff:(tb + 1) * B_eff, G:2 * G]
        h_f, c_f = cell(gx_f, h_f, c_f, whh_f)
        h_b, c_b = cell(gx_b, h_b, c_b, whh_b)
        hf_ref[t] = h_f
        hb_ref[tb] = h_b

    # --- 3) Span-representation epilogue (torch _span_representation), done
    #        in-kernel so the hidden sequences never round-trip through HBM. --
    spans = []
    for r in range(B_eff):
        i_idx = adu_idx_ref[r, 0]
        j_idx = adu_idx_ref[r, 1]
        # torch wraps index -1 to the last row; clamp j+1 (torch would raise)
        # to avoid an unchecked OOB VMEM read on bad production inputs.
        im1 = jnp.where(i_idx - 1 < 0, T - 1, i_idx - 1)
        jp1 = jnp.where(j_idx + 1 > T - 1, T - 1, j_idx + 1)
        fwd_j = hf_ref[j_idx][r:r + 1, :]
        fwd_im1 = hf_ref[im1][r:r + 1, :]
        bwd_i = hb_ref[i_idx][r:r + 1, :]
        bwd_jp1 = hb_ref[jp1][r:r + 1, :]
        spans.append(jnp.concatenate(
            [fwd_j - fwd_im1, bwd_i - bwd_jp1, fwd_im1, bwd_jp1], axis=1))  # [1,4H]
    adu_1 = jnp.concatenate(spans[:B], axis=0)        # [B, 4H]  (post_1 spans)
    adu_2 = jnp.concatenate(spans[B:], axis=0)        # [B, 4H]  (post_2 spans)
    adus = jnp.concatenate([adu_1, adu_2], axis=1)    # [B, 8H]

    # --- 4) MLP head: relu(adus @ W1 + b1); the [LH,1] second layer is a VPU
    #        multiply + lane reduction (no wasted MXU push); sigmoid (task='link').
    h1 = jnp.maximum(
        jnp.dot(adus, w1_ref[...], preferred_element_type=jnp.float32)
        + b1_ref[...], 0.0)                                           # [B, LH]
    logits = jnp.sum(h1 * w2_row_ref[...], axis=1, keepdims=True) + b2_ref[...]
    out_ref[...] = jax.nn.sigmoid(logits)


# ---------------------------------------------------------------------------
# Parameters (deterministic init) and full forward.
# ---------------------------------------------------------------------------
def init_params(key):
    ks = jax.random.split(key, 12)
    H, E, LH = LSTM_HIDDEN, EMBEDDING_DIM, LINEAR_HIDDEN
    s = 0.05
    wih_f = jax.random.normal(ks[1], (E, 4 * H), jnp.float32) * s
    whh_f = jax.random.normal(ks[2], (H, 4 * H), jnp.float32) * s
    b_f = jax.random.normal(ks[3], (1, 4 * H), jnp.float32) * s     # b_ih + b_hh
    wih_b = jax.random.normal(ks[4], (E, 4 * H), jnp.float32) * s
    whh_b = jax.random.normal(ks[5], (H, 4 * H), jnp.float32) * s
    b_b = jax.random.normal(ks[6], (1, 4 * H), jnp.float32) * s
    w2 = jax.random.normal(ks[9], (LH, 1), jnp.float32) * s
    return {
        "embed_table": jax.random.normal(ks[0], (VOCAB, E), jnp.float32) * s,
        "wih_all": jnp.concatenate([wih_f, wih_b], axis=1),          # [E, 8H]
        "whh_f": whh_f,
        "whh_b": whh_b,
        "bias_all": jnp.concatenate([b_f, b_b], axis=1),             # [1, 8H]
        "w1": jax.random.normal(ks[7], (8 * H, LH), jnp.float32) * s,
        "b1": jax.random.normal(ks[8], (1, LH), jnp.float32) * s,
        "w2_row": w2.T,                                              # [1, LH]
        "b2": jax.random.normal(ks[10], (1, 1), jnp.float32) * s,
    }


@jax.jit
def model_adu_relation_forward(params, post_1, post_2, post_1_mask, post_2_mask,
                               adu_1_index, adu_2_index):
    B, T = post_1.shape
    E, H = EMBEDDING_DIM, LSTM_HIDDEN
    B_eff = 2 * B

    # "BERT" stand-in: deterministic embedding lookup, masked by attention mask.
    # TODO(synk): frozen pretrained BERT encoder has no clean Pallas equivalent.
    emb1 = params["embed_table"][post_1] * post_1_mask[..., None].astype(jnp.float32)
    emb2 = params["embed_table"][post_2] * post_2_mask[..., None].astype(jnp.float32)
    # dropout: identity at inference.

    # Fuse both posts on the batch axis, go time-major, flatten to [T*B_eff, E]
    # so the kernel can hoist the input projection into a single MXU matmul.
    x = jnp.concatenate([emb1, emb2], axis=0)                   # [B_eff, T, E]
    x = jnp.transpose(x, (1, 0, 2)).reshape(T * B_eff, E)       # rows grouped by t
    adu_idx = jnp.concatenate([adu_1_index, adu_2_index], axis=0).astype(jnp.int32)

    kernel = functools.partial(fused_kernel, T=T, B=B, B_eff=B_eff, H=H)
    vmem = pl.BlockSpec(memory_space=pltpu.MemorySpace.VMEM)
    smem = pl.BlockSpec(memory_space=pltpu.MemorySpace.SMEM)
    pred = pl.pallas_call(
        kernel,
        out_shape=jax.ShapeDtypeStruct((B, 1), jnp.float32),
        in_specs=[smem] + [vmem] * 9,
        out_specs=vmem,
        scratch_shapes=[
            pltpu.VMEM((T * B_eff, 8 * H), jnp.float32),   # hoisted gate preacts
            pltpu.VMEM((T, B_eff, H), jnp.float32),        # forward hidden seq
            pltpu.VMEM((T, B_eff, H), jnp.float32),        # backward hidden seq
        ],
    )(adu_idx, x, params["wih_all"], params["whh_f"], params["whh_b"],
      params["bias_all"], params["w1"], params["b1"], params["w2_row"],
      params["b2"])
    return pred.reshape(-1)   # task == 'link'


if __name__ == "__main__":
    B, T = 2, 16
    key = jax.random.PRNGKey(0)
    k_params, k_p1, k_p2 = jax.random.split(key, 3)

    params = init_params(k_params)

    post_1 = jax.random.randint(k_p1, (B, T), 0, VOCAB, dtype=jnp.int32)
    post_2 = jax.random.randint(k_p2, (B, T), 0, VOCAB, dtype=jnp.int32)
    post_1_mask = jnp.ones((B, T), jnp.float32)
    post_2_mask = jnp.ones((B, T), jnp.float32)
    # indices chosen so that index[:,0]-1 >= 0 and index[:,1]+1 <= T-1
    adu_1_index = jnp.array([[2, 5], [3, 7]], jnp.int32)
    adu_2_index = jnp.array([[1, 4], [2, 9]], jnp.int32)

    out = model_adu_relation_forward(params, post_1, post_2, post_1_mask,
                                     post_2_mask, adu_1_index, adu_2_index)
    out = jax.block_until_ready(out)
    assert out.shape == (B,)
    assert bool(jnp.all(jnp.isfinite(out)))
    print("KERNEL_OK")
</pallas_src>

<mosaic_0001>
module attributes {stable_mosaic.version = 11 : i64} {
  func.func @fused_kernel(%arg0: memref<4x2xi32, #tpu.memory_space<smem>>, %arg1: memref<64x64xf32, #tpu.memory_space<vmem>>, %arg2: memref<64x256xf32, #tpu.memory_space<vmem>>, %arg3: memref<32x128xf32, #tpu.memory_space<vmem>>, %arg4: memref<32x128xf32, #tpu.memory_space<vmem>>, %arg5: memref<1x256xf32, #tpu.memory_space<vmem>>, %arg6: memref<256x32xf32, #tpu.memory_space<vmem>>, %arg7: memref<1x32xf32, #tpu.memory_space<vmem>>, %arg8: memref<1x32xf32, #tpu.memory_space<vmem>>, %arg9: memref<1x1xf32, #tpu.memory_space<vmem>>, %arg10: memref<2x1xf32, #tpu.memory_space<vmem>>, %arg11: memref<64x256xf32, #tpu.memory_space<vmem>>, %arg12: memref<16x4x32xf32, #tpu.memory_space<vmem>>, %arg13: memref<16x4x32xf32, #tpu.memory_space<vmem>>) attributes {dimension_semantics = [], scalar_prefetch = 0 : i64, scratch_operands = 3 : i64, tpu.core_type = #tpu.core_type<tc>} {
    %c0 = arith.constant 0 : index
    %c0_0 = arith.constant 0 : index
    %0 = vector.load %arg1[%c0, %c0_0] : memref<64x64xf32, #tpu.memory_space<vmem>>, vector<64x64xf32>
    %c0_1 = arith.constant 0 : index
    %c0_2 = arith.constant 0 : index
    %1 = vector.load %arg2[%c0_1, %c0_2] : memref<64x256xf32, #tpu.memory_space<vmem>>, vector<64x256xf32>
    %cst = arith.constant dense<0.000000e+00> : vector<64x256xf32>
    %2 = tpu.matmul %0, %1, %cst {dimension_numbers = #tpu.dot_dimension_numbers<[1], [0], [0], [1], [0, 0, 1, 1], [], []>} : vector<64x64xf32>, vector<64x256xf32>, vector<64x256xf32> -> vector<64x256xf32>
    %c0_3 = arith.constant 0 : index
    %c0_4 = arith.constant 0 : index
    %3 = vector.load %arg5[%c0_3, %c0_4] : memref<1x256xf32, #tpu.memory_space<vmem>>, vector<1x256xf32>
    %4 = vector.broadcast %3 : vector<1x256xf32> to vector<64x256xf32>
    %5 = arith.addf %2, %4 : vector<64x256xf32>
    %c0_5 = arith.constant 0 : index
    %c0_6 = arith.constant 0 : index
    %6 = vector.load %arg11[%c0_5, %c0_6] : memref<64x256xf32, #tpu.memory_space<vmem>>, vector<64x256xf32>
    tpu.vector_store %arg11[%c0_5, %c0_6], %5 {strides = array<i32>} : memref<64x256xf32, #tpu.memory_space<vmem>>, vector<64x256xf32>,
    %c0_7 = arith.constant 0 : index
    %c0_8 = arith.constant 0 : index
    %7 = vector.load %arg3[%c0_7, %c0_8] : memref<32x128xf32, #tpu.memory_space<vmem>>, vector<32x128xf32>
    %c0_9 = arith.constant 0 : index
    %c0_10 = arith.constant 0 : index
    %8 = vector.load %arg4[%c0_9, %c0_10] : memref<32x128xf32, #tpu.memory_space<vmem>>, vector<32x128xf32>
    %cst_11 = arith.constant 0.000000e+00 : f32
    %9 = vector.broadcast %cst_11 : f32 to vector<4x32xf32>
    %c0_12 = arith.constant 0 : index
    %c0_13 = arith.constant 0 : index
    %10 = vector.load %arg11[%c0_12, %c0_13] : memref<64x256xf32, #tpu.memory_space<vmem>>, vector<4x128xf32>
    %c60 = arith.constant 60 : index
    %c128 = arith.constant 128 : index
    %11 = vector.load %arg11[%c60, %c128] : memref<64x256xf32, #tpu.memory_space<vmem>>, vector<4x128xf32>
    %cst_14 = arith.constant dense<0.000000e+00> : vector<4x128xf32>
    %12 = tpu.matmul %9, %7, %cst_14 {dimension_numbers = #tpu.dot_dimension_numbers<[1], [0], [0], [1], [0, 0, 1, 1], [], []>} : vector<4x32xf32>, vector<32x128xf32>, vector<4x128xf32> -> vector<4x128xf32>
    %13 = arith.addf %10, %12 : vector<4x128xf32>
    %14 = vector.extract_strided_slice %13 {offsets = [0, 0], sizes = [4, 32], strides = [1, 1]} : vector<4x128xf32> to vector<4x32xf32>
    %15 = arith.negf %14 : vector<4x32xf32>
    %16 = math.exp %15 : vector<4x32xf32>
    %cst_15 = arith.constant 1.000000e+00 : f32
    %17 = vector.broadcast %cst_15 : f32 to vector<4x32xf32>
    %18 = arith.addf %17, %16 : vector<4x32xf32>
    %19 = arith.divf %17, %18 : vector<4x32xf32>
    %20 = vector.extract_strided_slice %13 {offsets = [0, 32], sizes = [4, 32], strides = [1, 1]} : vector<4x128xf32> to vector<4x32xf32>
    %21 = arith.negf %20 : vector<4x32xf32>
    %22 = math.exp %21 : vector<4x32xf32>
    %cst_16 = arith.constant 1.000000e+00 : f32
    %23 = vector.broadcast %cst_16 : f32 to vector<4x32xf32>
    %24 = arith.addf %23, %22 : vector<4x32xf32>
    %25 = arith.divf %23, %24 : vector<4x32xf32>
    %26 = vector.extract_strided_slice %13 {offsets = [0, 64], sizes = [4, 32], strides = [1, 1]} : vector<4x128xf32> to vector<4x32xf32>
    %27 = math.tanh %26 : vector<4x32xf32>
    %28 = vector.extract_strided_slice %13 {offsets = [0, 96], sizes = [4, 32], strides = [1, 1]} : vector<4x128xf32> to vector<4x32xf32>
    %29 = arith.negf %28 : vector<4x32xf32>
    %30 = math.exp %29 : vector<4x32xf32>
    %cst_17 = arith.constant 1.000000e+00 : f32
    %31 = vector.broadcast %cst_17 : f32 to vector<4x32xf32>
    %32 = arith.addf %31, %30 : vector<4x32xf32>
    %33 = arith.divf %31, %32 : vector<4x32xf32>
    %34 = arith.mulf %25, %9 : vector<4x32xf32>
    %35 = arith.mulf %19, %27 : vector<4x32xf32>
    %36 = arith.addf %34, %35 : vector<4x32xf32>
    %37 = math.tanh %36 : vector<4x32xf32>
    %38 = arith.mulf %33, %37 : vector<4x32xf32>
    %cst_18 = arith.constant dense<0.000000e+00> : vector<4x128xf32>
    %39 = tpu.matmul %9, %8, %cst_18 {dimension_numbers = #tpu.dot_dimension_numbers<[1], [0], [0], [1], [0, 0, 1, 1], [], []>} : vector<4x32xf32>, vector<32x128xf32>, vector<4x128xf32> -> vector<4x128xf32>
    %40 = arith.addf %11, %39 : vector<4x128xf32>
    %41 = vector.extract_strided_slice %40 {offsets = [0, 0], sizes = [4, 32], strides = [1, 1]} : vector<4x128xf32> to vector<4x32xf32>
    %42 = arith.negf %41 : vector<4x32xf32>
    %43 = math.exp %42 : vector<4x32xf32>
    %cst_19 = arith.constant 1.000000e+00 : f32
    %44 = vector.broadcast %cst_19 : f32 to vector<4x32xf32>
    %45 = arith.addf %44, %43 : vector<4x32xf32>
    %46 = arith.divf %44, %45 : vector<4x32xf32>
    %47 = vector.extract_strided_slice %40 {offsets = [0, 32], sizes = [4, 32], strides = [1, 1]} : vector<4x128xf32> to vector<4x32xf32>
    %48 = arith.negf %47 : vector<4x32xf32>
    %49 = math.exp %48 : vector<4x32xf32>
    %cst_20 = arith.constant 1.000000e+00 : f32
    %50 = vector.broadcast %cst_20 : f32 to vector<4x32xf32>
    %51 = arith.addf %50, %49 : vector<4x32xf32>
    %52 = arith.divf %50, %51 : vector<4x32xf32>
    %53 = vector.extract_strided_slice %40 {offsets = [0, 64], sizes = [4, 32], strides = [1, 1]} : vector<4x128xf32> to vector<4x32xf32>
    %54 = math.tanh %53 : vector<4x32xf32>
    %55 = vector.extract_strided_slice %40 {offsets = [0, 96], sizes = [4, 32], strides = [1, 1]} : vector<4x128xf32> to vector<4x32xf32>
    %56 = arith.negf %55 : vector<4x32xf32>
    %57 = math.exp %56 : vector<4x32xf32>
    %cst_21 = arith.constant 1.000000e+00 : f32
    %58 = vector.broadcast %cst_21 : f32 to vector<4x32xf32>
    %59 = arith.addf %58, %57 : vector<4x32xf32>
    %60 = arith.divf %58, %59 : vector<4x32xf32>
    %61 = arith.mulf %52, %9 : vector<4x32xf32>
    %62 = arith.mulf %46, %54 : vector<4x32xf32>
    %63 = arith.addf %61, %62 : vector<4x32xf32>
    %64 = math.tanh %63 : vector<4x32xf32>
    %65 = arith.mulf %60, %64 : vector<4x32xf32>
    %c0_22 = arith.constant 0 : index
    %c0_23 = arith.constant 0 : index
    %c0_24 = arith.constant 0 : index
    %66 = vector.load %arg12[%c0_22, %c0_23, %c0_24] : memref<16x4x32xf32, #tpu.memory_space<vmem>>, vector<1x4x32xf32>
    %67 = vector.shape_cast %66 : vector<1x4x32xf32> to vector<4x32xf32>
    %68 = vector.shape_cast %38 : vector<4x32xf32> to vector<1x4x32xf32>
    tpu.vector_store %arg12[%c0_22, %c0_23, %c0_24], %68 {strides = array<i32>} : memref<16x4x32xf32, #tpu.memory_space<vmem>>, vector<1x4x32xf32>,
    %c15 = arith.constant 15 : index
    %c0_25 = arith.constant 0 : index
    %c0_26 = arith.constant 0 : index
    %69 = vector.load %arg13[%c15, %c0_25, %c0_26] : memref<16x4x32xf32, #tpu.memory_space<vmem>>, vector<1x4x32xf32>
    %70 = vector.shape_cast %69 : vector<1x4x32xf32> to vector<4x32xf32>
    %71 = vector.shape_cast %65 : vector<4x32xf32> to vector<1x4x32xf32>
    tpu.vector_store %arg13[%c15, %c0_25, %c0_26], %71 {strides = array<i32>} : memref<16x4x32xf32, #tpu.memory_space<vmem>>, vector<1x4x32xf32>,
    %c4 = arith.constant 4 : index
    %c0_27 = arith.constant 0 : index
    %72 = vector.load %arg11[%c4, %c0_27] : memref<64x256xf32, #tpu.memory_space<vmem>>, vector<4x128xf32>
    %c56 = arith.constant 56 : index
    %c128_28 = arith.constant 128 : index
    %73 = vector.load %arg11[%c56, %c128_28] : memref<64x256xf32, #tpu.memory_space<vmem>>, vector<4x128xf32>
    %cst_29 = arith.constant dense<0.000000e+00> : vector<4x128xf32>
    %74 = tpu.matmul %38, %7, %cst_29 {dimension_numbers = #tpu.dot_dimension_numbers<[1], [0], [0], [1], [0, 0, 1, 1], [], []>} : vector<4x32xf32>, vector<32x128xf32>, vector<4x128xf32> -> vector<4x128xf32>
    %75 = arith.addf %72, %74 : vector<4x128xf32>
    %76 = vector.extract_strided_slice %75 {offsets = [0, 0], sizes = [4, 32], strides = [1, 1]} : vector<4x128xf32> to vector<4x32xf32>
    %77 = arith.negf %76 : vector<4x32xf32>
    %78 = math.exp %77 : vector<4x32xf32>
    %cst_30 = arith.constant 1.000000e+00 : f32
    %79 = vector.broadcast %cst_30 : f32 to vector<4x32xf32>
    %80 = arith.addf %79, %78 : vector<4x32xf32>
    %81 = arith.divf %79, %80 : vector<4x32xf32>
    %82 = vector.extract_strided_slice %75 {offsets = [0, 32], sizes = [4, 32], strides = [1, 1]} : vector<4x128xf32> to vector<4x32xf32>
    %83 = arith.negf %82 : vector<4x32xf32>
    %84 = math.exp %83 : vector<4x32xf32>
    %cst_31 = arith.constant 1.000000e+00 : f32
    %85 = vector.broadcast %cst_31 : f32 to vector<4x32xf32>
    %86 = arith.addf %85, %84 : vector<4x32xf32>
    %87 = arith.divf %85, %86 : vector<4x32xf32>
    %88 = vector.extract_strided_slice %75 {offsets = [0, 64], sizes = [4, 32], strides = [1, 1]} : vector<4x128xf32> to vector<4x32xf32>
    %89 = math.tanh %88 : vector<4x32xf32>
    %90 = vector.extract_strided_slice %75 {offsets = [0, 96], sizes = [4, 32], strides = [1, 1]} : vector<4x128xf32> to vector<4x32xf32>
    %91 = arith.negf %90 : vector<4x32xf32>
    %92 = math.exp %91 : vector<4x32xf32>
    %cst_32 = arith.constant 1.000000e+00 : f32
    %93 = vector.broadcast %cst_32 : f32 to vector<4x32xf32>
    %94 = arith.addf %93, %92 : vector<4x32xf32>
    %95 = arith.divf %93, %94 : vector<4x32xf32>
    %96 = arith.mulf %87, %36 : vector<4x32xf32>
    %97 = arith.mulf %81, %89 : vector<4x32xf32>
    %98 = arith.addf %96, %97 : vector<4x32xf32>
    %99 = math.tanh %98 : vector<4x32xf32>
    %100 = arith.mulf %95, %99 : vector<4x32xf32>
    %cst_33 = arith.constant dense<0.000000e+00> : vector<4x128xf32>
    %101 = tpu.matmul %65, %8, %cst_33 {dimension_numbers = #tpu.dot_dimension_numbers<[1], [0], [0], [1], [0, 0, 1, 1], [], []>} : vector<4x32xf32>, vector<32x128xf32>, vector<4x128xf32> -> vector<4x128xf32>
    %102 = arith.addf %73, %101 : vector<4x128xf32>
    %103 = vector.extract_strided_slice %102 {offsets = [0, 0], sizes = [4, 32], strides = [1, 1]} : vector<4x128xf32> to vector<4x32xf32>
    %104 = arith.negf %103 : vector<4x32xf32>
    %105 = math.exp %104 : vector<4x32xf32>
    %cst_34 = arith.constant 1.000000e+00 : f32
    %106 = vector.broadcast %cst_34 : f32 to vector<4x32xf32>
    %107 = arith.addf %106, %105 : vector<4x32xf32>
    %108 = arith.divf %106, %107 : vector<4x32xf32>
    %109 = vector.extract_strided_slice %102 {offsets = [0, 32], sizes = [4, 32], strides = [1, 1]} : vector<4x128xf32> to vector<4x32xf32>
    %110 = arith.negf %109 : vector<4x32xf32>
    %111 = math.exp %110 : vector<4x32xf32>
    %cst_35 = arith.constant 1.000000e+00 : f32
    %112 = vector.broadcast %cst_35 : f32 to vector<4x32xf32>
    %113 = arith.addf %112, %111 : vector<4x32xf32>
    %114 = arith.divf %112, %113 : vector<4x32xf32>
    %115 = vector.extract_strided_slice %102 {offsets = [0, 64], sizes = [4, 32], strides = [1, 1]} : vector<4x128xf32> to vector<4x32xf32>
    %116 = math.tanh %115 : vector<4x32xf32>
    %117 = vector.extract_strided_slice %102 {offsets = [0, 96], sizes = [4, 32], strides = [1, 1]} : vector<4x128xf32> to vector<4x32xf32>
    %118 = arith.negf %117 : vector<4x32xf32>
    %119 = math.exp %118 : vector<4x32xf32>
    %cst_36 = arith.constant 1.000000e+00 : f32
    %120 = vector.broadcast %cst_36 : f32 to vector<4x32xf32>
    %121 = arith.addf %120, %119 : vector<4x32xf32>
    %122 = arith.divf %120, %121 : vector<4x32xf32>
    %123 = arith.mulf %114, %63 : vector<4x32xf32>
    %124 = arith.mulf %108, %116 : vector<4x32xf32>
    %125 = arith.addf %123, %124 : vector<4x32xf32>
    %126 = math.tanh %125 : vector<4x32xf32>
    %127 = arith.mulf %122, %126 : vector<4x32xf32>
    %c1 = arith.constant 1 : index
    %c0_37 = arith.constant 0 : index
    %c0_38 = arith.constant 0 : index
    %128 = vector.load %arg12[%c1, %c0_37, %c0_38] : memref<16x4x32xf32, #tpu.memory_space<vmem>>, vector<1x4x32xf32>
    %129 = vector.shape_cast %128 : vector<1x4x32xf32> to vector<4x32xf32>
    %130 = vector.shape_cast %100 : vector<4x32xf32> to vector<1x4x32xf32>
    tpu.vector_store %arg12[%c1, %c0_37, %c0_38], %130 {strides = array<i32>} : memref<16x4x32xf32, #tpu.memory_space<vmem>>, vector<1x4x32xf32>,
    %c14 = arith.constant 14 : index
    %c0_39 = arith.constant 0 : index
    %c0_40 = arith.constant 0 : index
    %131 = vector.load %arg13[%c14, %c0_39, %c0_40] : memref<16x4x32xf32, #tpu.memory_space<vmem>>, vector<1x4x32xf32>
    %132 = vector.shape_cast %131 : vector<1x4x32xf32> to vector<4x32xf32>
    %133 = vector.shape_cast %127 : vector<4x32xf32> to vector<1x4x32xf32>
    tpu.vector_store %arg13[%c14, %c0_39, %c0_40], %133 {strides = array<i32>} : memref<16x4x32xf32, #tpu.memory_space<vmem>>, vector<1x4x32xf32>,
    %c8 = arith.constant 8 : index
    %c0_41 = arith.constant 0 : index
    %134 = vector.load %arg11[%c8, %c0_41] : memref<64x256xf32, #tpu.memory_space<vmem>>, vector<4x128xf32>
    %c52 = arith.constant 52 : index
    %c128_42 = arith.constant 128 : index
    %135 = vector.load %arg11[%c52, %c128_42] : memref<64x256xf32, #tpu.memory_space<vmem>>, vector<4x128xf32>
    %cst_43 = arith.constant dense<0.000000e+00> : vector<4x128xf32>
    %136 = tpu.matmul %100, %7, %cst_43 {dimension_numbers = #tpu.dot_dimension_numbers<[1], [0], [0], [1], [0, 0, 1, 1], [], []>} : vector<4x32xf32>, vector<32x128xf32>, vector<4x128xf32> -> vector<4x128xf32>
    %137 = arith.addf %134, %136 : vector<4x128xf32>
    %138 = vector.extract_strided_slice %137 {offsets = [0, 0], sizes = [4, 32], strides = [1, 1]} : vector<4x128xf32> to vector<4x32xf32>
    %139 = arith.negf %138 : vector<4x32xf32>
    %140 = math.exp %139 : vector<4x32xf32>
    %cst_44 = arith.constant 1.000000e+00 : f32
    %141 = vector.broadcast %cst_44 : f32 to vector<4x32xf32>
    %142 = arith.addf %141, %140 : vector<4x32xf32>
    %143 = arith.divf %141, %142 : vector<4x32xf32>
    %144 = vector.extract_strided_slice %137 {offsets = [0, 32], sizes = [4, 32], strides = [1, 1]} : vector<4x128xf32> to vector<4x32xf32>
    %145 = arith.negf %144 : vector<4x32xf32>
    %146 = math.exp %145 : vector<4x32xf32>
    %cst_45 = arith.constant 1.000000e+00 : f32
    %147 = vector.broadcast %cst_45 : f32 to vector<4x32xf32>
    %148 = arith.addf %147, %146 : vector<4x32xf32>
    %149 = arith.divf %147, %148 : vector<4x32xf32>
    %150 = vector.extract_strided_slice %137 {offsets = [0, 64], sizes = [4, 32], strides = [1, 1]} : vector<4x128xf32> to vector<4x32xf32>
    %151 = math.tanh %150 : vector<4x32xf32>
    %152 = vector.extract_strided_slice %137 {offsets = [0, 96], sizes = [4, 32], strides = [1, 1]} : vector<4x128xf32> to vector<4x32xf32>
    %153 = arith.negf %152 : vector<4x32xf32>
    %154 = math.exp %153 : vector<4x32xf32>
    %cst_46 = arith.constant 1.000000e+00 : f32
    %155 = vector.broadcast %cst_46 : f32 to vector<4x32xf32>
    %156 = arith.addf %155, %154 : vector<4x32xf32>
    %157 = arith.divf %155, %156 : vector<4x32xf32>
    %158 = arith.mulf %149, %98 : vector<4x32xf32>
    %159 = arith.mulf %143, %151 : vector<4x32xf32>
    %160 = arith.addf %158, %159 : vector<4x32xf32>
    %161 = math.tanh %160 : vector<4x32xf32>
    %162 = arith.mulf %157, %161 : vector<4x32xf32>
    %cst_47 = arith.constant dense<0.000000e+00> : vector<4x128xf32>
    %163 = tpu.matmul %127, %8, %cst_47 {dimension_numbers = #tpu.dot_dimension_numbers<[1], [0], [0], [1], [0, 0, 1, 1], [], []>} : vector<4x32xf32>, vector<32x128xf32>, vector<4x128xf32> -> vector<4x128xf32>
    %164 = arith.addf %135, %163 : vector<4x128xf32>
    %165 = vector.extract_strided_slice %164 {offsets = [0, 0], sizes = [4, 32], strides = [1, 1]} : vector<4x128xf32> to vector<4x32xf32>
    %166 = arith.negf %165 : vector<4x32xf32>
    %167 = math.exp %166 : vector<4x32xf32>
    %cst_48 = arith.constant 1.000000e+00 : f32
    %168 = vector.broadcast %cst_48 : f32 to vector<4x32xf32>
    %169 = arith.addf %168, %167 : vector<4x32xf32>
    %170 = arith.divf %168, %169 : vector<4x32xf32>
    %171 = vector.extract_strided_slice %164 {offsets = [0, 32], sizes = [4, 32], strides = [1, 1]} : vector<4x128xf32> to vector<4x32xf32>
    %172 = arith.negf %171 : vector<4x32xf32>
    %173 = math.exp %172 : vector<4x32xf32>
    %cst_49 = arith.constant 1.000000e+00 : f32
    %174 = vector.broadcast %cst_49 : f32 to vector<4x32xf32>
    %175 = arith.addf %174, %173 : vector<4x32xf32>
    %176 = arith.divf %174, %175 : vector<4x32xf32>
    %177 = vector.extract_strided_slice %164 {offsets = [0, 64], sizes = [4, 32], strides = [1, 1]} : vector<4x128xf32> to vector<4x32xf32>
    %178 = math.tanh %177 : vector<4x32xf32>
    %179 = vector.extract_strided_slice %164 {offsets = [0, 96], sizes = [4, 32], strides = [1, 1]} : vector<4x128xf32> to vector<4x32xf32>
    %180 = arith.negf %179 : vector<4x32xf32>
    %181 = math.exp %180 : vector<4x32xf32>
    %cst_50 = arith.constant 1.000000e+00 : f32
    %182 = vector.broadcast %cst_50 : f32 to vector<4x32xf32>
    %183 = arith.addf %182, %181 : vector<4x32xf32>
    %184 = arith.divf %182, %183 : vector<4x32xf32>
    %185 = arith.mulf %176, %125 : vector<4x32xf32>
    %186 = arith.mulf %170, %178 : vector<4x32xf32>
    %187 = arith.addf %185, %186 : vector<4x32xf32>
    %188 = math.tanh %187 : vector<4x32xf32>
    %189 = arith.mulf %184, %188 : vector<4x32xf32>
    %c2 = arith.constant 2 : index
    %c0_51 = arith.constant 0 : index
    %c0_52 = arith.constant 0 : index
    %190 = vector.load %arg12[%c2, %c0_51, %c0_52] : memref<16x4x32xf32, #tpu.memory_space<vmem>>, vector<1x4x32xf32>
    %191 = vector.shape_cast %190 : vector<1x4x32xf32> to vector<4x32xf32>
    %192 = vector.shape_cast %162 : vector<4x32xf32> to vector<1x4x32xf32>
    tpu.vector_store %arg12[%c2, %c0_51, %c0_52], %192 {strides = array<i32>} : memref<16x4x32xf32, #tpu.memory_space<vmem>>, vector<1x4x32xf32>,
    %c13 = arith.constant 13 : index
    %c0_53 = arith.constant 0 : index
    %c0_54 = arith.constant 0 : index
    %193 = vector.load %arg13[%c13, %c0_53, %c0_54] : memref<16x4x32xf32, #tpu.memory_space<vmem>>, vector<1x4x32xf32>
    %194 = vector.shape_cast %193 : vector<1x4x32xf32> to vector<4x32xf32>
    %195 = vector.shape_cast %189 : vector<4x32xf32> to vector<1x4x32xf32>
    tpu.vector_store %arg13[%c13, %c0_53, %c0_54], %195 {strides = array<i32>} : memref<16x4x32xf32, #tpu.memory_space<vmem>>, vector<1x4x32xf32>,
    %c12 = arith.constant 12 : index
    %c0_55 = arith.constant 0 : index
    %196 = vector.load %arg11[%c12, %c0_55] : memref<64x256xf32, #tpu.memory_space<vmem>>, vector<4x128xf32>
    %c48 = arith.constant 48 : index
    %c128_56 = arith.constant 128 : index
    %197 = vector.load %arg11[%c48, %c128_56] : memref<64x256xf32, #tpu.memory_space<vmem>>, vector<4x128xf32>
    %cst_57 = arith.constant dense<0.000000e+00> : vector<4x128xf32>
    %198 = tpu.matmul %162, %7, %cst_57 {dimension_numbers = #tpu.dot_dimension_numbers<[1], [0], [0], [1], [0, 0, 1, 1], [], []>} : vector<4x32xf32>, vector<32x128xf32>, vector<4x128xf32> -> vector<4x128xf32>
    %199 = arith.addf %196, %198 : vector<4x128xf32>
    %200 = vector.extract_strided_slice %199 {offsets = [0, 0], sizes = [4, 32], strides = [1, 1]} : vector<4x128xf32> to vector<4x32xf32>
    %201 = arith.negf %200 : vector<4x32xf32>
    %202 = math.exp %201 : vector<4x32xf32>
    %cst_58 = arith.constant 1.000000e+00 : f32
    %203 = vector.broadcast %cst_58 : f32 to vector<4x32xf32>
    %204 = arith.addf %203, %202 : vector<4x32xf32>
    %205 = arith.divf %203, %204 : vector<4x32xf32>
    %206 = vector.extract_strided_slice %199 {offsets = [0, 32], sizes = [4, 32], strides = [1, 1]} : vector<4x128xf32> to vector<4x32xf32>
    %207 = arith.negf %206 : vector<4x32xf32>
    %208 = math.exp %207 : vector<4x32xf32>
    %cst_59 = arith.constant 1.000000e+00 : f32
    %209 = vector.broadcast %cst_59 : f32 to vector<4x32xf32>
    %210 = arith.addf %209, %208 : vector<4x32xf32>
    %211 = arith.divf %209, %210 : vector<4x32xf32>
    %212 = vector.extract_strided_slice %199 {offsets = [0, 64], sizes = [4, 32], strides = [1, 1]} : vector<4x128xf32> to vector<4x32xf32>
    %213 = math.tanh %212 : vector<4x32xf32>
    %214 = vector.extract_strided_slice %199 {offsets = [0, 96], sizes = [4, 32], strides = [1, 1]} : vector<4x128xf32> to vector<4x32xf32>
    %215 = arith.negf %214 : vector<4x32xf32>
    %216 = math.exp %215 : vector<4x32xf32>
    %cst_60 = arith.constant 1.000000e+00 : f32
    %217 = vector.broadcast %cst_60 : f32 to vector<4x32xf32>
    %218 = arith.addf %217, %216 : vector<4x32xf32>
    %219 = arith.divf %217, %218 : vector<4x32xf32>
    %220 = arith.mulf %211, %160 : vector<4x32xf32>
    %221 = arith.mulf %205, %213 : vector<4x32xf32>
    %222 = arith.addf %220, %221 : vector<4x32xf32>
    %223 = math.tanh %222 : vector<4x32xf32>
    %224 = arith.mulf %219, %223 : vector<4x32xf32>
    %cst_61 = arith.constant dense<0.000000e+00> : vector<4x128xf32>
    %225 = tpu.matmul %189, %8, %cst_61 {dimension_numbers = #tpu.dot_dimension_numbers<[1], [0], [0], [1], [0, 0, 1, 1], [], []>} : vector<4x32xf32>, vector<32x128xf32>, vector<4x128xf32> -> vector<4x128xf32>
    %226 = arith.addf %197, %225 : vector<4x128xf32>
    %227 = vector.extract_strided_slice %226 {offsets = [0, 0], sizes = [4, 32], strides = [1, 1]} : vector<4x128xf32> to vector<4x32xf32>
    %228 = arith.negf %227 : vector<4x32xf32>
    %229 = math.exp %228 : vector<4x32xf32>
    %cst_62 = arith.constant 1.000000e+00 : f32
    %230 = vector.broadcast %cst_62 : f32 to vector<4x32xf32>
    %231 = arith.addf %230, %229 : vector<4x32xf32>
    %232 = arith.divf %230, %231 : vector<4x32xf32>
    %233 = vector.extract_strided_slice %226 {offsets = [0, 32], sizes = [4, 32], strides = [1, 1]} : vector<4x128xf32> to vector<4x32xf32>
    %234 = arith.negf %233 : vector<4x32xf32>
    %235 = math.exp %234 : vector<4x32xf32>
    %cst_63 = arith.constant 1.000000e+00 : f32
    %236 = vector.broadcast %cst_63 : f32 to vector<4x32xf32>
    %237 = arith.addf %236, %235 : vector<4x32xf32>
    %238 = arith.divf %236, %237 : vector<4x32xf32>
    %239 = vector.extract_strided_slice %226 {offsets = [0, 64], sizes = [4, 32], strides = [1, 1]} : vector<4x128xf32> to vector<4x32xf32>
    %240 = math.tanh %239 : vector<4x32xf32>
    %241 = vector.extract_strided_slice %226 {offsets = [0, 96], sizes = [4, 32], strides = [1, 1]} : vector<4x128xf32> to vector<4x32xf32>
    %242 = arith.negf %241 : vector<4x32xf32>
    %243 = math.exp %242 : vector<4x32xf32>
    %cst_64 = arith.constant 1.000000e+00 : f32
    %244 = vector.broadcast %cst_64 : f32 to vector<4x32xf32>
    %245 = arith.addf %244, %243 : vector<4x32xf32>
    %246 = arith.divf %244, %245 : vector<4x32xf32>
    %247 = arith.mulf %238, %187 : vector<4x32xf32>
    %248 = arith.mulf %232, %240 : vector<4x32xf32>
    %249 = arith.addf %247, %248 : vector<4x32xf32>
    %250 = math.tanh %249 : vector<4x32xf32>
    %251 = arith.mulf %246, %250 : vector<4x32xf32>
    %c3 = arith.constant 3 : index
    %c0_65 = arith.constant 0 : index
    %c0_66 = arith.constant 0 : index
    %252 = vector.load %arg12[%c3, %c0_65, %c0_66] : memref<16x4x32xf32, #tpu.memory_space<vmem>>, vector<1x4x32xf32>
    %253 = vector.shape_cast %252 : vector<1x4x32xf32> to vector<4x32xf32>
    %254 = vector.shape_cast %224 : vector<4x32xf32> to vector<1x4x32xf32>
    tpu.vector_store %arg12[%c3, %c0_65, %c0_66], %254 {strides = array<i32>} : memref<16x4x32xf32, #tpu.memory_space<vmem>>, vector<1x4x32xf32>,
    %c12_67 = arith.constant 12 : index
    %c0_68 = arith.constant 0 : index
    %c0_69 = arith.constant 0 : index
    %255 = vector.load %arg13[%c12_67, %c0_68, %c0_69] : memref<16x4x32xf32, #tpu.memory_space<vmem>>, vector<1x4x32xf32>
    %256 = vector.shape_cast %255 : vector<1x4x32xf32> to vector<4x32xf32>
    %257 = vector.shape_cast %251 : vector<4x32xf32> to vector<1x4x32xf32>
    tpu.vector_store %arg13[%c12_67, %c0_68, %c0_69], %257 {strides = array<i32>} : memref<16x4x32xf32, #tpu.memory_space<vmem>>, vector<1x4x32xf32>,
    %c16 = arith.constant 16 : index
    %c0_70 = arith.constant 0 : index
    %258 = vector.load %arg11[%c16, %c0_70] : memref<64x256xf32, #tpu.memory_space<vmem>>, vector<4x128xf32>
    %c44 = arith.constant 44 : index
    %c128_71 = arith.constant 128 : index
    %259 = vector.load %arg11[%c44, %c128_71] : memref<64x256xf32, #tpu.memory_space<vmem>>, vector<4x128xf32>
    %cst_72 = arith.constant dense<0.000000e+00> : vector<4x128xf32>
    %260 = tpu.matmul %224, %7, %cst_72 {dimension_numbers = #tpu.dot_dimension_numbers<[1], [0], [0], [1], [0, 0, 1, 1], [], []>} : vector<4x32xf32>, vector<32x128xf32>, vector<4x128xf32> -> vector<4x128xf32>
    %261 = arith.addf %258, %260 : vector<4x128xf32>
    %262 = vector.extract_strided_slice %261 {offsets = [0, 0], sizes = [4, 32], strides = [1, 1]} : vector<4x128xf32> to vector<4x32xf32>
    %263 = arith.negf %262 : vector<4x32xf32>
    %264 = math.exp %263 : vector<4x32xf32>
    %cst_73 = arith.constant 1.000000e+00 : f32
    %265 = vector.broadcast %cst_73 : f32 to vector<4x32xf32>
    %266 = arith.addf %265, %264 : vector<4x32xf32>
    %267 = arith.divf %265, %266 : vector<4x32xf32>
    %268 = vector.extract_strided_slice %261 {offsets = [0, 32], sizes = [4, 32], strides = [1, 1]} : vector<4x128xf32> to vector<4x32xf32>
    %269 = arith.negf %268 : vector<4x32xf32>
    %270 = math.exp %269 : vector<4x32xf32>
    %cst_74 = arith.constant 1.000000e+00 : f32
    %271 = vector.broadcast %cst_74 : f32 to vector<4x32xf32>
    %272 = arith.addf %271, %270 : vector<4x32xf32>
    %273 = arith.divf %271, %272 : vector<4x32xf32>
    %274 = vector.extract_strided_slice %261 {offsets = [0, 64], sizes = [4, 32], strides = [1, 1]} : vector<4x128xf32> to vector<4x32xf32>
    %275 = math.tanh %274 : vector<4x32xf32>
    %276 = vector.extract_strided_slice %261 {offsets = [0, 96], sizes = [4, 32], strides = [1, 1]} : vector<4x128xf32> to vector<4x32xf32>
    %277 = arith.negf %276 : vector<4x32xf32>
    %278 = math.exp %277 : vector<4x32xf32>
    %cst_75 = arith.constant 1.000000e+00 : f32
    %279 = vector.broadcast %cst_75 : f32 to vector<4x32xf32>
    %280 = arith.addf %279, %278 : vector<4x32xf32>
    %281 = arith.divf %279, %280 : vector<4x32xf32>
    %282 = arith.mulf %273, %222 : vector<4x32xf32>
    %283 = arith.mulf %267, %275 : vector<4x32xf32>
    %284 = arith.addf %282, %283 : vector<4x32xf32>
    %285 = math.tanh %284 : vector<4x32xf32>
    %286 = arith.mulf %281, %285 : vector<4x32xf32>
    %cst_76 = arith.constant dense<0.000000e+00> : vector<4x128xf32>
    %287 = tpu.matmul %251, %8, %cst_76 {dimension_numbers = #tpu.dot_dimension_numbers<[1], [0], [0], [1], [0, 0, 1, 1], [], []>} : vector<4x32xf32>, vector<32x128xf32>, vector<4x128xf32> -> vector<4x128xf32>
    %288 = arith.addf %259, %287 : vector<4x128xf32>
    %289 = vector.extract_strided_slice %288 {offsets = [0, 0], sizes = [4, 32], strides = [1, 1]} : vector<4x128xf32> to vector<4x32xf32>
    %290 = arith.negf %289 : vector<4x32xf32>
    %291 = math.exp %290 : vector<4x32xf32>
    %cst_77 = arith.constant 1.000000e+00 : f32
    %292 = vector.broadcast %cst_77 : f32 to vector<4x32xf32>
    %293 = arith.addf %292, %291 : vector<4x32xf32>
    %294 = arith.divf %292, %293 : vector<4x32xf32>
    %295 = vector.extract_strided_slice %288 {offsets = [0, 32], sizes = [4, 32], strides = [1, 1]} : vector<4x128xf32> to vector<4x32xf32>
    %296 = arith.negf %295 : vector<4x32xf32>
    %297 = math.exp %296 : vector<4x32xf32>
    %cst_78 = arith.constant 1.000000e+00 : f32
    %298 = vector.broadcast %cst_78 : f32 to vector<4x32xf32>
    %299 = arith.addf %298, %297 : vector<4x32xf32>
    %300 = arith.divf %298, %299 : vector<4x32xf32>
    %301 = vector.extract_strided_slice %288 {offsets = [0, 64], sizes = [4, 32], strides = [1, 1]} : vector<4x128xf32> to vector<4x32xf32>
    %302 = math.tanh %301 : vector<4x32xf32>
    %303 = vector.extract_strided_slice %288 {offsets = [0, 96], sizes = [4, 32], strides = [1, 1]} : vector<4x128xf32> to vector<4x32xf32>
    %304 = arith.negf %303 : vector<4x32xf32>
    %305 = math.exp %304 : vector<4x32xf32>
    %cst_79 = arith.constant 1.000000e+00 : f32
    %306 = vector.broadcast %cst_79 : f32 to vector<4x32xf32>
    %307 = arith.addf %306, %305 : vector<4x32xf32>
    %308 = arith.divf %306, %307 : vector<4x32xf32>
    %309 = arith.mulf %300, %249 : vector<4x32xf32>
    %310 = arith.mulf %294, %302 : vector<4x32xf32>
    %311 = arith.addf %309, %310 : vector<4x32xf32>
    %312 = math.tanh %311 : vector<4x32xf32>
    %313 = arith.mulf %308, %312 : vector<4x32xf32>
    %c4_80 = arith.constant 4 : index
    %c0_81 = arith.constant 0 : index
    %c0_82 = arith.constant 0 : index
    %314 = vector.load %arg12[%c4_80, %c0_81, %c0_82] : memref<16x4x32xf32, #tpu.memory_space<vmem>>, vector<1x4x32xf32>
    %315 = vector.shape_cast %314 : vector<1x4x32xf32> to vector<4x32xf32>
    %316 = vector.shape_cast %286 : vector<4x32xf32> to vector<1x4x32xf32>
    tpu.vector_store %arg12[%c4_80, %c0_81, %c0_82], %316 {strides = array<i32>} : memref<16x4x32xf32, #tpu.memory_space<vmem>>, vector<1x4x32xf32>,
    %c11 = arith.constant 11 : index
    %c0_83 = arith.constant 0 : index
    %c0_84 = arith.constant 0 : index
    %317 = vector.load %arg13[%c11, %c0_83, %c0_84] : memref<16x4x32xf32, #tpu.memory_space<vmem>>, vector<1x4x32xf32>
    %318 = vector.shape_cast %317 : vector<1x4x32xf32> to vector<4x32xf32>
    %319 = vector.shape_cast %313 : vector<4x32xf32> to vector<1x4x32xf32>
    tpu.vector_store %arg13[%c11, %c0_83, %c0_84], %319 {strides = array<i32>} : memref<16x4x32xf32, #tpu.memory_space<vmem>>, vector<1x4x32xf32>,
    %c20 = arith.constant 20 : index
    %c0_85 = arith.constant 0 : index
    %320 = vector.load %arg11[%c20, %c0_85] : memref<64x256xf32, #tpu.memory_space<vmem>>, vector<4x128xf32>
    %c40 = arith.constant 40 : index
    %c128_86 = arith.constant 128 : index
    %321 = vector.load %arg11[%c40, %c128_86] : memref<64x256xf32, #tpu.memory_space<vmem>>, vector<4x128xf32>
    %cst_87 = arith.constant dense<0.000000e+00> : vector<4x128xf32>
    %322 = tpu.matmul %286, %7, %cst_87 {dimension_numbers = #tpu.dot_dimension_numbers<[1], [0], [0], [1], [0, 0, 1, 1], [], []>} : vector<4x32xf32>, vector<32x128xf32>, vector<4x128xf32> -> vector<4x128xf32>
    %323 = arith.addf %320, %322 : vector<4x128xf32>
    %324 = vector.extract_strided_slice %323 {offsets = [0, 0], sizes = [4, 32], strides = [1, 1]} : vector<4x128xf32> to vector<4x32xf32>
    %325 = arith.negf %324 : vector<4x32xf32>
    %326 = math.exp %325 : vector<4x32xf32>
    %cst_88 = arith.constant 1.000000e+00 : f32
    %327 = vector.broadcast %cst_88 : f32 to vector<4x32xf32>
    %328 = arith.addf %327, %326 : vector<4x32xf32>
    %329 = arith.divf %327, %328 : vector<4x32xf32>
    %330 = vector.extract_strided_slice %323 {offsets = [0, 32], sizes = [4, 32], strides = [1, 1]} : vector<4x128xf32> to vector<4x32xf32>
    %331 = arith.negf %330 : vector<4x32xf32>
    %332 = math.exp %331 : vector<4x32xf32>
    %cst_89 = arith.constant 1.000000e+00 : f32
    %333 = vector.broadcast %cst_89 : f32 to vector<4x32xf32>
    %334 = arith.addf %333, %332 : vector<4x32xf32>
    %335 = arith.divf %333, %334 : vector<4x32xf32>
    %336 = vector.extract_strided_slice %323 {offsets = [0, 64], sizes = [4, 32], strides = [1, 1]} : vector<4x128xf32> to vector<4x32xf32>
    %337 = math.tanh %336 : vector<4x32xf32>
    %338 = vector.extract_strided_slice %323 {offsets = [0, 96], sizes = [4, 32], strides = [1, 1]} : vector<4x128xf32> to vector<4x32xf32>
    %339 = arith.negf %338 : vector<4x32xf32>
    %340 = math.exp %339 : vector<4x32xf32>
    %cst_90 = arith.constant 1.000000e+00 : f32
    %341 = vector.broadcast %cst_90 : f32 to vector<4x32xf32>
    %342 = arith.addf %341, %340 : vector<4x32xf32>
    %343 = arith.divf %341, %342 : vector<4x32xf32>
    %344 = arith.mulf %335, %284 : vector<4x32xf32>
    %345 = arith.mulf %329, %337 : vector<4x32xf32>
    %346 = arith.addf %344, %345 : vector<4x32xf32>
    %347 = math.tanh %346 : vector<4x32xf32>
    %348 = arith.mulf %343, %347 : vector<4x32xf32>
    %cst_91 = arith.constant dense<0.000000e+00> : vector<4x128xf32>
    %349 = tpu.matmul %313, %8, %cst_91 {dimension_numbers = #tpu.dot_dimension_numbers<[1], [0], [0], [1], [0, 0, 1, 1], [], []>} : vector<4x32xf32>, vector<32x128xf32>, vector<4x128xf32> -> vector<4x128xf32>
    %350 = arith.addf %321, %349 : vector<4x128xf32>
    %351 = vector.extract_strided_slice %350 {offsets = [0, 0], sizes = [4, 32], strides = [1, 1]} : vector<4x128xf32> to vector<4x32xf32>
    %352 = arith.negf %351 : vector<4x32xf32>
    %353 = math.exp %352 : vector<4x32xf32>
    %cst_92 = arith.constant 1.000000e+00 : f32
    %354 = vector.broadcast %cst_92 : f32 to vector<4x32xf32>
    %355 = arith.addf %354, %353 : vector<4x32xf32>
    %356 = arith.divf %354, %355 : vector<4x32xf32>
    %357 = vector.extract_strided_slice %350 {offsets = [0, 32], sizes = [4, 32], strides = [1, 1]} : vector<4x128xf32> to vector<4x32xf32>
    %358 = arith.negf %357 : vector<4x32xf32>
    %359 = math.exp %358 : vector<4x32xf32>
    %cst_93 = arith.constant 1.000000e+00 : f32
    %360 = vector.broadcast %cst_93 : f32 to vector<4x32xf32>
    %361 = arith.addf %360, %359 : vector<4x32xf32>
    %362 = arith.divf %360, %361 : vector<4x32xf32>
    %363 = vector.extract_strided_slice %350 {offsets = [0, 64], sizes = [4, 32], strides = [1, 1]} : vector<4x128xf32> to vector<4x32xf32>
    %364 = math.tanh %363 : vector<4x32xf32>
    %365 = vector.extract_strided_slice %350 {offsets = [0, 96], sizes = [4, 32], strides = [1, 1]} : vector<4x128xf32> to vector<4x32xf32>
    %366 = arith.negf %365 : vector<4x32xf32>
    %367 = math.exp %366 : vector<4x32xf32>
    %cst_94 = arith.constant 1.000000e+00 : f32
    %368 = vector.broadcast %cst_94 : f32 to vector<4x32xf32>
    %369 = arith.addf %368, %367 : vector<4x32xf32>
    %370 = arith.divf %368, %369 : vector<4x32xf32>
    %371 = arith.mulf %362, %311 : vector<4x32xf32>
    %372 = arith.mulf %356, %364 : vector<4x32xf32>
    %373 = arith.addf %371, %372 : vector<4x32xf32>
    %374 = math.tanh %373 : vector<4x32xf32>
    %375 = arith.mulf %370, %374 : vector<4x32xf32>
    %c5 = arith.constant 5 : index
    %c0_95 = arith.constant 0 : index
    %c0_96 = arith.constant 0 : index
    %376 = vector.load %arg12[%c5, %c0_95, %c0_96] : memref<16x4x32xf32, #tpu.memory_space<vmem>>, vector<1x4x32xf32>
    %377 = vector.shape_cast %376 : vector<1x4x32xf32> to vector<4x32xf32>
    %378 = vector.shape_cast %348 : vector<4x32xf32> to vector<1x4x32xf32>
    tpu.vector_store %arg12[%c5, %c0_95, %c0_96], %378 {strides = array<i32>} : memref<16x4x32xf32, #tpu.memory_space<vmem>>, vector<1x4x32xf32>,
    %c10 = arith.constant 10 : index
    %c0_97 = arith.constant 0 : index
    %c0_98 = arith.constant 0 : index
    %379 = vector.load %arg13[%c10, %c0_97, %c0_98] : memref<16x4x32xf32, #tpu.memory_space<vmem>>, vector<1x4x32xf32>
    %380 = vector.shape_cast %379 : vector<1x4x32xf32> to vector<4x32xf32>
    %381 = vector.shape_cast %375 : vector<4x32xf32> to vector<1x4x32xf32>
    tpu.vector_store %arg13[%c10, %c0_97, %c0_98], %381 {strides = array<i32>} : memref<16x4x32xf32, #tpu.memory_space<vmem>>, vector<1x4x32xf32>,
    %c24 = arith.constant 24 : index
    %c0_99 = arith.constant 0 : index
    %382 = vector.load %arg11[%c24, %c0_99] : memref<64x256xf32, #tpu.memory_space<vmem>>, vector<4x128xf32>
    %c36 = arith.constant 36 : index
    %c128_100 = arith.constant 128 : index
    %383 = vector.load %arg11[%c36, %c128_100] : memref<64x256xf32, #tpu.memory_space<vmem>>, vector<4x128xf32>
    %cst_101 = arith.constant dense<0.000000e+00> : vector<4x128xf32>
    %384 = tpu.matmul %348, %7, %cst_101 {dimension_numbers = #tpu.dot_dimension_numbers<[1], [0], [0], [1], [0, 0, 1, 1], [], []>} : vector<4x32xf32>, vector<32x128xf32>, vector<4x128xf32> -> vector<4x128xf32>
    %385 = arith.addf %382, %384 : vector<4x128xf32>
    %386 = vector.extract_strided_slice %385 {offsets = [0, 0], sizes = [4, 32], strides = [1, 1]} : vector<4x128xf32> to vector<4x32xf32>
    %387 = arith.negf %386 : vector<4x32xf32>
    %388 = math.exp %387 : vector<4x32xf32>
    %cst_102 = arith.constant 1.000000e+00 : f32
    %389 = vector.broadcast %cst_102 : f32 to vector<4x32xf32>
    %390 = arith.addf %389, %388 : vector<4x32xf32>
    %391 = arith.divf %389, %390 : vector<4x32xf32>
    %392 = vector.extract_strided_slice %385 {offsets = [0, 32], sizes = [4, 32], strides = [1, 1]} : vector<4x128xf32> to vector<4x32xf32>
    %393 = arith.negf %392 : vector<4x32xf32>
    %394 = math.exp %393 : vector<4x32xf32>
    %cst_103 = arith.constant 1.000000e+00 : f32
    %395 = vector.broadcast %cst_103 : f32 to vector<4x32xf32>
    %396 = arith.addf %395, %394 : vector<4x32xf32>
    %397 = arith.divf %395, %396 : vector<4x32xf32>
    %398 = vector.extract_strided_slice %385 {offsets = [0, 64], sizes = [4, 32], strides = [1, 1]} : vector<4x128xf32> to vector<4x32xf32>
    %399 = math.tanh %398 : vector<4x32xf32>
    %400 = vector.extract_strided_slice %385 {offsets = [0, 96], sizes = [4, 32], strides = [1, 1]} : vector<4x128xf32> to vector<4x32xf32>
    %401 = arith.negf %400 : vector<4x32xf32>
    %402 = math.exp %401 : vector<4x32xf32>
    %cst_104 = arith.constant 1.000000e+00 : f32
    %403 = vector.broadcast %cst_104 : f32 to vector<4x32xf32>
    %404 = arith.addf %403, %402 : vector<4x32xf32>
    %405 = arith.divf %403, %404 : vector<4x32xf32>
    %406 = arith.mulf %397, %346 : vector<4x32xf32>
    %407 = arith.mulf %391, %399 : vector<4x32xf32>
    %408 = arith.addf %406, %407 : vector<4x32xf32>
    %409 = math.tanh %408 : vector<4x32xf32>
    %410 = arith.mulf %405, %409 : vector<4x32xf32>
    %cst_105 = arith.constant dense<0.000000e+00> : vector<4x128xf32>
    %411 = tpu.matmul %375, %8, %cst_105 {dimension_numbers = #tpu.dot_dimension_numbers<[1], [0], [0], [1], [0, 0, 1, 1], [], []>} : vector<4x32xf32>, vector<32x128xf32>, vector<4x128xf32> -> vector<4x128xf32>
    %412 = arith.addf %383, %411 : vector<4x128xf32>
    %413 = vector.extract_strided_slice %412 {offsets = [0, 0], sizes = [4, 32], strides = [1, 1]} : vector<4x128xf32> to vector<4x32xf32>
    %414 = arith.negf %413 : vector<4x32xf32>
    %415 = math.exp %414 : vector<4x32xf32>
    %cst_106 = arith.constant 1.000000e+00 : f32
    %416 = vector.broadcast %cst_106 : f32 to vector<4x32xf32>
    %417 = arith.addf %416, %415 : vector<4x32xf32>
    %418 = arith.divf %416, %417 : vector<4x32xf32>
    %419 = vector.extract_strided_slice %412 {offsets = [0, 32], sizes = [4, 32], strides = [1, 1]} : vector<4x128xf32> to vector<4x32xf32>
    %420 = arith.negf %419 : vector<4x32xf32>
    %421 = math.exp %420 : vector<4x32xf32>
    %cst_107 = arith.constant 1.000000e+00 : f32
    %422 = vector.broadcast %cst_107 : f32 to vector<4x32xf32>
    %423 = arith.addf %422, %421 : vector<4x32xf32>
    %424 = arith.divf %422, %423 : vector<4x32xf32>
    %425 = vector.extract_strided_slice %412 {offsets = [0, 64], sizes = [4, 32], strides = [1, 1]} : vector<4x128xf32> to vector<4x32xf32>
    %426 = math.tanh %425 : vector<4x32xf32>
    %427 = vector.extract_strided_slice %412 {offsets = [0, 96], sizes = [4, 32], strides = [1, 1]} : vector<4x128xf32> to vector<4x32xf32>
    %428 = arith.negf %427 : vector<4x32xf32>
    %429 = math.exp %428 : vector<4x32xf32>
    %cst_108 = arith.constant 1.000000e+00 : f32
    %430 = vector.broadcast %cst_108 : f32 to vector<4x32xf32>
    %431 = arith.addf %430, %429 : vector<4x32xf32>
    %432 = arith.divf %430, %431 : vector<4x32xf32>
    %433 = arith.mulf %424, %373 : vector<4x32xf32>
    %434 = arith.mulf %418, %426 : vector<4x32xf32>
    %435 = arith.addf %433, %434 : vector<4x32xf32>
    %436 = math.tanh %435 : vector<4x32xf32>
    %437 = arith.mulf %432, %436 : vector<4x32xf32>
    %c6 = arith.constant 6 : index
    %c0_109 = arith.constant 0 : index
    %c0_110 = arith.constant 0 : index
    %438 = vector.load %arg12[%c6, %c0_109, %c0_110] : memref<16x4x32xf32, #tpu.memory_space<vmem>>, vector<1x4x32xf32>
    %439 = vector.shape_cast %438 : vector<1x4x32xf32> to vector<4x32xf32>
    %440 = vector.shape_cast %410 : vector<4x32xf32> to vector<1x4x32xf32>
    tpu.vector_store %arg12[%c6, %c0_109, %c0_110], %440 {strides = array<i32>} : memref<16x4x32xf32, #tpu.memory_space<vmem>>, vector<1x4x32xf32>,
    %c9 = arith.constant 9 : index
    %c0_111 = arith.constant 0 : index
    %c0_112 = arith.constant 0 : index
    %441 = vector.load %arg13[%c9, %c0_111, %c0_112] : memref<16x4x32xf32, #tpu.memory_space<vmem>>, vector<1x4x32xf32>
    %442 = vector.shape_cast %441 : vector<1x4x32xf32> to vector<4x32xf32>
    %443 = vector.shape_cast %437 : vector<4x32xf32> to vector<1x4x32xf32>
    tpu.vector_store %arg13[%c9, %c0_111, %c0_112], %443 {strides = array<i32>} : memref<16x4x32xf32, #tpu.memory_space<vmem>>, vector<1x4x32xf32>,
    %c28 = arith.constant 28 : index
    %c0_113 = arith.constant 0 : index
    %444 = vector.load %arg11[%c28, %c0_113] : memref<64x256xf32, #tpu.memory_space<vmem>>, vector<4x128xf32>
    %c32 = arith.constant 32 : index
    %c128_114 = arith.constant 128 : index
    %445 = vector.load %arg11[%c32, %c128_114] : memref<64x256xf32, #tpu.memory_space<vmem>>, vector<4x128xf32>
    %cst_115 = arith.constant dense<0.000000e+00> : vector<4x128xf32>
    %446 = tpu.matmul %410, %7, %cst_115 {dimension_numbers = #tpu.dot_dimension_numbers<[1], [0], [0], [1], [0, 0, 1, 1], [], []>} : vector<4x32xf32>, vector<32x128xf32>, vector<4x128xf32> -> vector<4x128xf32>
    %447 = arith.addf %444, %446 : vector<4x128xf32>
    %448 = vector.extract_strided_slice %447 {offsets = [0, 0], sizes = [4, 32], strides = [1, 1]} : vector<4x128xf32> to vector<4x32xf32>
    %449 = arith.negf %448 : vector<4x32xf32>
    %450 = math.exp %449 : vector<4x32xf32>
    %cst_116 = arith.constant 1.000000e+00 : f32
    %451 = vector.broadcast %cst_116 : f32 to vector<4x32xf32>
    %452 = arith.addf %451, %450 : vector<4x32xf32>
    %453 = arith.divf %451, %452 : vector<4x32xf32>
    %454 = vector.extract_strided_slice %447 {offsets = [0, 32], sizes = [4, 32], strides = [1, 1]} : vector<4x128xf32> to vector<4x32xf32>
    %455 = arith.negf %454 : vector<4x32xf32>
    %456 = math.exp %455 : vector<4x32xf32>
    %cst_117 = arith.constant 1.000000e+00 : f32
    %457 = vector.broadcast %cst_117 : f32 to vector<4x32xf32>
    %458 = arith.addf %457, %456 : vector<4x32xf32>
    %459 = arith.divf %457, %458 : vector<4x32xf32>
    %460 = vector.extract_strided_slice %447 {offsets = [0, 64], sizes = [4, 32], strides = [1, 1]} : vector<4x128xf32> to vector<4x32xf32>
    %461 = math.tanh %460 : vector<4x32xf32>
    %462 = vector.extract_strided_slice %447 {offsets = [0, 96], sizes = [4, 32], strides = [1, 1]} : vector<4x128xf32> to vector<4x32xf32>
    %463 = arith.negf %462 : vector<4x32xf32>
    %464 = math.exp %463 : vector<4x32xf32>
    %cst_118 = arith.constant 1.000000e+00 : f32
    %465 = vector.broadcast %cst_118 : f32 to vector<4x32xf32>
    %466 = arith.addf %465, %464 : vector<4x32xf32>
    %467 = arith.divf %465, %466 : vector<4x32xf32>
    %468 = arith.mulf %459, %408 : vector<4x32xf32>
    %469 = arith.mulf %453, %461 : vector<4x32xf32>
    %470 = arith.addf %468, %469 : vector<4x32xf32>
    %471 = math.tanh %470 : vector<4x32xf32>
    %472 = arith.mulf %467, %471 : vector<4x32xf32>
    %cst_119 = arith.constant dense<0.000000e+00> : vector<4x128xf32>
    %473 = tpu.matmul %437, %8, %cst_119 {dimension_numbers = #tpu.dot_dimension_numbers<[1], [0], [0], [1], [0, 0, 1, 1], [], []>} : vector<4x32xf32>, vector<32x128xf32>, vector<4x128xf32> -> vector<4x128xf32>
    %474 = arith.addf %445, %473 : vector<4x128xf32>
    %475 = vector.extract_strided_slice %474 {offsets = [0, 0], sizes = [4, 32], strides = [1, 1]} : vector<4x128xf32> to vector<4x32xf32>
    %476 = arith.negf %475 : vector<4x32xf32>
    %477 = math.exp %476 : vector<4x32xf32>
    %cst_120 = arith.constant 1.000000e+00 : f32
    %478 = vector.broadcast %cst_120 : f32 to vector<4x32xf32>
    %479 = arith.addf %478, %477 : vector<4x32xf32>
    %480 = arith.divf %478, %479 : vector<4x32xf32>
    %481 = vector.extract_strided_slice %474 {offsets = [0, 32], sizes = [4, 32], strides = [1, 1]} : vector<4x128xf32> to vector<4x32xf32>
    %482 = arith.negf %481 : vector<4x32xf32>
    %483 = math.exp %482 : vector<4x32xf32>
    %cst_121 = arith.constant 1.000000e+00 : f32
    %484 = vector.broadcast %cst_121 : f32 to vector<4x32xf32>
    %485 = arith.addf %484, %483 : vector<4x32xf32>
    %486 = arith.divf %484, %485 : vector<4x32xf32>
    %487 = vector.extract_strided_slice %474 {offsets = [0, 64], sizes = [4, 32], strides = [1, 1]} : vector<4x128xf32> to vector<4x32xf32>
    %488 = math.tanh %487 : vector<4x32xf32>
    %489 = vector.extract_strided_slice %474 {offsets = [0, 96], sizes = [4, 32], strides = [1, 1]} : vector<4x128xf32> to vector<4x32xf32>
    %490 = arith.negf %489 : vector<4x32xf32>
    %491 = math.exp %490 : vector<4x32xf32>
    %cst_122 = arith.constant 1.000000e+00 : f32
    %492 = vector.broadcast %cst_122 : f32 to vector<4x32xf32>
    %493 = arith.addf %492, %491 : vector<4x32xf32>
    %494 = arith.divf %492, %493 : vector<4x32xf32>
    %495 = arith.mulf %486, %435 : vector<4x32xf32>
    %496 = arith.mulf %480, %488 : vector<4x32xf32>
    %497 = arith.addf %495, %496 : vector<4x32xf32>
    %498 = math.tanh %497 : vector<4x32xf32>
    %499 = arith.mulf %494, %498 : vector<4x32xf32>
    %c7 = arith.constant 7 : index
    %c0_123 = arith.constant 0 : index
    %c0_124 = arith.constant 0 : index
    %500 = vector.load %arg12[%c7, %c0_123, %c0_124] : memref<16x4x32xf32, #tpu.memory_space<vmem>>, vector<1x4x32xf32>
    %501 = vector.shape_cast %500 : vector<1x4x32xf32> to vector<4x32xf32>
    %502 = vector.shape_cast %472 : vector<4x32xf32> to vector<1x4x32xf32>
    tpu.vector_store %arg12[%c7, %c0_123, %c0_124], %502 {strides = array<i32>} : memref<16x4x32xf32, #tpu.memory_space<vmem>>, vector<1x4x32xf32>,
    %c8_125 = arith.constant 8 : index
    %c0_126 = arith.constant 0 : index
    %c0_127 = arith.constant 0 : index
    %503 = vector.load %arg13[%c8_125, %c0_126, %c0_127] : memref<16x4x32xf32, #tpu.memory_space<vmem>>, vector<1x4x32xf32>
    %504 = vector.shape_cast %503 : vector<1x4x32xf32> to vector<4x32xf32>
    %505 = vector.shape_cast %499 : vector<4x32xf32> to vector<1x4x32xf32>
    tpu.vector_store %arg13[%c8_125, %c0_126, %c0_127], %505 {strides = array<i32>} : memref<16x4x32xf32, #tpu.memory_space<vmem>>, vector<1x4x32xf32>,
    %c32_128 = arith.constant 32 : index
    %c0_129 = arith.constant 0 : index
    %506 = vector.load %arg11[%c32_128, %c0_129] : memref<64x256xf32, #tpu.memory_space<vmem>>, vector<4x128xf32>
    %c28_130 = arith.constant 28 : index
    %c128_131 = arith.constant 128 : index
    %507 = vector.load %arg11[%c28_130, %c128_131] : memref<64x256xf32, #tpu.memory_space<vmem>>, vector<4x128xf32>
    %cst_132 = arith.constant dense<0.000000e+00> : vector<4x128xf32>
    %508 = tpu.matmul %472, %7, %cst_132 {dimension_numbers = #tpu.dot_dimension_numbers<[1], [0], [0], [1], [0, 0, 1, 1], [], []>} : vector<4x32xf32>, vector<32x128xf32>, vector<4x128xf32> -> vector<4x128xf32>
    %509 = arith.addf %506, %508 : vector<4x128xf32>
    %510 = vector.extract_strided_slice %509 {offsets = [0, 0], sizes = [4, 32], strides = [1, 1]} : vector<4x128xf32> to vector<4x32xf32>
    %511 = arith.negf %510 : vector<4x32xf32>
    %512 = math.exp %511 : vector<4x32xf32>
    %cst_133 = arith.constant 1.000000e+00 : f32
    %513 = vector.broadcast %cst_133 : f32 to vector<4x32xf32>
    %514 = arith.addf %513, %512 : vector<4x32xf32>
    %515 = arith.divf %513, %514 : vector<4x32xf32>
    %516 = vector.extract_strided_slice %509 {offsets = [0, 32], sizes = [4, 32], strides = [1, 1]} : vector<4x128xf32> to vector<4x32xf32>
    %517 = arith.negf %516 : vector<4x32xf32>
    %518 = math.exp %517 : vector<4x32xf32>
    %cst_134 = arith.constant 1.000000e+00 : f32
    %519 = vector.broadcast %cst_134 : f32 to vector<4x32xf32>
    %520 = arith.addf %519, %518 : vector<4x32xf32>
    %521 = arith.divf %519, %520 : vector<4x32xf32>
    %522 = vector.extract_strided_slice %509 {offsets = [0, 64], sizes = [4, 32], strides = [1, 1]} : vector<4x128xf32> to vector<4x32xf32>
    %523 = math.tanh %522 : vector<4x32xf32>
    %524 = vector.extract_strided_slice %509 {offsets = [0, 96], sizes = [4, 32], strides = [1, 1]} : vector<4x128xf32> to vector<4x32xf32>
    %525 = arith.negf %524 : vector<4x32xf32>
    %526 = math.exp %525 : vector<4x32xf32>
    %cst_135 = arith.constant 1.000000e+00 : f32
    %527 = vector.broadcast %cst_135 : f32 to vector<4x32xf32>
    %528 = arith.addf %527, %526 : vector<4x32xf32>
    %529 = arith.divf %527, %528 : vector<4x32xf32>
    %530 = arith.mulf %521, %470 : vector<4x32xf32>
    %531 = arith.mulf %515, %523 : vector<4x32xf32>
    %532 = arith.addf %530, %531 : vector<4x32xf32>
    %533 = math.tanh %532 : vector<4x32xf32>
    %534 = arith.mulf %529, %533 : vector<4x32xf32>
    %cst_136 = arith.constant dense<0.000000e+00> : vector<4x128xf32>
    %535 = tpu.matmul %499, %8, %cst_136 {dimension_numbers = #tpu.dot_dimension_numbers<[1], [0], [0], [1], [0, 0, 1, 1], [], []>} : vector<4x32xf32>, vector<32x128xf32>, vector<4x128xf32> -> vector<4x128xf32>
    %536 = arith.addf %507, %535 : vector<4x128xf32>
    %537 = vector.extract_strided_slice %536 {offsets = [0, 0], sizes = [4, 32], strides = [1, 1]} : vector<4x128xf32> to vector<4x32xf32>
    %538 = arith.negf %537 : vector<4x32xf32>
    %539 = math.exp %538 : vector<4x32xf32>
    %cst_137 = arith.constant 1.000000e+00 : f32
    %540 = vector.broadcast %cst_137 : f32 to vector<4x32xf32>
    %541 = arith.addf %540, %539 : vector<4x32xf32>
    %542 = arith.divf %540, %541 : vector<4x32xf32>
    %543 = vector.extract_strided_slice %536 {offsets = [0, 32], sizes = [4, 32], strides = [1, 1]} : vector<4x128xf32> to vector<4x32xf32>
    %544 = arith.negf %543 : vector<4x32xf32>
    %545 = math.exp %544 : vector<4x32xf32>
    %cst_138 = arith.constant 1.000000e+00 : f32
    %546 = vector.broadcast %cst_138 : f32 to vector<4x32xf32>
    %547 = arith.addf %546, %545 : vector<4x32xf32>
    %548 = arith.divf %546, %547 : vector<4x32xf32>
    %549 = vector.extract_strided_slice %536 {offsets = [0, 64], sizes = [4, 32], strides = [1, 1]} : vector<4x128xf32> to vector<4x32xf32>
    %550 = math.tanh %549 : vector<4x32xf32>
    %551 = vector.extract_strided_slice %536 {offsets = [0, 96], sizes = [4, 32], strides = [1, 1]} : vector<4x128xf32> to vector<4x32xf32>
    %552 = arith.negf %551 : vector<4x32xf32>
    %553 = math.exp %552 : vector<4x32xf32>
    %cst_139 = arith.constant 1.000000e+00 : f32
    %554 = vector.broadcast %cst_139 : f32 to vector<4x32xf32>
    %555 = arith.addf %554, %553 : vector<4x32xf32>
    %556 = arith.divf %554, %555 : vector<4x32xf32>
    %557 = arith.mulf %548, %497 : vector<4x32xf32>
    %558 = arith.mulf %542, %550 : vector<4x32xf32>
    %559 = arith.addf %557, %558 : vector<4x32xf32>
    %560 = math.tanh %559 : vector<4x32xf32>
    %561 = arith.mulf %556, %560 : vector<4x32xf32>
    %c8_140 = arith.constant 8 : index
    %c0_141 = arith.constant 0 : index
    %c0_142 = arith.constant 0 : index
    %562 = vector.load %arg12[%c8_140, %c0_141, %c0_142] : memref<16x4x32xf32, #tpu.memory_space<vmem>>, vector<1x4x32xf32>
    %563 = vector.shape_cast %562 : vector<1x4x32xf32> to vector<4x32xf32>
    %564 = vector.shape_cast %534 : vector<4x32xf32> to vector<1x4x32xf32>
    tpu.vector_store %arg12[%c8_140, %c0_141, %c0_142], %564 {strides = array<i32>} : memref<16x4x32xf32, #tpu.memory_space<vmem>>, vector<1x4x32xf32>,
    %c7_143 = arith.constant 7 : index
    %c0_144 = arith.constant 0 : index
    %c0_145 = arith.constant 0 : index
    %565 = vector.load %arg13[%c7_143, %c0_144, %c0_145] : memref<16x4x32xf32, #tpu.memory_space<vmem>>, vector<1x4x32xf32>
    %566 = vector.shape_cast %565 : vector<1x4x32xf32> to vector<4x32xf32>
    %567 = vector.shape_cast %561 : vector<4x32xf32> to vector<1x4x32xf32>
    tpu.vector_store %arg13[%c7_143, %c0_144, %c0_145], %567 {strides = array<i32>} : memref<16x4x32xf32, #tpu.memory_space<vmem>>, vector<1x4x32xf32>,
    %c36_146 = arith.constant 36 : index
    %c0_147 = arith.constant 0 : index
    %568 = vector.load %arg11[%c36_146, %c0_147] : memref<64x256xf32, #tpu.memory_space<vmem>>, vector<4x128xf32>
    %c24_148 = arith.constant 24 : index
    %c128_149 = arith.constant 128 : index
    %569 = vector.load %arg11[%c24_148, %c128_149] : memref<64x256xf32, #tpu.memory_space<vmem>>, vector<4x128xf32>
    %cst_150 = arith.constant dense<0.000000e+00> : vector<4x128xf32>
    %570 = tpu.matmul %534, %7, %cst_150 {dimension_numbers = #tpu.dot_dimension_numbers<[1], [0], [0], [1], [0, 0, 1, 1], [], []>} : vector<4x32xf32>, vector<32x128xf32>, vector<4x128xf32> -> vector<4x128xf32>
    %571 = arith.addf %568, %570 : vector<4x128xf32>
    %572 = vector.extract_strided_slice %571 {offsets = [0, 0], sizes = [4, 32], strides = [1, 1]} : vector<4x128xf32> to vector<4x32xf32>
    %573 = arith.negf %572 : vector<4x32xf32>
    %574 = math.exp %573 : vector<4x32xf32>
    %cst_151 = arith.constant 1.000000e+00 : f32
    %575 = vector.broadcast %cst_151 : f32 to vector<4x32xf32>
    %576 = arith.addf %575, %574 : vector<4x32xf32>
    %577 = arith.divf %575, %576 : vector<4x32xf32>
    %578 = vector.extract_strided_slice %571 {offsets = [0, 32], sizes = [4, 32], strides = [1, 1]} : vector<4x128xf32> to vector<4x32xf32>
    %579 = arith.negf %578 : vector<4x32xf32>
    %580 = math.exp %579 : vector<4x32xf32>
    %cst_152 = arith.constant 1.000000e+00 : f32
    %581 = vector.broadcast %cst_152 : f32 to vector<4x32xf32>
    %582 = arith.addf %581, %580 : vector<4x32xf32>
    %583 = arith.divf %581, %582 : vector<4x32xf32>
    %584 = vector.extract_strided_slice %571 {offsets = [0, 64], sizes = [4, 32], strides = [1, 1]} : vector<4x128xf32> to vector<4x32xf32>
    %585 = math.tanh %584 : vector<4x32xf32>
    %586 = vector.extract_strided_slice %571 {offsets = [0, 96], sizes = [4, 32], strides = [1, 1]} : vector<4x128xf32> to vector<4x32xf32>
    %587 = arith.negf %586 : vector<4x32xf32>
    %588 = math.exp %587 : vector<4x32xf32>
    %cst_153 = arith.constant 1.000000e+00 : f32
    %589 = vector.broadcast %cst_153 : f32 to vector<4x32xf32>
    %590 = arith.addf %589, %588 : vector<4x32xf32>
    %591 = arith.divf %589, %590 : vector<4x32xf32>
    %592 = arith.mulf %583, %532 : vector<4x32xf32>
    %593 = arith.mulf %577, %585 : vector<4x32xf32>
    %594 = arith.addf %592, %593 : vector<4x32xf32>
    %595 = math.tanh %594 : vector<4x32xf32>
    %596 = arith.mulf %591, %595 : vector<4x32xf32>
    %cst_154 = arith.constant dense<0.000000e+00> : vector<4x128xf32>
    %597 = tpu.matmul %561, %8, %cst_154 {dimension_numbers = #tpu.dot_dimension_numbers<[1], [0], [0], [1], [0, 0, 1, 1], [], []>} : vector<4x32xf32>, vector<32x128xf32>, vector<4x128xf32> -> vector<4x128xf32>
    %598 = arith.addf %569, %597 : vector<4x128xf32>
    %599 = vector.extract_strided_slice %598 {offsets = [0, 0], sizes = [4, 32], strides = [1, 1]} : vector<4x128xf32> to vector<4x32xf32>
    %600 = arith.negf %599 : vector<4x32xf32>
    %601 = math.exp %600 : vector<4x32xf32>
    %cst_155 = arith.constant 1.000000e+00 : f32
    %602 = vector.broadcast %cst_155 : f32 to vector<4x32xf32>
    %603 = arith.addf %602, %601 : vector<4x32xf32>
    %604 = arith.divf %602, %603 : vector<4x32xf32>
    %605 = vector.extract_strided_slice %598 {offsets = [0, 32], sizes = [4, 32], strides = [1, 1]} : vector<4x128xf32> to vector<4x32xf32>
    %606 = arith.negf %605 : vector<4x32xf32>
    %607 = math.exp %606 : vector<4x32xf32>
    %cst_156 = arith.constant 1.000000e+00 : f32
    %608 = vector.broadcast %cst_156 : f32 to vector<4x32xf32>
    %609 = arith.addf %608, %607 : vector<4x32xf32>
    %610 = arith.divf %608, %609 : vector<4x32xf32>
    %611 = vector.extract_strided_slice %598 {offsets = [0, 64], sizes = [4, 32], strides = [1, 1]} : vector<4x128xf32> to vector<4x32xf32>
    %612 = math.tanh %611 : vector<4x32xf32>
    %613 = vector.extract_strided_slice %598 {offsets = [0, 96], sizes = [4, 32], strides = [1, 1]} : vector<4x128xf32> to vector<4x32xf32>
    %614 = arith.negf %613 : vector<4x32xf32>
    %615 = math.exp %614 : vector<4x32xf32>
    %cst_157 = arith.constant 1.000000e+00 : f32
    %616 = vector.broadcast %cst_157 : f32 to vector<4x32xf32>
    %617 = arith.addf %616, %615 : vector<4x32xf32>
    %618 = arith.divf %616, %617 : vector<4x32xf32>
    %619 = arith.mulf %610, %559 : vector<4x32xf32>
    %620 = arith.mulf %604, %612 : vector<4x32xf32>
    %621 = arith.addf %619, %620 : vector<4x32xf32>
    %622 = math.tanh %621 : vector<4x32xf32>
    %623 = arith.mulf %618, %622 : vector<4x32xf32>
    %c9_158 = arith.constant 9 : index
    %c0_159 = arith.constant 0 : index
    %c0_160 = arith.constant 0 : index
    %624 = vector.load %arg12[%c9_158, %c0_159, %c0_160] : memref<16x4x32xf32, #tpu.memory_space<vmem>>, vector<1x4x32xf32>
    %625 = vector.shape_cast %624 : vector<1x4x32xf32> to vector<4x32xf32>
    %626 = vector.shape_cast %596 : vector<4x32xf32> to vector<1x4x32xf32>
    tpu.vector_store %arg12[%c9_158, %c0_159, %c0_160], %626 {strides = array<i32>} : memref<16x4x32xf32, #tpu.memory_space<vmem>>, vector<1x4x32xf32>,
    %c6_161 = arith.constant 6 : index
    %c0_162 = arith.constant 0 : index
    %c0_163 = arith.constant 0 : index
    %627 = vector.load %arg13[%c6_161, %c0_162, %c0_163] : memref<16x4x32xf32, #tpu.memory_space<vmem>>, vector<1x4x32xf32>
    %628 = vector.shape_cast %627 : vector<1x4x32xf32> to vector<4x32xf32>
    %629 = vector.shape_cast %623 : vector<4x32xf32> to vector<1x4x32xf32>
    tpu.vector_store %arg13[%c6_161, %c0_162, %c0_163], %629 {strides = array<i32>} : memref<16x4x32xf32, #tpu.memory_space<vmem>>, vector<1x4x32xf32>,
    %c40_164 = arith.constant 40 : index
    %c0_165 = arith.constant 0 : index
    %630 = vector.load %arg11[%c40_164, %c0_165] : memref<64x256xf32, #tpu.memory_space<vmem>>, vector<4x128xf32>
    %c20_166 = arith.constant 20 : index
    %c128_167 = arith.constant 128 : index
    %631 = vector.load %arg11[%c20_166, %c128_167] : memref<64x256xf32, #tpu.memory_space<vmem>>, vector<4x128xf32>
    %cst_168 = arith.constant dense<0.000000e+00> : vector<4x128xf32>
    %632 = tpu.matmul %596, %7, %cst_168 {dimension_numbers = #tpu.dot_dimension_numbers<[1], [0], [0], [1], [0, 0, 1, 1], [], []>} : vector<4x32xf32>, vector<32x128xf32>, vector<4x128xf32> -> vector<4x128xf32>
    %633 = arith.addf %630, %632 : vector<4x128xf32>
    %634 = vector.extract_strided_slice %633 {offsets = [0, 0], sizes = [4, 32], strides = [1, 1]} : vector<4x128xf32> to vector<4x32xf32>
    %635 = arith.negf %634 : vector<4x32xf32>
    %636 = math.exp %635 : vector<4x32xf32>
    %cst_169 = arith.constant 1.000000e+00 : f32
    %637 = vector.broadcast %cst_169 : f32 to vector<4x32xf32>
    %638 = arith.addf %637, %636 : vector<4x32xf32>
    %639 = arith.divf %637, %638 : vector<4x32xf32>
    %640 = vector.extract_strided_slice %633 {offsets = [0, 32], sizes = [4, 32], strides = [1, 1]} : vector<4x128xf32> to vector<4x32xf32>
    %641 = arith.negf %640 : vector<4x32xf32>
    %642 = math.exp %641 : vector<4x32xf32>
    %cst_170 = arith.constant 1.000000e+00 : f32
    %643 = vector.broadcast %cst_170 : f32 to vector<4x32xf32>
    %644 = arith.addf %643, %642 : vector<4x32xf32>
    %645 = arith.divf %643, %644 : vector<4x32xf32>
    %646 = vector.extract_strided_slice %633 {offsets = [0, 64], sizes = [4, 32], strides = [1, 1]} : vector<4x128xf32> to vector<4x32xf32>
    %647 = math.tanh %646 : vector<4x32xf32>
    %648 = vector.extract_strided_slice %633 {offsets = [0, 96], sizes = [4, 32], strides = [1, 1]} : vector<4x128xf32> to vector<4x32xf32>
    %649 = arith.negf %648 : vector<4x32xf32>
    %650 = math.exp %649 : vector<4x32xf32>
    %cst_171 = arith.constant 1.000000e+00 : f32
    %651 = vector.broadcast %cst_171 : f32 to vector<4x32xf32>
    %652 = arith.addf %651, %650 : vector<4x32xf32>
    %653 = arith.divf %651, %652 : vector<4x32xf32>
    %654 = arith.mulf %645, %594 : vector<4x32xf32>
    %655 = arith.mulf %639, %647 : vector<4x32xf32>
    %656 = arith.addf %654, %655 : vector<4x32xf32>
    %657 = math.tanh %656 : vector<4x32xf32>
    %658 = arith.mulf %653, %657 : vector<4x32xf32>
    %cst_172 = arith.constant dense<0.000000e+00> : vector<4x128xf32>
    %659 = tpu.matmul %623, %8, %cst_172 {dimension_numbers = #tpu.dot_dimension_numbers<[1], [0], [0], [1], [0, 0, 1, 1], [], []>} : vector<4x32xf32>, vector<32x128xf32>, vector<4x128xf32> -> vector<4x128xf32>
    %660 = arith.addf %631, %659 : vector<4x128xf32>
    %661 = vector.extract_strided_slice %660 {offsets = [0, 0], sizes = [4, 32], strides = [1, 1]} : vector<4x128xf32> to vector<4x32xf32>
    %662 = arith.negf %661 : vector<4x32xf32>
    %663 = math.exp %662 : vector<4x32xf32>
    %cst_173 = arith.constant 1.000000e+00 : f32
    %664 = vector.broadcast %cst_173 : f32 to vector<4x32xf32>
    %665 = arith.addf %664, %663 : vector<4x32xf32>
    %666 = arith.divf %664, %665 : vector<4x32xf32>
    %667 = vector.extract_strided_slice %660 {offsets = [0, 32], sizes = [4, 32], strides = [1, 1]} : vector<4x128xf32> to vector<4x32xf32>
    %668 = arith.negf %667 : vector<4x32xf32>
    %669 = math.exp %668 : vector<4x32xf32>
    %cst_174 = arith.constant 1.000000e+00 : f32
    %670 = vector.broadcast %cst_174 : f32 to vector<4x32xf32>
    %671 = arith.addf %670, %669 : vector<4x32xf32>
    %672 = arith.divf %670, %671 : vector<4x32xf32>
    %673 = vector.extract_strided_slice %660 {offsets = [0, 64], sizes = [4, 32], strides = [1, 1]} : vector<4x128xf32> to vector<4x32xf32>
    %674 = math.tanh %673 : vector<4x32xf32>
    %675 = vector.extract_strided_slice %660 {offsets = [0, 96], sizes = [4, 32], strides = [1, 1]} : vector<4x128xf32> to vector<4x32xf32>
    %676 = arith.negf %675 : vector<4x32xf32>
    %677 = math.exp %676 : vector<4x32xf32>
    %cst_175 = arith.constant 1.000000e+00 : f32
    %678 = vector.broadcast %cst_175 : f32 to vector<4x32xf32>
    %679 = arith.addf %678, %677 : vector<4x32xf32>
    %680 = arith.divf %678, %679 : vector<4x32xf32>
    %681 = arith.mulf %672, %621 : vector<4x32xf32>
    %682 = arith.mulf %666, %674 : vector<4x32xf32>
    %683 = arith.addf %681, %682 : vector<4x32xf32>
    %684 = math.tanh %683 : vector<4x32xf32>
    %685 = arith.mulf %680, %684 : vector<4x32xf32>
    %c10_176 = arith.constant 10 : index
    %c0_177 = arith.constant 0 : index
    %c0_178 = arith.constant 0 : index
    %686 = vector.load %arg12[%c10_176, %c0_177, %c0_178] : memref<16x4x32xf32, #tpu.memory_space<vmem>>, vector<1x4x32xf32>
    %687 = vector.shape_cast %686 : vector<1x4x32xf32> to vector<4x32xf32>
    %688 = vector.shape_cast %658 : vector<4x32xf32> to vector<1x4x32xf32>
    tpu.vector_store %arg12[%c10_176, %c0_177, %c0_178], %688 {strides = array<i32>} : memref<16x4x32xf32, #tpu.memory_space<vmem>>, vector<1x4x32xf32>,
    %c5_179 = arith.constant 5 : index
    %c0_180 = arith.constant 0 : index
    %c0_181 = arith.constant 0 : index
    %689 = vector.load %arg13[%c5_179, %c0_180, %c0_181] : memref<16x4x32xf32, #tpu.memory_space<vmem>>, vector<1x4x32xf32>
    %690 = vector.shape_cast %689 : vector<1x4x32xf32> to vector<4x32xf32>
    %691 = vector.shape_cast %685 : vector<4x32xf32> to vector<1x4x32xf32>
    tpu.vector_store %arg13[%c5_179, %c0_180, %c0_181], %691 {strides = array<i32>} : memref<16x4x32xf32, #tpu.memory_space<vmem>>, vector<1x4x32xf32>,
    %c44_182 = arith.constant 44 : index
    %c0_183 = arith.constant 0 : index
    %692 = vector.load %arg11[%c44_182, %c0_183] : memref<64x256xf32, #tpu.memory_space<vmem>>, vector<4x128xf32>
    %c16_184 = arith.constant 16 : index
    %c128_185 = arith.constant 128 : index
    %693 = vector.load %arg11[%c16_184, %c128_185] : memref<64x256xf32, #tpu.memory_space<vmem>>, vector<4x128xf32>
    %cst_186 = arith.constant dense<0.000000e+00> : vector<4x128xf32>
    %694 = tpu.matmul %658, %7, %cst_186 {dimension_numbers = #tpu.dot_dimension_numbers<[1], [0], [0], [1], [0, 0, 1, 1], [], []>} : vector<4x32xf32>, vector<32x128xf32>, vector<4x128xf32> -> vector<4x128xf32>
    %695 = arith.addf %692, %694 : vector<4x128xf32>
    %696 = vector.extract_strided_slice %695 {offsets = [0, 0], sizes = [4, 32], strides = [1, 1]} : vector<4x128xf32> to vector<4x32xf32>
    %697 = arith.negf %696 : vector<4x32xf32>
    %698 = math.exp %697 : vector<4x32xf32>
    %cst_187 = arith.constant 1.000000e+00 : f32
    %699 = vector.broadcast %cst_187 : f32 to vector<4x32xf32>
    %700 = arith.addf %699, %698 : vector<4x32xf32>
    %701 = arith.divf %699, %700 : vector<4x32xf32>
    %702 = vector.extract_strided_slice %695 {offsets = [0, 32], sizes = [4, 32], strides = [1, 1]} : vector<4x128xf32> to vector<4x32xf32>
    %703 = arith.negf %702 : vector<4x32xf32>
    %704 = math.exp %703 : vector<4x32xf32>
    %cst_188 = arith.constant 1.000000e+00 : f32
    %705 = vector.broadcast %cst_188 : f32 to vector<4x32xf32>
    %706 = arith.addf %705, %704 : vector<4x32xf32>
    %707 = arith.divf %705, %706 : vector<4x32xf32>
    %708 = vector.extract_strided_slice %695 {offsets = [0, 64], sizes = [4, 32], strides = [1, 1]} : vector<4x128xf32> to vector<4x32xf32>
    %709 = math.tanh %708 : vector<4x32xf32>
    %710 = vector.extract_strided_slice %695 {offsets = [0, 96], sizes = [4, 32], strides = [1, 1]} : vector<4x128xf32> to vector<4x32xf32>
    %711 = arith.negf %710 : vector<4x32xf32>
    %712 = math.exp %711 : vector<4x32xf32>
    %cst_189 = arith.constant 1.000000e+00 : f32
    %713 = vector.broadcast %cst_189 : f32 to vector<4x32xf32>
    %714 = arith.addf %713, %712 : vector<4x32xf32>
    %715 = arith.divf %713, %714 : vector<4x32xf32>
    %716 = arith.mulf %707, %656 : vector<4x32xf32>
    %717 = arith.mulf %701, %709 : vector<4x32xf32>
    %718 = arith.addf %716, %717 : vector<4x32xf32>
    %719 = math.tanh %718 : vector<4x32xf32>
    %720 = arith.mulf %715, %719 : vector<4x32xf32>
    %cst_190 = arith.constant dense<0.000000e+00> : vector<4x128xf32>
    %721 = tpu.matmul %685, %8, %cst_190 {dimension_numbers = #tpu.dot_dimension_numbers<[1], [0], [0], [1], [0, 0, 1, 1], [], []>} : vector<4x32xf32>, vector<32x128xf32>, vector<4x128xf32> -> vector<4x128xf32>
    %722 = arith.addf %693, %721 : vector<4x128xf32>
    %723 = vector.extract_strided_slice %722 {offsets = [0, 0], sizes = [4, 32], strides = [1, 1]} : vector<4x128xf32> to vector<4x32xf32>
    %724 = arith.negf %723 : vector<4x32xf32>
    %725 = math.exp %724 : vector<4x32xf32>
    %cst_191 = arith.constant 1.000000e+00 : f32
    %726 = vector.broadcast %cst_191 : f32 to vector<4x32xf32>
    %727 = arith.addf %726, %725 : vector<4x32xf32>
    %728 = arith.divf %726, %727 : vector<4x32xf32>
    %729 = vector.extract_strided_slice %722 {offsets = [0, 32], sizes = [4, 32], strides = [1, 1]} : vector<4x128xf32> to vector<4x32xf32>
    %730 = arith.negf %729 : vector<4x32xf32>
    %731 = math.exp %730 : vector<4x32xf32>
    %cst_192 = arith.constant 1.000000e+00 : f32
    %732 = vector.broadcast %cst_192 : f32 to vector<4x32xf32>
    %733 = arith.addf %732, %731 : vector<4x32xf32>
    %734 = arith.divf %732, %733 : vector<4x32xf32>
    %735 = vector.extract_strided_slice %722 {offsets = [0, 64], sizes = [4, 32], strides = [1, 1]} : vector<4x128xf32> to vector<4x32xf32>
    %736 = math.tanh %735 : vector<4x32xf32>
    %737 = vector.extract_strided_slice %722 {offsets = [0, 96], sizes = [4, 32], strides = [1, 1]} : vector<4x128xf32> to vector<4x32xf32>
    %738 = arith.negf %737 : vector<4x32xf32>
    %739 = math.exp %738 : vector<4x32xf32>
    %cst_193 = arith.constant 1.000000e+00 : f32
    %740 = vector.broadcast %cst_193 : f32 to vector<4x32xf32>
    %741 = arith.addf %740, %739 : vector<4x32xf32>
    %742 = arith.divf %740, %741 : vector<4x32xf32>
    %743 = arith.mulf %734, %683 : vector<4x32xf32>
    %744 = arith.mulf %728, %736 : vector<4x32xf32>
    %745 = arith.addf %743, %744 : vector<4x32xf32>
    %746 = math.tanh %745 : vector<4x32xf32>
    %747 = arith.mulf %742, %746 : vector<4x32xf32>
    %c11_194 = arith.constant 11 : index
    %c0_195 = arith.constant 0 : index
    %c0_196 = arith.constant 0 : index
    %748 = vector.load %arg12[%c11_194, %c0_195, %c0_196] : memref<16x4x32xf32, #tpu.memory_space<vmem>>, vector<1x4x32xf32>
    %749 = vector.shape_cast %748 : vector<1x4x32xf32> to vector<4x32xf32>
    %750 = vector.shape_cast %720 : vector<4x32xf32> to vector<1x4x32xf32>
    tpu.vector_store %arg12[%c11_194, %c0_195, %c0_196], %750 {strides = array<i32>} : memref<16x4x32xf32, #tpu.memory_space<vmem>>, vector<1x4x32xf32>,
    %c4_197 = arith.constant 4 : index
    %c0_198 = arith.constant 0 : index
    %c0_199 = arith.constant 0 : index
    %751 = vector.load %arg13[%c4_197, %c0_198, %c0_199] : memref<16x4x32xf32, #tpu.memory_space<vmem>>, vector<1x4x32xf32>
    %752 = vector.shape_cast %751 : vector<1x4x32xf32> to vector<4x32xf32>
    %753 = vector.shape_cast %747 : vector<4x32xf32> to vector<1x4x32xf32>
    tpu.vector_store %arg13[%c4_197, %c0_198, %c0_199], %753 {strides = array<i32>} : memref<16x4x32xf32, #tpu.memory_space<vmem>>, vector<1x4x32xf32>,
    %c48_200 = arith.constant 48 : index
    %c0_201 = arith.constant 0 : index
    %754 = vector.load %arg11[%c48_200, %c0_201] : memref<64x256xf32, #tpu.memory_space<vmem>>, vector<4x128xf32>
    %c12_202 = arith.constant 12 : index
    %c128_203 = arith.constant 128 : index
    %755 = vector.load %arg11[%c12_202, %c128_203] : memref<64x256xf32, #tpu.memory_space<vmem>>, vector<4x128xf32>
    %cst_204 = arith.constant dense<0.000000e+00> : vector<4x128xf32>
    %756 = tpu.matmul %720, %7, %cst_204 {dimension_numbers = #tpu.dot_dimension_numbers<[1], [0], [0], [1], [0, 0, 1, 1], [], []>} : vector<4x32xf32>, vector<32x128xf32>, vector<4x128xf32> -> vector<4x128xf32>
    %757 = arith.addf %754, %756 : vector<4x128xf32>
    %758 = vector.extract_strided_slice %757 {offsets = [0, 0], sizes = [4, 32], strides = [1, 1]} : vector<4x128xf32> to vector<4x32xf32>
    %759 = arith.negf %758 : vector<4x32xf32>
    %760 = math.exp %759 : vector<4x32xf32>
    %cst_205 = arith.constant 1.000000e+00 : f32
    %761 = vector.broadcast %cst_205 : f32 to vector<4x32xf32>
    %762 = arith.addf %761, %760 : vector<4x32xf32>
    %763 = arith.divf %761, %762 : vector<4x32xf32>
    %764 = vector.extract_strided_slice %757 {offsets = [0, 32], sizes = [4, 32], strides = [1, 1]} : vector<4x128xf32> to vector<4x32xf32>
    %765 = arith.negf %764 : vector<4x32xf32>
    %766 = math.exp %765 : vector<4x32xf32>
    %cst_206 = arith.constant 1.000000e+00 : f32
    %767 = vector.broadcast %cst_206 : f32 to vector<4x32xf32>
    %768 = arith.addf %767, %766 : vector<4x32xf32>
    %769 = arith.divf %767, %768 : vector<4x32xf32>
    %770 = vector.extract_strided_slice %757 {offsets = [0, 64], sizes = [4, 32], strides = [1, 1]} : vector<4x128xf32> to vector<4x32xf32>
    %771 = math.tanh %770 : vector<4x32xf32>
    %772 = vector.extract_strided_slice %757 {offsets = [0, 96], sizes = [4, 32], strides = [1, 1]} : vector<4x128xf32> to vector<4x32xf32>
    %773 = arith.negf %772 : vector<4x32xf32>
    %774 = math.exp %773 : vector<4x32xf32>
    %cst_207 = arith.constant 1.000000e+00 : f32
    %775 = vector.broadcast %cst_207 : f32 to vector<4x32xf32>
    %776 = arith.addf %775, %774 : vector<4x32xf32>
    %777 = arith.divf %775, %776 : vector<4x32xf32>
    %778 = arith.mulf %769, %718 : vector<4x32xf32>
    %779 = arith.mulf %763, %771 : vector<4x32xf32>
    %780 = arith.addf %778, %779 : vector<4x32xf32>
    %781 = math.tanh %780 : vector<4x32xf32>
    %782 = arith.mulf %777, %781 : vector<4x32xf32>
    %cst_208 = arith.constant dense<0.000000e+00> : vector<4x128xf32>
    %783 = tpu.matmul %747, %8, %cst_208 {dimension_numbers = #tpu.dot_dimension_numbers<[1], [0], [0], [1], [0, 0, 1, 1], [], []>} : vector<4x32xf32>, vector<32x128xf32>, vector<4x128xf32> -> vector<4x128xf32>
    %784 = arith.addf %755, %783 : vector<4x128xf32>
    %785 = vector.extract_strided_slice %784 {offsets = [0, 0], sizes = [4, 32], strides = [1, 1]} : vector<4x128xf32> to vector<4x32xf32>
    %786 = arith.negf %785 : vector<4x32xf32>
    %787 = math.exp %786 : vector<4x32xf32>
    %cst_209 = arith.constant 1.000000e+00 : f32
    %788 = vector.broadcast %cst_209 : f32 to vector<4x32xf32>
    %789 = arith.addf %788, %787 : vector<4x32xf32>
    %790 = arith.divf %788, %789 : vector<4x32xf32>
    %791 = vector.extract_strided_slice %784 {offsets = [0, 32], sizes = [4, 32], strides = [1, 1]} : vector<4x128xf32> to vector<4x32xf32>
    %792 = arith.negf %791 : vector<4x32xf32>
    %793 = math.exp %792 : vector<4x32xf32>
    %cst_210 = arith.constant 1.000000e+00 : f32
    %794 = vector.broadcast %cst_210 : f32 to vector<4x32xf32>
    %795 = arith.addf %794, %793 : vector<4x32xf32>
    %796 = arith.divf %794, %795 : vector<4x32xf32>
    %797 = vector.extract_strided_slice %784 {offsets = [0, 64], sizes = [4, 32], strides = [1, 1]} : vector<4x128xf32> to vector<4x32xf32>
    %798 = math.tanh %797 : vector<4x32xf32>
    %799 = vector.extract_strided_slice %784 {offsets = [0, 96], sizes = [4, 32], strides = [1, 1]} : vector<4x128xf32> to vector<4x32xf32>
    %800 = arith.negf %799 : vector<4x32xf32>
    %801 = math.exp %800 : vector<4x32xf32>
    %cst_211 = arith.constant 1.000000e+00 : f32
    %802 = vector.broadcast %cst_211 : f32 to vector<4x32xf32>
    %803 = arith.addf %802, %801 : vector<4x32xf32>
    %804 = arith.divf %802, %803 : vector<4x32xf32>
    %805 = arith.mulf %796, %745 : vector<4x32xf32>
    %806 = arith.mulf %790, %798 : vector<4x32xf32>
    %807 = arith.addf %805, %806 : vector<4x32xf32>
    %808 = math.tanh %807 : vector<4x32xf32>
    %809 = arith.mulf %804, %808 : vector<4x32xf32>
    %c12_212 = arith.constant 12 : index
    %c0_213 = arith.constant 0 : index
    %c0_214 = arith.constant 0 : index
    %810 = vector.load %arg12[%c12_212, %c0_213, %c0_214] : memref<16x4x32xf32, #tpu.memory_space<vmem>>, vector<1x4x32xf32>
    %811 = vector.shape_cast %810 : vector<1x4x32xf32> to vector<4x32xf32>
    %812 = vector.shape_cast %782 : vector<4x32xf32> to vector<1x4x32xf32>
    tpu.vector_store %arg12[%c12_212, %c0_213, %c0_214], %812 {strides = array<i32>} : memref<16x4x32xf32, #tpu.memory_space<vmem>>, vector<1x4x32xf32>,
    %c3_215 = arith.constant 3 : index
    %c0_216 = arith.constant 0 : index
    %c0_217 = arith.constant 0 : index
    %813 = vector.load %arg13[%c3_215, %c0_216, %c0_217] : memref<16x4x32xf32, #tpu.memory_space<vmem>>, vector<1x4x32xf32>
    %814 = vector.shape_cast %813 : vector<1x4x32xf32> to vector<4x32xf32>
    %815 = vector.shape_cast %809 : vector<4x32xf32> to vector<1x4x32xf32>
    tpu.vector_store %arg13[%c3_215, %c0_216, %c0_217], %815 {strides = array<i32>} : memref<16x4x32xf32, #tpu.memory_space<vmem>>, vector<1x4x32xf32>,
    %c52_218 = arith.constant 52 : index
    %c0_219 = arith.constant 0 : index
    %816 = vector.load %arg11[%c52_218, %c0_219] : memref<64x256xf32, #tpu.memory_space<vmem>>, vector<4x128xf32>
    %c8_220 = arith.constant 8 : index
    %c128_221 = arith.constant 128 : index
    %817 = vector.load %arg11[%c8_220, %c128_221] : memref<64x256xf32, #tpu.memory_space<vmem>>, vector<4x128xf32>
    %cst_222 = arith.constant dense<0.000000e+00> : vector<4x128xf32>
    %818 = tpu.matmul %782, %7, %cst_222 {dimension_numbers = #tpu.dot_dimension_numbers<[1], [0], [0], [1], [0, 0, 1, 1], [], []>} : vector<4x32xf32>, vector<32x128xf32>, vector<4x128xf32> -> vector<4x128xf32>
    %819 = arith.addf %816, %818 : vector<4x128xf32>
    %820 = vector.extract_strided_slice %819 {offsets = [0, 0], sizes = [4, 32], strides = [1, 1]} : vector<4x128xf32> to vector<4x32xf32>
    %821 = arith.negf %820 : vector<4x32xf32>
    %822 = math.exp %821 : vector<4x32xf32>
    %cst_223 = arith.constant 1.000000e+00 : f32
    %823 = vector.broadcast %cst_223 : f32 to vector<4x32xf32>
    %824 = arith.addf %823, %822 : vector<4x32xf32>
    %825 = arith.divf %823, %824 : vector<4x32xf32>
    %826 = vector.extract_strided_slice %819 {offsets = [0, 32], sizes = [4, 32], strides = [1, 1]} : vector<4x128xf32> to vector<4x32xf32>
    %827 = arith.negf %826 : vector<4x32xf32>
    %828 = math.exp %827 : vector<4x32xf32>
    %cst_224 = arith.constant 1.000000e+00 : f32
    %829 = vector.broadcast %cst_224 : f32 to vector<4x32xf32>
    %830 = arith.addf %829, %828 : vector<4x32xf32>
    %831 = arith.divf %829, %830 : vector<4x32xf32>
    %832 = vector.extract_strided_slice %819 {offsets = [0, 64], sizes = [4, 32], strides = [1, 1]} : vector<4x128xf32> to vector<4x32xf32>
    %833 = math.tanh %832 : vector<4x32xf32>
    %834 = vector.extract_strided_slice %819 {offsets = [0, 96], sizes = [4, 32], strides = [1, 1]} : vector<4x128xf32> to vector<4x32xf32>
    %835 = arith.negf %834 : vector<4x32xf32>
    %836 = math.exp %835 : vector<4x32xf32>
    %cst_225 = arith.constant 1.000000e+00 : f32
    %837 = vector.broadcast %cst_225 : f32 to vector<4x32xf32>
    %838 = arith.addf %837, %836 : vector<4x32xf32>
    %839 = arith.divf %837, %838 : vector<4x32xf32>
    %840 = arith.mulf %831, %780 : vector<4x32xf32>
    %841 = arith.mulf %825, %833 : vector<4x32xf32>
    %842 = arith.addf %840, %841 : vector<4x32xf32>
    %843 = math.tanh %842 : vector<4x32xf32>
    %844 = arith.mulf %839, %843 : vector<4x32xf32>
    %cst_226 = arith.constant dense<0.000000e+00> : vector<4x128xf32>
    %845 = tpu.matmul %809, %8, %cst_226 {dimension_numbers = #tpu.dot_dimension_numbers<[1], [0], [0], [1], [0, 0, 1, 1], [], []>} : vector<4x32xf32>, vector<32x128xf32>, vector<4x128xf32> -> vector<4x128xf32>
    %846 = arith.addf %817, %845 : vector<4x128xf32>
    %847 = vector.extract_strided_slice %846 {offsets = [0, 0], sizes = [4, 32], strides = [1, 1]} : vector<4x128xf32> to vector<4x32xf32>
    %848 = arith.negf %847 : vector<4x32xf32>
    %849 = math.exp %848 : vector<4x32xf32>
    %cst_227 = arith.constant 1.000000e+00 : f32
    %850 = vector.broadcast %cst_227 : f32 to vector<4x32xf32>
    %851 = arith.addf %850, %849 : vector<4x32xf32>
    %852 = arith.divf %850, %851 : vector<4x32xf32>
    %853 = vector.extract_strided_slice %846 {offsets = [0, 32], sizes = [4, 32], strides = [1, 1]} : vector<4x128xf32> to vector<4x32xf32>
    %854 = arith.negf %853 : vector<4x32xf32>
    %855 = math.exp %854 : vector<4x32xf32>
    %cst_228 = arith.constant 1.000000e+00 : f32
    %856 = vector.broadcast %cst_228 : f32 to vector<4x32xf32>
    %857 = arith.addf %856, %855 : vector<4x32xf32>
    %858 = arith.divf %856, %857 : vector<4x32xf32>
    %859 = vector.extract_strided_slice %846 {offsets = [0, 64], sizes = [4, 32], strides = [1, 1]} : vector<4x128xf32> to vector<4x32xf32>
    %860 = math.tanh %859 : vector<4x32xf32>
    %861 = vector.extract_strided_slice %846 {offsets = [0, 96], sizes = [4, 32], strides = [1, 1]} : vector<4x128xf32> to vector<4x32xf32>
    %862 = arith.negf %861 : vector<4x32xf32>
    %863 = math.exp %862 : vector<4x32xf32>
    %cst_229 = arith.constant 1.000000e+00 : f32
    %864 = vector.broadcast %cst_229 : f32 to vector<4x32xf32>
    %865 = arith.addf %864, %863 : vector<4x32xf32>
    %866 = arith.divf %864, %865 : vector<4x32xf32>
    %867 = arith.mulf %858, %807 : vector<4x32xf32>
    %868 = arith.mulf %852, %860 : vector<4x32xf32>
    %869 = arith.addf %867, %868 : vector<4x32xf32>
    %870 = math.tanh %869 : vector<4x32xf32>
    %871 = arith.mulf %866, %870 : vector<4x32xf32>
    %c13_230 = arith.constant 13 : index
    %c0_231 = arith.constant 0 : index
    %c0_232 = arith.constant 0 : index
    %872 = vector.load %arg12[%c13_230, %c0_231, %c0_232] : memref<16x4x32xf32, #tpu.memory_space<vmem>>, vector<1x4x32xf32>
    %873 = vector.shape_cast %872 : vector<1x4x32xf32> to vector<4x32xf32>
    %874 = vector.shape_cast %844 : vector<4x32xf32> to vector<1x4x32xf32>
    tpu.vector_store %arg12[%c13_230, %c0_231, %c0_232], %874 {strides = array<i32>} : memref<16x4x32xf32, #tpu.memory_space<vmem>>, vector<1x4x32xf32>,
    %c2_233 = arith.constant 2 : index
    %c0_234 = arith.constant 0 : index
    %c0_235 = arith.constant 0 : index
    %875 = vector.load %arg13[%c2_233, %c0_234, %c0_235] : memref<16x4x32xf32, #tpu.memory_space<vmem>>, vector<1x4x32xf32>
    %876 = vector.shape_cast %875 : vector<1x4x32xf32> to vector<4x32xf32>
    %877 = vector.shape_cast %871 : vector<4x32xf32> to vector<1x4x32xf32>
    tpu.vector_store %arg13[%c2_233, %c0_234, %c0_235], %877 {strides = array<i32>} : memref<16x4x32xf32, #tpu.memory_space<vmem>>, vector<1x4x32xf32>,
    %c56_236 = arith.constant 56 : index
    %c0_237 = arith.constant 0 : index
    %878 = vector.load %arg11[%c56_236, %c0_237] : memref<64x256xf32, #tpu.memory_space<vmem>>, vector<4x128xf32>
    %c4_238 = arith.constant 4 : index
    %c128_239 = arith.constant 128 : index
    %879 = vector.load %arg11[%c4_238, %c128_239] : memref<64x256xf32, #tpu.memory_space<vmem>>, vector<4x128xf32>
    %cst_240 = arith.constant dense<0.000000e+00> : vector<4x128xf32>
    %880 = tpu.matmul %844, %7, %cst_240 {dimension_numbers = #tpu.dot_dimension_numbers<[1], [0], [0], [1], [0, 0, 1, 1], [], []>} : vector<4x32xf32>, vector<32x128xf32>, vector<4x128xf32> -> vector<4x128xf32>
    %881 = arith.addf %878, %880 : vector<4x128xf32>
    %882 = vector.extract_strided_slice %881 {offsets = [0, 0], sizes = [4, 32], strides = [1, 1]} : vector<4x128xf32> to vector<4x32xf32>
    %883 = arith.negf %882 : vector<4x32xf32>
    %884 = math.exp %883 : vector<4x32xf32>
    %cst_241 = arith.constant 1.000000e+00 : f32
    %885 = vector.broadcast %cst_241 : f32 to vector<4x32xf32>
    %886 = arith.addf %885, %884 : vector<4x32xf32>
    %887 = arith.divf %885, %886 : vector<4x32xf32>
    %888 = vector.extract_strided_slice %881 {offsets = [0, 32], sizes = [4, 32], strides = [1, 1]} : vector<4x128xf32> to vector<4x32xf32>
    %889 = arith.negf %888 : vector<4x32xf32>
    %890 = math.exp %889 : vector<4x32xf32>
    %cst_242 = arith.constant 1.000000e+00 : f32
    %891 = vector.broadcast %cst_242 : f32 to vector<4x32xf32>
    %892 = arith.addf %891, %890 : vector<4x32xf32>
    %893 = arith.divf %891, %892 : vector<4x32xf32>
    %894 = vector.extract_strided_slice %881 {offsets = [0, 64], sizes = [4, 32], strides = [1, 1]} : vector<4x128xf32> to vector<4x32xf32>
    %895 = math.tanh %894 : vector<4x32xf32>
    %896 = vector.extract_strided_slice %881 {offsets = [0, 96], sizes = [4, 32], strides = [1, 1]} : vector<4x128xf32> to vector<4x32xf32>
    %897 = arith.negf %896 : vector<4x32xf32>
    %898 = math.exp %897 : vector<4x32xf32>
    %cst_243 = arith.constant 1.000000e+00 : f32
    %899 = vector.broadcast %cst_243 : f32 to vector<4x32xf32>
    %900 = arith.addf %899, %898 : vector<4x32xf32>
    %901 = arith.divf %899, %900 : vector<4x32xf32>
    %902 = arith.mulf %893, %842 : vector<4x32xf32>
    %903 = arith.mulf %887, %895 : vector<4x32xf32>
    %904 = arith.addf %902, %903 : vector<4x32xf32>
    %905 = math.tanh %904 : vector<4x32xf32>
    %906 = arith.mulf %901, %905 : vector<4x32xf32>
    %cst_244 = arith.constant dense<0.000000e+00> : vector<4x128xf32>
    %907 = tpu.matmul %871, %8, %cst_244 {dimension_numbers = #tpu.dot_dimension_numbers<[1], [0], [0], [1], [0, 0, 1, 1], [], []>} : vector<4x32xf32>, vector<32x128xf32>, vector<4x128xf32> -> vector<4x128xf32>
    %908 = arith.addf %879, %907 : vector<4x128xf32>
    %909 = vector.extract_strided_slice %908 {offsets = [0, 0], sizes = [4, 32], strides = [1, 1]} : vector<4x128xf32> to vector<4x32xf32>
    %910 = arith.negf %909 : vector<4x32xf32>
    %911 = math.exp %910 : vector<4x32xf32>
    %cst_245 = arith.constant 1.000000e+00 : f32
    %912 = vector.broadcast %cst_245 : f32 to vector<4x32xf32>
    %913 = arith.addf %912, %911 : vector<4x32xf32>
    %914 = arith.divf %912, %913 : vector<4x32xf32>
    %915 = vector.extract_strided_slice %908 {offsets = [0, 32], sizes = [4, 32], strides = [1, 1]} : vector<4x128xf32> to vector<4x32xf32>
    %916 = arith.negf %915 : vector<4x32xf32>
    %917 = math.exp %916 : vector<4x32xf32>
    %cst_246 = arith.constant 1.000000e+00 : f32
    %918 = vector.broadcast %cst_246 : f32 to vector<4x32xf32>
    %919 = arith.addf %918, %917 : vector<4x32xf32>
    %920 = arith.divf %918, %919 : vector<4x32xf32>
    %921 = vector.extract_strided_slice %908 {offsets = [0, 64], sizes = [4, 32], strides = [1, 1]} : vector<4x128xf32> to vector<4x32xf32>
    %922 = math.tanh %921 : vector<4x32xf32>
    %923 = vector.extract_strided_slice %908 {offsets = [0, 96], sizes = [4, 32], strides = [1, 1]} : vector<4x128xf32> to vector<4x32xf32>
    %924 = arith.negf %923 : vector<4x32xf32>
    %925 = math.exp %924 : vector<4x32xf32>
    %cst_247 = arith.constant 1.000000e+00 : f32
    %926 = vector.broadcast %cst_247 : f32 to vector<4x32xf32>
    %927 = arith.addf %926, %925 : vector<4x32xf32>
    %928 = arith.divf %926, %927 : vector<4x32xf32>
    %929 = arith.mulf %920, %869 : vector<4x32xf32>
    %930 = arith.mulf %914, %922 : vector<4x32xf32>
    %931 = arith.addf %929, %930 : vector<4x32xf32>
    %932 = math.tanh %931 : vector<4x32xf32>
    %933 = arith.mulf %928, %932 : vector<4x32xf32>
    %c14_248 = arith.constant 14 : index
    %c0_249 = arith.constant 0 : index
    %c0_250 = arith.constant 0 : index
    %934 = vector.load %arg12[%c14_248, %c0_249, %c0_250] : memref<16x4x32xf32, #tpu.memory_space<vmem>>, vector<1x4x32xf32>
    %935 = vector.shape_cast %934 : vector<1x4x32xf32> to vector<4x32xf32>
    %936 = vector.shape_cast %906 : vector<4x32xf32> to vector<1x4x32xf32>
    tpu.vector_store %arg12[%c14_248, %c0_249, %c0_250], %936 {strides = array<i32>} : memref<16x4x32xf32, #tpu.memory_space<vmem>>, vector<1x4x32xf32>,
    %c1_251 = arith.constant 1 : index
    %c0_252 = arith.constant 0 : index
    %c0_253 = arith.constant 0 : index
    %937 = vector.load %arg13[%c1_251, %c0_252, %c0_253] : memref<16x4x32xf32, #tpu.memory_space<vmem>>, vector<1x4x32xf32>
    %938 = vector.shape_cast %937 : vector<1x4x32xf32> to vector<4x32xf32>
    %939 = vector.shape_cast %933 : vector<4x32xf32> to vector<1x4x32xf32>
    tpu.vector_store %arg13[%c1_251, %c0_252, %c0_253], %939 {strides = array<i32>} : memref<16x4x32xf32, #tpu.memory_space<vmem>>, vector<1x4x32xf32>,
    %c60_254 = arith.constant 60 : index
    %c0_255 = arith.constant 0 : index
    %940 = vector.load %arg11[%c60_254, %c0_255] : memref<64x256xf32, #tpu.memory_space<vmem>>, vector<4x128xf32>
    %c0_256 = arith.constant 0 : index
    %c128_257 = arith.constant 128 : index
    %941 = vector.load %arg11[%c0_256, %c128_257] : memref<64x256xf32, #tpu.memory_space<vmem>>, vector<4x128xf32>
    %cst_258 = arith.constant dense<0.000000e+00> : vector<4x128xf32>
    %942 = tpu.matmul %906, %7, %cst_258 {dimension_numbers = #tpu.dot_dimension_numbers<[1], [0], [0], [1], [0, 0, 1, 1], [], []>} : vector<4x32xf32>, vector<32x128xf32>, vector<4x128xf32> -> vector<4x128xf32>
    %943 = arith.addf %940, %942 : vector<4x128xf32>
    %944 = vector.extract_strided_slice %943 {offsets = [0, 0], sizes = [4, 32], strides = [1, 1]} : vector<4x128xf32> to vector<4x32xf32>
    %945 = arith.negf %944 : vector<4x32xf32>
    %946 = math.exp %945 : vector<4x32xf32>
    %cst_259 = arith.constant 1.000000e+00 : f32
    %947 = vector.broadcast %cst_259 : f32 to vector<4x32xf32>
    %948 = arith.addf %947, %946 : vector<4x32xf32>
    %949 = arith.divf %947, %948 : vector<4x32xf32>
    %950 = vector.extract_strided_slice %943 {offsets = [0, 32], sizes = [4, 32], strides = [1, 1]} : vector<4x128xf32> to vector<4x32xf32>
    %951 = arith.negf %950 : vector<4x32xf32>
    %952 = math.exp %951 : vector<4x32xf32>
    %cst_260 = arith.constant 1.000000e+00 : f32
    %953 = vector.broadcast %cst_260 : f32 to vector<4x32xf32>
    %954 = arith.addf %953, %952 : vector<4x32xf32>
    %955 = arith.divf %953, %954 : vector<4x32xf32>
    %956 = vector.extract_strided_slice %943 {offsets = [0, 64], sizes = [4, 32], strides = [1, 1]} : vector<4x128xf32> to vector<4x32xf32>
    %957 = math.tanh %956 : vector<4x32xf32>
    %958 = vector.extract_strided_slice %943 {offsets = [0, 96], sizes = [4, 32], strides = [1, 1]} : vector<4x128xf32> to vector<4x32xf32>
    %959 = arith.negf %958 : vector<4x32xf32>
    %960 = math.exp %959 : vector<4x32xf32>
    %cst_261 = arith.constant 1.000000e+00 : f32
    %961 = vector.broadcast %cst_261 : f32 to vector<4x32xf32>
    %962 = arith.addf %961, %960 : vector<4x32xf32>
    %963 = arith.divf %961, %962 : vector<4x32xf32>
    %964 = arith.mulf %955, %904 : vector<4x32xf32>
    %965 = arith.mulf %949, %957 : vector<4x32xf32>
    %966 = arith.addf %964, %965 : vector<4x32xf32>
    %967 = math.tanh %966 : vector<4x32xf32>
    %968 = arith.mulf %963, %967 : vector<4x32xf32>
    %cst_262 = arith.constant dense<0.000000e+00> : vector<4x128xf32>
    %969 = tpu.matmul %933, %8, %cst_262 {dimension_numbers = #tpu.dot_dimension_numbers<[1], [0], [0], [1], [0, 0, 1, 1], [], []>} : vector<4x32xf32>, vector<32x128xf32>, vector<4x128xf32> -> vector<4x128xf32>
    %970 = arith.addf %941, %969 : vector<4x128xf32>
    %971 = vector.extract_strided_slice %970 {offsets = [0, 0], sizes = [4, 32], strides = [1, 1]} : vector<4x128xf32> to vector<4x32xf32>
    %972 = arith.negf %971 : vector<4x32xf32>
    %973 = math.exp %972 : vector<4x32xf32>
    %cst_263 = arith.constant 1.000000e+00 : f32
    %974 = vector.broadcast %cst_263 : f32 to vector<4x32xf32>
    %975 = arith.addf %974, %973 : vector<4x32xf32>
    %976 = arith.divf %974, %975 : vector<4x32xf32>
    %977 = vector.extract_strided_slice %970 {offsets = [0, 32], sizes = [4, 32], strides = [1, 1]} : vector<4x128xf32> to vector<4x32xf32>
    %978 = arith.negf %977 : vector<4x32xf32>
    %979 = math.exp %978 : vector<4x32xf32>
    %cst_264 = arith.constant 1.000000e+00 : f32
    %980 = vector.broadcast %cst_264 : f32 to vector<4x32xf32>
    %981 = arith.addf %980, %979 : vector<4x32xf32>
    %982 = arith.divf %980, %981 : vector<4x32xf32>
    %983 = vector.extract_strided_slice %970 {offsets = [0, 64], sizes = [4, 32], strides = [1, 1]} : vector<4x128xf32> to vector<4x32xf32>
    %984 = math.tanh %983 : vector<4x32xf32>
    %985 = vector.extract_strided_slice %970 {offsets = [0, 96], sizes = [4, 32], strides = [1, 1]} : vector<4x128xf32> to vector<4x32xf32>
    %986 = arith.negf %985 : vector<4x32xf32>
    %987 = math.exp %986 : vector<4x32xf32>
    %cst_265 = arith.constant 1.000000e+00 : f32
    %988 = vector.broadcast %cst_265 : f32 to vector<4x32xf32>
    %989 = arith.addf %988, %987 : vector<4x32xf32>
    %990 = arith.divf %988, %989 : vector<4x32xf32>
    %991 = arith.mulf %982, %931 : vector<4x32xf32>
    %992 = arith.mulf %976, %984 : vector<4x32xf32>
    %993 = arith.addf %991, %992 : vector<4x32xf32>
    %994 = math.tanh %993 : vector<4x32xf32>
    %995 = arith.mulf %990, %994 : vector<4x32xf32>
    %c15_266 = arith.constant 15 : index
    %c0_267 = arith.constant 0 : index
    %c0_268 = arith.constant 0 : index
    %996 = vector.load %arg12[%c15_266, %c0_267, %c0_268] : memref<16x4x32xf32, #tpu.memory_space<vmem>>, vector<1x4x32xf32>
    %997 = vector.shape_cast %996 : vector<1x4x32xf32> to vector<4x32xf32>
    %998 = vector.shape_cast %968 : vector<4x32xf32> to vector<1x4x32xf32>
    tpu.vector_store %arg12[%c15_266, %c0_267, %c0_268], %998 {strides = array<i32>} : memref<16x4x32xf32, #tpu.memory_space<vmem>>, vector<1x4x32xf32>,
    %c0_269 = arith.constant 0 : index
    %c0_270 = arith.constant 0 : index
    %c0_271 = arith.constant 0 : index
    %999 = vector.load %arg13[%c0_269, %c0_270, %c0_271] : memref<16x4x32xf32, #tpu.memory_space<vmem>>, vector<1x4x32xf32>
    %1000 = vector.shape_cast %999 : vector<1x4x32xf32> to vector<4x32xf32>
    %1001 = vector.shape_cast %995 : vector<4x32xf32> to vector<1x4x32xf32>
    tpu.vector_store %arg13[%c0_269, %c0_270, %c0_271], %1001 {strides = array<i32>} : memref<16x4x32xf32, #tpu.memory_space<vmem>>, vector<1x4x32xf32>,
    %c0_272 = arith.constant 0 : index
    %c0_273 = arith.constant 0 : index
    %1002 = memref.load %arg0[%c0_272, %c0_273] : memref<4x2xi32, #tpu.memory_space<smem>>
    %c0_274 = arith.constant 0 : index
    %c1_275 = arith.constant 1 : index
    %1003 = memref.load %arg0[%c0_274, %c1_275] : memref<4x2xi32, #tpu.memory_space<smem>>
    %c1_i32 = arith.constant 1 : i32
    %1004 = arith.subi %1002, %c1_i32 : i32
    %c0_i32 = arith.constant 0 : i32
    %1005 = arith.cmpi slt, %1004, %c0_i32 : i32
    %c1_i32_276 = arith.constant 1 : i32
    %1006 = arith.subi %1002, %c1_i32_276 : i32
    %c15_i32 = arith.constant 15 : i32
    %1007 = arith.select %1005, %c15_i32, %1006 : i32
    %c1_i32_277 = arith.constant 1 : i32
    %1008 = arith.addi %1003, %c1_i32_277 : i32
    %c15_i32_278 = arith.constant 15 : i32
    %1009 = arith.cmpi sgt, %1008, %c15_i32_278 : i32
    %c1_i32_279 = arith.constant 1 : i32
    %1010 = arith.addi %1003, %c1_i32_279 : i32
    %c15_i32_280 = arith.constant 15 : i32
    %1011 = arith.select %1009, %c15_i32_280, %1010 : i32
    %1012 = arith.index_cast %1003 : i32 to index
    %c0_281 = arith.constant 0 : index
    %c0_282 = arith.constant 0 : index
    %1013 = vector.load %arg12[%1012, %c0_281, %c0_282] : memref<16x4x32xf32, #tpu.memory_space<vmem>>, vector<1x4x32xf32>
    %1014 = vector.shape_cast %1013 : vector<1x4x32xf32> to vector<4x32xf32>
    %1015 = vector.extract_strided_slice %1014 {offsets = [0, 0], sizes = [1, 32], strides = [1, 1]} : vector<4x32xf32> to vector<1x32xf32>
    %1016 = arith.index_cast %1007 : i32 to index
    %c0_283 = arith.constant 0 : index
    %c0_284 = arith.constant 0 : index
    %1017 = vector.load %arg12[%1016, %c0_283, %c0_284] : memref<16x4x32xf32, #tpu.memory_space<vmem>>, vector<1x4x32xf32>
    %1018 = vector.shape_cast %1017 : vector<1x4x32xf32> to vector<4x32xf32>
    %1019 = vector.extract_strided_slice %1018 {offsets = [0, 0], sizes = [1, 32], strides = [1, 1]} : vector<4x32xf32> to vector<1x32xf32>
    %1020 = arith.index_cast %1002 : i32 to index
    %c0_285 = arith.constant 0 : index
    %c0_286 = arith.constant 0 : index
    %1021 = vector.load %arg13[%1020, %c0_285, %c0_286] : memref<16x4x32xf32, #tpu.memory_space<vmem>>, vector<1x4x32xf32>
    %1022 = vector.shape_cast %1021 : vector<1x4x32xf32> to vector<4x32xf32>
    %1023 = vector.extract_strided_slice %1022 {offsets = [0, 0], sizes = [1, 32], strides = [1, 1]} : vector<4x32xf32> to vector<1x32xf32>
    %1024 = arith.index_cast %1011 : i32 to index
    %c0_287 = arith.constant 0 : index
    %c0_288 = arith.constant 0 : index
    %1025 = vector.load %arg13[%1024, %c0_287, %c0_288] : memref<16x4x32xf32, #tpu.memory_space<vmem>>, vector<1x4x32xf32>
    %1026 = vector.shape_cast %1025 : vector<1x4x32xf32> to vector<4x32xf32>
    %1027 = vector.extract_strided_slice %1026 {offsets = [0, 0], sizes = [1, 32], strides = [1, 1]} : vector<4x32xf32> to vector<1x32xf32>
    %1028 = arith.subf %1015, %1019 : vector<1x32xf32>
    %1029 = arith.subf %1023, %1027 : vector<1x32xf32>
    %1030 = tpu.concatenate %1028, %1029, %1019, %1027 in 1 : vector<1x32xf32>, vector<1x32xf32>, vector<1x32xf32>, vector<1x32xf32> -> vector<1x128xf32>
    %c1_289 = arith.constant 1 : index
    %c0_290 = arith.constant 0 : index
    %1031 = memref.load %arg0[%c1_289, %c0_290] : memref<4x2xi32, #tpu.memory_space<smem>>
    %c1_291 = arith.constant 1 : index
    %c1_292 = arith.constant 1 : index
    %1032 = memref.load %arg0[%c1_291, %c1_292] : memref<4x2xi32, #tpu.memory_space<smem>>
    %c1_i32_293 = arith.constant 1 : i32
    %1033 = arith.subi %1031, %c1_i32_293 : i32
    %c0_i32_294 = arith.constant 0 : i32
    %1034 = arith.cmpi slt, %1033, %c0_i32_294 : i32
    %c1_i32_295 = arith.constant 1 : i32
    %1035 = arith.subi %1031, %c1_i32_295 : i32
    %c15_i32_296 = arith.constant 15 : i32
    %1036 = arith.select %1034, %c15_i32_296, %1035 : i32
    %c1_i32_297 = arith.constant 1 : i32
    %1037 = arith.addi %1032, %c1_i32_297 : i32
    %c15_i32_298 = arith.constant 15 : i32
    %1038 = arith.cmpi sgt, %1037, %c15_i32_298 : i32
    %c1_i32_299 = arith.constant 1 : i32
    %1039 = arith.addi %1032, %c1_i32_299 : i32
    %c15_i32_300 = arith.constant 15 : i32
    %1040 = arith.select %1038, %c15_i32_300, %1039 : i32
    %1041 = arith.index_cast %1032 : i32 to index
    %c0_301 = arith.constant 0 : index
    %c0_302 = arith.constant 0 : index
    %1042 = vector.load %arg12[%1041, %c0_301, %c0_302] : memref<16x4x32xf32, #tpu.memory_space<vmem>>, vector<1x4x32xf32>
    %1043 = vector.shape_cast %1042 : vector<1x4x32xf32> to vector<4x32xf32>
    %1044 = vector.extract_strided_slice %1043 {offsets = [1, 0], sizes = [1, 32], strides = [1, 1]} : vector<4x32xf32> to vector<1x32xf32>
    %1045 = arith.index_cast %1036 : i32 to index
    %c0_303 = arith.constant 0 : index
    %c0_304 = arith.constant 0 : index
    %1046 = vector.load %arg12[%1045, %c0_303, %c0_304] : memref<16x4x32xf32, #tpu.memory_space<vmem>>, vector<1x4x32xf32>
    %1047 = vector.shape_cast %1046 : vector<1x4x32xf32> to vector<4x32xf32>
    %1048 = vector.extract_strided_slice %1047 {offsets = [1, 0], sizes = [1, 32], strides = [1, 1]} : vector<4x32xf32> to vector<1x32xf32>
    %1049 = arith.index_cast %1031 : i32 to index
    %c0_305 = arith.constant 0 : index
    %c0_306 = arith.constant 0 : index
    %1050 = vector.load %arg13[%1049, %c0_305, %c0_306] : memref<16x4x32xf32, #tpu.memory_space<vmem>>, vector<1x4x32xf32>
    %1051 = vector.shape_cast %1050 : vector<1x4x32xf32> to vector<4x32xf32>
    %1052 = vector.extract_strided_slice %1051 {offsets = [1, 0], sizes = [1, 32], strides = [1, 1]} : vector<4x32xf32> to vector<1x32xf32>
    %1053 = arith.index_cast %1040 : i32 to index
    %c0_307 = arith.constant 0 : index
    %c0_308 = arith.constant 0 : index
    %1054 = vector.load %arg13[%1053, %c0_307, %c0_308] : memref<16x4x32xf32, #tpu.memory_space<vmem>>, vector<1x4x32xf32>
    %1055 = vector.shape_cast %1054 : vector<1x4x32xf32> to vector<4x32xf32>
    %1056 = vector.extract_strided_slice %1055 {offsets = [1, 0], sizes = [1, 32], strides = [1, 1]} : vector<4x32xf32> to vector<1x32xf32>
    %1057 = arith.subf %1044, %1048 : vector<1x32xf32>
    %1058 = arith.subf %1052, %1056 : vector<1x32xf32>
    %1059 = tpu.concatenate %1057, %1058, %1048, %1056 in 1 : vector<1x32xf32>, vector<1x32xf32>, vector<1x32xf32>, vector<1x32xf32> -> vector<1x128xf32>
    %c2_309 = arith.constant 2 : index
    %c0_310 = arith.constant 0 : index
    %1060 = memref.load %arg0[%c2_309, %c0_310] : memref<4x2xi32, #tpu.memory_space<smem>>
    %c2_311 = arith.constant 2 : index
    %c1_312 = arith.constant 1 : index
    %1061 = memref.load %arg0[%c2_311, %c1_312] : memref<4x2xi32, #tpu.memory_space<smem>>
    %c1_i32_313 = arith.constant 1 : i32
    %1062 = arith.subi %1060, %c1_i32_313 : i32
    %c0_i32_314 = arith.constant 0 : i32
    %1063 = arith.cmpi slt, %1062, %c0_i32_314 : i32
    %c1_i32_315 = arith.constant 1 : i32
    %1064 = arith.subi %1060, %c1_i32_315 : i32
    %c15_i32_316 = arith.constant 15 : i32
    %1065 = arith.select %1063, %c15_i32_316, %1064 : i32
    %c1_i32_317 = arith.constant 1 : i32
    %1066 = arith.addi %1061, %c1_i32_317 : i32
    %c15_i32_318 = arith.constant 15 : i32
    %1067 = arith.cmpi sgt, %1066, %c15_i32_318 : i32
    %c1_i32_319 = arith.constant 1 : i32
    %1068 = arith.addi %1061, %c1_i32_319 : i32
    %c15_i32_320 = arith.constant 15 : i32
    %1069 = arith.select %1067, %c15_i32_320, %1068 : i32
    %1070 = arith.index_cast %1061 : i32 to index
    %c0_321 = arith.constant 0 : index
    %c0_322 = arith.constant 0 : index
    %1071 = vector.load %arg12[%1070, %c0_321, %c0_322] : memref<16x4x32xf32, #tpu.memory_space<vmem>>, vector<1x4x32xf32>
    %1072 = vector.shape_cast %1071 : vector<1x4x32xf32> to vector<4x32xf32>
    %1073 = vector.extract_strided_slice %1072 {offsets = [2, 0], sizes = [1, 32], strides = [1, 1]} : vector<4x32xf32> to vector<1x32xf32>
    %1074 = arith.index_cast %1065 : i32 to index
    %c0_323 = arith.constant 0 : index
    %c0_324 = arith.constant 0 : index
    %1075 = vector.load %arg12[%1074, %c0_323, %c0_324] : memref<16x4x32xf32, #tpu.memory_space<vmem>>, vector<1x4x32xf32>
    %1076 = vector.shape_cast %1075 : vector<1x4x32xf32> to vector<4x32xf32>
    %1077 = vector.extract_strided_slice %1076 {offsets = [2, 0], sizes = [1, 32], strides = [1, 1]} : vector<4x32xf32> to vector<1x32xf32>
    %1078 = arith.index_cast %1060 : i32 to index
    %c0_325 = arith.constant 0 : index
    %c0_326 = arith.constant 0 : index
    %1079 = vector.load %arg13[%1078, %c0_325, %c0_326] : memref<16x4x32xf32, #tpu.memory_space<vmem>>, vector<1x4x32xf32>
    %1080 = vector.shape_cast %1079 : vector<1x4x32xf32> to vector<4x32xf32>
    %1081 = vector.extract_strided_slice %1080 {offsets = [2, 0], sizes = [1, 32], strides = [1, 1]} : vector<4x32xf32> to vector<1x32xf32>
    %1082 = arith.index_cast %1069 : i32 to index
    %c0_327 = arith.constant 0 : index
    %c0_328 = arith.constant 0 : index
    %1083 = vector.load %arg13[%1082, %c0_327, %c0_328] : memref<16x4x32xf32, #tpu.memory_space<vmem>>, vector<1x4x32xf32>
    %1084 = vector.shape_cast %1083 : vector<1x4x32xf32> to vector<4x32xf32>
    %1085 = vector.extract_strided_slice %1084 {offsets = [2, 0], sizes = [1, 32], strides = [1, 1]} : vector<4x32xf32> to vector<1x32xf32>
    %1086 = arith.subf %1073, %1077 : vector<1x32xf32>
    %1087 = arith.subf %1081, %1085 : vector<1x32xf32>
    %1088 = tpu.concatenate %1086, %1087, %1077, %1085 in 1 : vector<1x32xf32>, vector<1x32xf32>, vector<1x32xf32>, vector<1x32xf32> -> vector<1x128xf32>
    %c3_329 = arith.constant 3 : index
    %c0_330 = arith.constant 0 : index
    %1089 = memref.load %arg0[%c3_329, %c0_330] : memref<4x2xi32, #tpu.memory_space<smem>>
    %c3_331 = arith.constant 3 : index
    %c1_332 = arith.constant 1 : index
    %1090 = memref.load %arg0[%c3_331, %c1_332] : memref<4x2xi32, #tpu.memory_space<smem>>
    %c1_i32_333 = arith.constant 1 : i32
    %1091 = arith.subi %1089, %c1_i32_333 : i32
    %c0_i32_334 = arith.constant 0 : i32
    %1092 = arith.cmpi slt, %1091, %c0_i32_334 : i32
    %c1_i32_335 = arith.constant 1 : i32
    %1093 = arith.subi %1089, %c1_i32_335 : i32
    %c15_i32_336 = arith.constant 15 : i32
    %1094 = arith.select %1092, %c15_i32_336, %1093 : i32
    %c1_i32_337 = arith.constant 1 : i32
    %1095 = arith.addi %1090, %c1_i32_337 : i32
    %c15_i32_338 = arith.constant 15 : i32
    %1096 = arith.cmpi sgt, %1095, %c15_i32_338 : i32
    %c1_i32_339 = arith.constant 1 : i32
    %1097 = arith.addi %1090, %c1_i32_339 : i32
    %c15_i32_340 = arith.constant 15 : i32
    %1098 = arith.select %1096, %c15_i32_340, %1097 : i32
    %1099 = arith.index_cast %1090 : i32 to index
    %c0_341 = arith.constant 0 : index
    %c0_342 = arith.constant 0 : index
    %1100 = vector.load %arg12[%1099, %c0_341, %c0_342] : memref<16x4x32xf32, #tpu.memory_space<vmem>>, vector<1x4x32xf32>
    %1101 = vector.shape_cast %1100 : vector<1x4x32xf32> to vector<4x32xf32>
    %1102 = vector.extract_strided_slice %1101 {offsets = [3, 0], sizes = [1, 32], strides = [1, 1]} : vector<4x32xf32> to vector<1x32xf32>
    %1103 = arith.index_cast %1094 : i32 to index
    %c0_343 = arith.constant 0 : index
    %c0_344 = arith.constant 0 : index
    %1104 = vector.load %arg12[%1103, %c0_343, %c0_344] : memref<16x4x32xf32, #tpu.memory_space<vmem>>, vector<1x4x32xf32>
    %1105 = vector.shape_cast %1104 : vector<1x4x32xf32> to vector<4x32xf32>
    %1106 = vector.extract_strided_slice %1105 {offsets = [3, 0], sizes = [1, 32], strides = [1, 1]} : vector<4x32xf32> to vector<1x32xf32>
    %1107 = arith.index_cast %1089 : i32 to index
    %c0_345 = arith.constant 0 : index
    %c0_346 = arith.constant 0 : index
    %1108 = vector.load %arg13[%1107, %c0_345, %c0_346] : memref<16x4x32xf32, #tpu.memory_space<vmem>>, vector<1x4x32xf32>
    %1109 = vector.shape_cast %1108 : vector<1x4x32xf32> to vector<4x32xf32>
    %1110 = vector.extract_strided_slice %1109 {offsets = [3, 0], sizes = [1, 32], strides = [1, 1]} : vector<4x32xf32> to vector<1x32xf32>
    %1111 = arith.index_cast %1098 : i32 to index
    %c0_347 = arith.constant 0 : index
    %c0_348 = arith.constant 0 : index
    %1112 = vector.load %arg13[%1111, %c0_347, %c0_348] : memref<16x4x32xf32, #tpu.memory_space<vmem>>, vector<1x4x32xf32>
    %1113 = vector.shape_cast %1112 : vector<1x4x32xf32> to vector<4x32xf32>
    %1114 = vector.extract_strided_slice %1113 {offsets = [3, 0], sizes = [1, 32], strides = [1, 1]} : vector<4x32xf32> to vector<1x32xf32>
    %1115 = arith.subf %1102, %1106 : vector<1x32xf32>
    %1116 = arith.subf %1110, %1114 : vector<1x32xf32>
    %1117 = tpu.concatenate %1115, %1116, %1106, %1114 in 1 : vector<1x32xf32>, vector<1x32xf32>, vector<1x32xf32>, vector<1x32xf32> -> vector<1x128xf32>
    %1118 = tpu.concatenate %1030, %1059 in 0 : vector<1x128xf32>, vector<1x128xf32> -> vector<2x128xf32>
    %1119 = tpu.concatenate %1088, %1117 in 0 : vector<1x128xf32>, vector<1x128xf32> -> vector<2x128xf32>
    %1120 = tpu.concatenate %1118, %1119 in 1 : vector<2x128xf32>, vector<2x128xf32> -> vector<2x256xf32>
    %c0_349 = arith.constant 0 : index
    %c0_350 = arith.constant 0 : index
    %1121 = vector.load %arg6[%c0_349, %c0_350] : memref<256x32xf32, #tpu.memory_space<vmem>>, vector<256x32xf32>
    %cst_351 = arith.constant dense<0.000000e+00> : vector<2x32xf32>
    %1122 = tpu.matmul %1120, %1121, %cst_351 {dimension_numbers = #tpu.dot_dimension_numbers<[1], [0], [0], [1], [0, 0, 1, 1], [], []>} : vector<2x256xf32>, vector<256x32xf32>, vector<2x32xf32> -> vector<2x32xf32>
    %c0_352 = arith.constant 0 : index
    %c0_353 = arith.constant 0 : index
    %1123 = vector.load %arg7[%c0_352, %c0_353] : memref<1x32xf32, #tpu.memory_space<vmem>>, vector<1x32xf32>
    %1124 = vector.broadcast %1123 : vector<1x32xf32> to vector<2x32xf32>
    %1125 = arith.addf %1122, %1124 : vector<2x32xf32>
    %cst_354 = arith.constant 0.000000e+00 : f32
    %1126 = vector.broadcast %cst_354 : f32 to vector<2x32xf32>
    %1127 = arith.maximumf %1125, %1126 : vector<2x32xf32>
    %c0_355 = arith.constant 0 : index
    %c0_356 = arith.constant 0 : index
    %1128 = vector.load %arg8[%c0_355, %c0_356] : memref<1x32xf32, #tpu.memory_space<vmem>>, vector<1x32xf32>
    %1129 = vector.broadcast %1128 : vector<1x32xf32> to vector<2x32xf32>
    %1130 = arith.mulf %1127, %1129 : vector<2x32xf32>
    %cst_357 = arith.constant dense<0.000000e+00> : vector<2xf32>
    %1131 = vector.multi_reduction <add>, %1130, %cst_357 [1] : vector<2x32xf32> to vector<2xf32>
    %1132 = vector.shape_cast %1131 : vector<2xf32> to vector<2x1xf32>
    %c0_358 = arith.constant 0 : index
    %c0_359 = arith.constant 0 : index
    %1133 = vector.load %arg9[%c0_358, %c0_359] : memref<1x1xf32, #tpu.memory_space<vmem>>, vector<1x1xf32>
    %1134 = vector.broadcast %1133 : vector<1x1xf32> to vector<2x1xf32>
    %1135 = arith.addf %1132, %1134 : vector<2x1xf32>
    %1136 = arith.negf %1135 : vector<2x1xf32>
    %1137 = math.exp %1136 : vector<2x1xf32>
    %cst_360 = arith.constant 1.000000e+00 : f32
    %1138 = vector.broadcast %cst_360 : f32 to vector<2x1xf32>
    %1139 = arith.addf %1138, %1137 : vector<2x1xf32>
    %1140 = arith.divf %1138, %1139 : vector<2x1xf32>
    %c0_361 = arith.constant 0 : index
    %c0_362 = arith.constant 0 : index
    %1141 = vector.load %arg10[%c0_361, %c0_362] : memref<2x1xf32, #tpu.memory_space<vmem>>, vector<2x1xf32>
    tpu.vector_store %arg10[%c0_361, %c0_362], %1140 {strides = array<i32>} : memref<2x1xf32, #tpu.memory_space<vmem>>, vector<2x1xf32>,
    return
  }
}

</mosaic_0001>

<llo_original>
// kernel: model_adu_relation_forward.1
$region0: #{model_adu_relation_forward.1}
  #allocation0 [shape = 'u32[]', space=smem, size = 0x4, offset = 0x4, fixed_abs, tag = 'smem constant byte address 0x4 - core index']
  #allocation1 [shape = 'u32[144,128]{1,0:T(1,128)}', space=vmem, size = 0x12000, scoped, tag = 'internal scratch']
  #allocation2 [shape = 'f32[64,256]{1,0:T(8,128)}', space=vmem, size = 0x10000, scoped, tag = 'scratch operand']
  #allocation3 [shape = 'f32[16,4,32]{2,1,0:T(4,128)}', space=vmem, size = 0x8000, scoped, tag = 'scratch operand']
  #allocation4 [shape = 'f32[16,4,32]{2,1,0:T(4,128)}', space=vmem, size = 0x8000, scoped, tag = 'scratch operand']
  #allocation5 [shape = 'f32[1,1]{1,0:T(1,128)S(1)}', space=vmem, size = 0x200, scoped, tag = 'scoped memory for model_adu_relation_forward.1']
  %s0 = inlined_call_operand.vmem [shape: s32[4,2], index: 0, kind: input, shape index: {}]
  %s1 = inlined_call_operand.vmem [shape: f32[64,64], index: 1, kind: input, shape index: {}]
  %s2 = inlined_call_operand.vmem [shape: f32[64,256], index: 2, kind: input, shape index: {}]
  %s3 = inlined_call_operand.vmem [shape: f32[32,128], index: 3, kind: input, shape index: {}]
  %s4 = inlined_call_operand.vmem [shape: f32[32,128], index: 4, kind: input, shape index: {}]
  %s5 = inlined_call_operand.vmem [shape: f32[1,256], index: 5, kind: input, shape index: {}]
  %s6 = inlined_call_operand.vmem [shape: f32[256,32], index: 6, kind: input, shape index: {}]
  %s7 = inlined_call_operand.vmem [shape: f32[1,32], index: 7, kind: input, shape index: {}]
  %s8 = inlined_call_operand.vmem [shape: f32[1,32], index: 8, kind: input, shape index: {}]
  %s9 = inlined_call_operand.<no memory space> [shape: f32[1,1], index: 9, kind: input, shape index: {}]
  %s10 = inlined_call_operand.vmem [shape: f32[2,1], index: 10, kind: output, shape index: {}]
  %s11 = sld [smem:[#allocation0]]
  $region54: #{model_adu_relation_forward.1} parent=0
    _
  %s13 = ssub.s32 1, %s11
  %s14 = scalar_select 0, %s13, %s11
  %v15 = vstv %s9
  %16 = vst [vmem:[#allocation5] sm:$0x1] %v15
  $region1: #{model_adu_relation_forward.1} parent=0
    #allocation6 [shape = 'u8[2048]{0}', space=smem, size = 0x800, scoped, tag = 'input window, operand 0, single buffered']
    #allocation7 [shape = 's32[1]{0}', space=sflag, size = 0x4, scoped, tag = 'scoped memory for model_adu_relation_forward.1']
    %17 = vsyncpa [#allocation7], 0
    // Predicated region
    $region2: #{model_adu_relation_forward.1} parent=1 // pred_check
      _
    $region3: #{model_adu_relation_forward.1} parent=1 // pred_check_branch
      %19 = sbr.rel (0) target = $region5
    $region4: #{model_adu_relation_forward.1} parent=1 // pred_region
      %s21 = ssub.s32 64, 64
      %22 = vsyncadd [#allocation7], %s21
      %s24 = sshll.u32 %s0, 4
      %s25 = int_to_ptr.vmem [resolvable:$true] %s24
      %27 = dma.vmem_to_smem %s25, 64, [#allocation6], [#allocation7]
    $region5: #{model_adu_relation_forward.1} parent=1 // pred_fallthru
      _
    // Predicated region
    $region6: #{model_adu_relation_forward.1} parent=1 // pred_check
      _
    $region7: #{model_adu_relation_forward.1} parent=1 // pred_check_branch
      %29 = sbr.rel (0) target = $region9
    $region8: #{model_adu_relation_forward.1} parent=1 // pred_region
      _
    $region9: #{model_adu_relation_forward.1} parent=1 // pred_fallthru
      _
    // Predicated region
    $region10: #{model_adu_relation_forward.1} parent=1 // pred_check
      _
    $region11: #{model_adu_relation_forward.1} parent=1 // pred_check_branch
      %31 = sbr.rel (0) target = $region13
    $region12: #{model_adu_relation_forward.1} parent=1 // pred_region
      _
    $region13: #{model_adu_relation_forward.1} parent=1 // pred_fallthru
      _
    // Predicated region
    $region14: #{model_adu_relation_forward.1} parent=1 // pred_check
      _
    $region15: #{model_adu_relation_forward.1} parent=1 // pred_check_branch
      %33 = sbr.rel (0) target = $region17
    $region16: #{model_adu_relation_forward.1} parent=1 // pred_region
      _
    $region17: #{model_adu_relation_forward.1} parent=1 // pred_fallthru
      _
    // Predicated region
    $region18: #{model_adu_relation_forward.1} parent=1 // pred_check
      _
    $region19: #{model_adu_relation_forward.1} parent=1 // pred_check_branch
      %35 = sbr.rel (0) target = $region21
    $region20: #{model_adu_relation_forward.1} parent=1 // pred_region
      _
    $region21: #{model_adu_relation_forward.1} parent=1 // pred_fallthru
      _
    // Predicated region
    $region22: #{model_adu_relation_forward.1} parent=1 // pred_check
      _
    $region23: #{model_adu_relation_forward.1} parent=1 // pred_check_branch
      %37 = sbr.rel (0) target = $region25
    $region24: #{model_adu_relation_forward.1} parent=1 // pred_region
      _
    $region25: #{model_adu_relation_forward.1} parent=1 // pred_fallthru
      _
    // Predicated region
    $region26: #{model_adu_relation_forward.1} parent=1 // pred_check
      _
    $region27: #{model_adu_relation_forward.1} parent=1 // pred_check_branch
      %39 = sbr.rel (0) target = $region29
    $region28: #{model_adu_relation_forward.1} parent=1 // pred_region
      _
    $region29: #{model_adu_relation_forward.1} parent=1 // pred_fallthru
      _
    // Predicated region
    $region30: #{model_adu_relation_forward.1} parent=1 // pred_check
      _
    $region31: #{model_adu_relation_forward.1} parent=1 // pred_check_branch
      %41 = sbr.rel (0) target = $region33
    $region32: #{model_adu_relation_forward.1} parent=1 // pred_region
      _
    $region33: #{model_adu_relation_forward.1} parent=1 // pred_fallthru
      _
    // Predicated region
    $region34: #{model_adu_relation_forward.1} parent=1 // pred_check
      _
    $region35: #{model_adu_relation_forward.1} parent=1 // pred_check_branch
      %43 = sbr.rel (0) target = $region37
    $region36: #{model_adu_relation_forward.1} parent=1 // pred_region
      _
    $region37: #{model_adu_relation_forward.1} parent=1 // pred_fallthru
      _
    // Predicated region
    $region38: #{model_adu_relation_forward.1} parent=1 // pred_check
      _
    $region39: #{model_adu_relation_forward.1} parent=1 // pred_check_branch
      %45 = sbr.rel (0) target = $region41
    $region40: #{model_adu_relation_forward.1} parent=1 // pred_region
      _
    $region41: #{model_adu_relation_forward.1} parent=1 // pred_fallthru
      _
    // Predicated region
    $region42: #{model_adu_relation_forward.1} parent=1 // pred_check
      _
    $region43: #{model_adu_relation_forward.1} parent=1 // pred_check_branch
      %47 = sbr.rel (0) target = $region45
    $region44: #{model_adu_relation_forward.1} parent=1 // pred_region
      %48 = dma.done [#allocation7], 64
    $region45: #{model_adu_relation_forward.1} parent=1 // pred_fallthru
      _
    %49 = sfence
    %v50 = vld [vmem:[%s1] sm:$0xff]
    %v51 = vld [vmem:[%s1 + $0x8] sm:$0xff]
    %v52 = vld [vmem:[%s1 + $0x10] sm:$0xff]
    %v53 = vld [vmem:[%s1 + $0x18] sm:$0xff]
    %v54 = vld [vmem:[%s1 + $0x20] sm:$0xff]
    %v55 = vld [vmem:[%s1 + $0x28] sm:$0xff]
    %v56 = vld [vmem:[%s1 + $0x30] sm:$0xff]
    %v57 = vld [vmem:[%s1 + $0x38] sm:$0xff]
    %v58 = vld [vmem:[%s2] sm:$0xff]
    %v59 = vld [vmem:[%s2 + $0x8] sm:$0xff]
    %v60 = vld [vmem:[%s2 + $0x10] sm:$0xff]
    %v61 = vld [vmem:[%s2 + $0x18] sm:$0xff]
    %v62 = vld [vmem:[%s2 + $0x20] sm:$0xff]
    %v63 = vld [vmem:[%s2 + $0x28] sm:$0xff]
    %v64 = vld [vmem:[%s2 + $0x30] sm:$0xff]
    %v65 = vld [vmem:[%s2 + $0x38] sm:$0xff]
    %v66 = vld [vmem:[%s2 + $0x40] sm:$0xff]
    %v67 = vld [vmem:[%s2 + $0x48] sm:$0xff]
    %v68 = vld [vmem:[%s2 + $0x50] sm:$0xff]
    %v69 = vld [vmem:[%s2 + $0x58] sm:$0xff]
    %v70 = vld [vmem:[%s2 + $0x60] sm:$0xff]
    %v71 = vld [vmem:[%s2 + $0x68] sm:$0xff]
    %v72 = vld [vmem:[%s2 + $0x70] sm:$0xff]
    %v73 = vld [vmem:[%s2 + $0x78] sm:$0xff]
    %v74 = vld [vmem:[%s5] sm:$0x3]
    %v76 = vlaneseq
    %v77 = vshrl.u32 %v76, 7
    %v78 = vsub.s32 0, %v77
    %v79 = vrot.slane %v74, %v78
    %v80 = vlaneseq
    %v81 = vshrl.u32 %v80, 7
    %v82 = vsub.s32 1, %v81
    %v83 = vrot.slane %v74, %v82
    %vm86 = vcmask 523264
    %v88 = vsel %vm86, %v50, 0
    %v91 = vsel %vm86, %v51, 0
    %v94 = vsel %vm86, %v52, 0
    %v97 = vsel %vm86, %v53, 0
    %v100 = vsel %vm86, %v54, 0
    %v103 = vsel %vm86, %v55, 0
    %v106 = vsel %vm86, %v56, 0
    %v109 = vsel %vm86, %v57, 0
    %111 = vmatprep.subr.mxu0 0.0
    %112 = vmatpush1.msra.mxu0 0.0
    %113 = vmatprep.subr.mxu0 0.0
    %114 = vmatpush1.msra.mxu0 0.0
    %115 = vmatprep.subr.mxu0 0.0
    %116 = vmatpush1.msra.mxu0 0.0
    %117 = vmatprep.subr.mxu0 0.0
    %118 = vmatpush1.msra.mxu0 0.0
    %119 = vmatprep.subr.mxu0 0.0
    %120 = vmatpush1.msra.mxu0 0.0
    %121 = vmatprep.subr.mxu0 0.0
    %122 = vmatpush1.msra.mxu0 0.0
    %123 = vmatprep.subr.mxu0 0.0
    %124 = vmatpush1.msra.mxu0 0.0
    %125 = vmatprep.subr.mxu0 0.0
    %126 = vmatpush1.msra.mxu0 0.0
    %127 = vmatprep.subr.mxu0 %v73
    %128 = vmatpush1.msra.mxu0 %v72
    %129 = vmatprep.subr.mxu0 %v71
    %130 = vmatpush1.msra.mxu0 %v70
    %131 = vmatprep.subr.mxu0 %v69
    %132 = vmatpush1.msra.mxu0 %v68
    %133 = vmatprep.subr.mxu0 %v67
    %134 = vmatpush1.msra.mxu0 %v66
    %135 = vmatprep.subr.mxu0 %v65
    %136 = vmatpush1.msra.mxu0 %v64
    %137 = vmatprep.subr.mxu0 %v63
    %138 = vmatpush1.msra.mxu0 %v62
    %139 = vmatprep.subr.mxu0 %v61
    %140 = vmatpush1.msra.mxu0 %v60
    %141 = vmatprep.subr.mxu0 %v59
    %142 = vmatpush1.msra.mxu0 %v58
    %143 = vmatprep.subr.mxu0 0.0
    %144 = vmatpush2.msra.mxu0 0.0
    %145 = vmatprep.subr.mxu0 0.0
    %146 = vmatpush2.msra.mxu0 0.0
    %147 = vmatprep.subr.mxu0 0.0
    %148 = vmatpush2.msra.mxu0 0.0
    %149 = vmatprep.subr.mxu0 0.0
    %150 = vmatpush2.msra.mxu0 0.0
    %151 = vmatprep.subr.mxu0 0.0
    %152 = vmatpush2.msra.mxu0 0.0
    %153 = vmatprep.subr.mxu0 0.0
    %154 = vmatpush2.msra.mxu0 0.0
    %155 = vmatprep.subr.mxu0 0.0
    %156 = vmatpush2.msra.mxu0 0.0
    %157 = vmatprep.subr.mxu0 0.0
    %158 = vmatpush2.msra.mxu0 0.0
    %159 = vmatprep.subr.mxu0 0.0
    %160 = vmatpush2.msra.mxu0 0.0
    %161 = vmatprep.subr.mxu0 0.0
    %162 = vmatpush2.msra.mxu0 0.0
    %163 = vmatprep.subr.mxu0 0.0
    %164 = vmatpush2.msra.mxu0 0.0
    %165 = vmatprep.subr.mxu0 0.0
    %166 = vmatpush2.msra.mxu0 0.0
    %167 = vmatprep.subr.mxu0 0.0
    %168 = vmatpush2.msra.mxu0 0.0
    %169 = vmatprep.subr.mxu0 0.0
    %170 = vmatpush2.msra.mxu0 0.0
    %171 = vmatprep.subr.mxu0 0.0
    %172 = vmatpush2.msra.mxu0 0.0
    %173 = vmatprep.subr.mxu0 0.0
    %174 = vmatpush2.msra.mxu0 0.0
    %175 = vmatprep.mubr.f32.mxu0 0.0
    %176 = vmatmul.mubr.f32.gmra.mxu0 %v88
    %v177 = vpop.f32.mrf.mxu0
    %v178 = vadd.f32 %v79, %v177
    %v179 = vpop.f32.mrf.mxu0
    %v180 = vadd.f32 %v83, %v179
    %181 = vmatprep.mubr.f32.mxu0 0.0
    %182 = vmatmul.mubr.f32.gmra.mxu0 %v91
    %v183 = vpop.f32.mrf.mxu0
    %v184 = vadd.f32 %v79, %v183
    %v185 = vpop.f32.mrf.mxu0
    %v186 = vadd.f32 %v83, %v185
    %187 = vmatprep.mubr.f32.mxu0 0.0
    %188 = vmatmul.mubr.f32.gmra.mxu0 %v94
    %v189 = vpop.f32.mrf.mxu0
    %v190 = vadd.f32 %v79, %v189
    %v191 = vpop.f32.mrf.mxu0
    %v192 = vadd.f32 %v83, %v191
    %193 = vmatprep.mubr.f32.mxu0 0.0
    %194 = vmatmul.mubr.f32.gmra.mxu0 %v97
    %v195 = vpop.f32.mrf.mxu0
    %v196 = vadd.f32 %v79, %v195
    %v197 = vpop.f32.mrf.mxu0
    %v198 = vadd.f32 %v83, %v197
    %199 = vmatprep.mubr.f32.mxu0 0.0
    %200 = vmatmul.mubr.f32.gmra.mxu0 %v100
    %v201 = vpop.f32.mrf.mxu0
    %v202 = vadd.f32 %v79, %v201
    %v203 = vpop.f32.mrf.mxu0
    %v204 = vadd.f32 %v83, %v203
    %205 = vmatprep.mubr.f32.mxu0 0.0
    %206 = vmatmul.mubr.f32.gmra.mxu0 %v103
    %v207 = vpop.f32.mrf.mxu0
    %v208 = vadd.f32 %v79, %v207
    %v209 = vpop.f32.mrf.mxu0
    %v210 = vadd.f32 %v83, %v209
    %211 = vmatprep.mubr.f32.mxu0 0.0
    %212 = vmatmul.mubr.f32.gmra.mxu0 %v106
    %v213 = vpop.f32.mrf.mxu0
    %v214 = vadd.f32 %v79, %v213
    %v215 = vpop.f32.mrf.mxu0
    %v216 = vadd.f32 %v83, %v215
    %217 = vmatprep.mubr.f32.mxu0 0.0
    %218 = vmatmul.mubr.f32.gmra.mxu0 %v109
    %v219 = vpop.f32.mrf.mxu0
    %v220 = vadd.f32 %v79, %v219
    %v221 = vpop.f32.mrf.mxu0
    %v222 = vadd.f32 %v83, %v221
    %223 = vdwg.mxu0
    %224 = vst [vmem:[#allocation2] sm:$0xff] %v178
    %225 = vst [vmem:[#allocation2 + $0x8] sm:$0xff] %v180
    %226 = vst [vmem:[#allocation2 + $0x10] sm:$0xff] %v184
    %227 = vst [vmem:[#allocation2 + $0x18] sm:$0xff] %v186
    %228 = vst [vmem:[#allocation2 + $0x20] sm:$0xff] %v190
    %229 = vst [vmem:[#allocation2 + $0x28] sm:$0xff] %v192
    %230 = vst [vmem:[#allocation2 + $0x30] sm:$0xff] %v196
    %231 = vst [vmem:[#allocation2 + $0x38] sm:$0xff] %v198
    %232 = vst [vmem:[#allocation2 + $0x40] sm:$0xff] %v202
    %233 = vst [vmem:[#allocation2 + $0x48] sm:$0xff] %v204
    %234 = vst [vmem:[#allocation2 + $0x50] sm:$0xff] %v208
    %235 = vst [vmem:[#allocation2 + $0x58] sm:$0xff] %v210
    %236 = vst [vmem:[#allocation2 + $0x60] sm:$0xff] %v214
    %237 = vst [vmem:[#allocation2 + $0x68] sm:$0xff] %v216
    %238 = vst [vmem:[#allocation2 + $0x70] sm:$0xff] %v220
    %239 = vst [vmem:[#allocation2 + $0x78] sm:$0xff] %v222
    %v240 = vld [vmem:[%s3] sm:$0xff]
    %v241 = vld [vmem:[%s3 + $0x8] sm:$0xff]
    %v242 = vld [vmem:[%s3 + $0x10] sm:$0xff]
    %v243 = vld [vmem:[%s3 + $0x18] sm:$0xff]
    %v244 = vld [vmem:[%s4] sm:$0xff]
    %v245 = vld [vmem:[%s4 + $0x8] sm:$0xff]
    %v246 = vld [vmem:[%s4 + $0x10] sm:$0xff]
    %v247 = vld [vmem:[%s4 + $0x18] sm:$0xff]
    %v248 = vld [vmem:[#allocation2] sm:$0xf]
    %v249 = vld [vmem:[#allocation2 + $0x78] sm:$0xf0]
    %vm250 = vcmask 261120
    %v252 = vsel %vm250, 0.0, 0
    %254 = vmatprep.subr.mxu0 0.0
    %255 = vmatpush1.msra.mxu0 0.0
    %256 = vmatprep.subr.mxu0 0.0
    %257 = vmatpush1.msra.mxu0 0.0
    %258 = vmatprep.subr.mxu0 0.0
    %259 = vmatpush1.msra.mxu0 0.0
    %260 = vmatprep.subr.mxu0 0.0
    %261 = vmatpush1.msra.mxu0 0.0
    %262 = vmatprep.subr.mxu0 0.0
    %263 = vmatpush1.msra.mxu0 0.0
    %264 = vmatprep.subr.mxu0 0.0
    %265 = vmatpush1.msra.mxu0 0.0
    %266 = vmatprep.subr.mxu0 0.0
    %267 = vmatpush1.msra.mxu0 0.0
    %268 = vmatprep.subr.mxu0 0.0
    %269 = vmatpush1.msra.mxu0 0.0
    %270 = vmatprep.subr.mxu0 0.0
    %271 = vmatpush1.msra.mxu0 0.0
    %272 = vmatprep.subr.mxu0 0.0
    %273 = vmatpush1.msra.mxu0 0.0
    %274 = vmatprep.subr.mxu0 0.0
    %275 = vmatpush1.msra.mxu0 0.0
    %276 = vmatprep.subr.mxu0 0.0
    %277 = vmatpush1.msra.mxu0 0.0
    %278 = vmatprep.subr.mxu0 0.0
    %279 = vmatpush1.msra.mxu0 %v243
    %280 = vmatprep.subr.mxu0 0.0
    %281 = vmatpush1.msra.mxu0 %v242
    %282 = vmatprep.subr.mxu0 0.0
    %283 = vmatpush1.msra.mxu0 %v241
    %284 = vmatprep.subr.mxu0 0.0
    %285 = vmatpush1.msra.mxu0 %v240
    %286 = vmatprep.subr.mxu0 0.0
    %287 = vmatpush2.msra.mxu0 0.0
    %288 = vmatprep.subr.mxu0 0.0
    %289 = vmatpush2.msra.mxu0 0.0
    %290 = vmatprep.subr.mxu0 0.0
    %291 = vmatpush2.msra.mxu0 0.0
    %292 = vmatprep.subr.mxu0 0.0
    %293 = vmatpush2.msra.mxu0 0.0
    %294 = vmatprep.subr.mxu0 0.0
    %295 = vmatpush2.msra.mxu0 0.0
    %296 = vmatprep.subr.mxu0 0.0
    %297 = vmatpush2.msra.mxu0 0.0
    %298 = vmatprep.subr.mxu0 0.0
    %299 = vmatpush2.msra.mxu0 0.0
    %300 = vmatprep.subr.mxu0 0.0
    %301 = vmatpush2.msra.mxu0 0.0
    %302 = vmatprep.subr.mxu0 0.0
    %303 = vmatpush2.msra.mxu0 0.0
    %304 = vmatprep.subr.mxu0 0.0
    %305 = vmatpush2.msra.mxu0 0.0
    %306 = vmatprep.subr.mxu0 0.0
    %307 = vmatpush2.msra.mxu0 0.0
    %308 = vmatprep.subr.mxu0 0.0
    %309 = vmatpush2.msra.mxu0 0.0
    %310 = vmatprep.subr.mxu0 0.0
    %311 = vmatpush2.msra.mxu0 0.0
    %312 = vmatprep.subr.mxu0 0.0
    %313 = vmatpush2.msra.mxu0 0.0
    %314 = vmatprep.subr.mxu0 0.0
    %315 = vmatpush2.msra.mxu0 0.0
    %316 = vmatprep.subr.mxu0 0.0
    %317 = vmatpush2.msra.mxu0 0.0
    %318 = vmatprep.mubr.f32.mxu0 0.0
    %319 = vmatmul.mubr.f32.gmra.mxu0 %v252
    %v320 = vpop.f32.mrf.mxu0
    %v321 = vadd.f32 0.0, %v320
    %v322 = vpop.f32.mrf.mxu0
    %323 = vdwg.mxu0
    %v324 = vadd.f32 %v248, %v321
    %v325 = vxor.u32 %v324, 2147483648
    %v326 = vmul.f32 %v325, 1.442695
    %v327 = vpow.pop %v326
    %v328 = vadd.f32 %v327, 1.0
    %v329 = vrcp.pop %v328
    %v330 = vmul.f32 1.0, %v329
    %v331 = vtanh.pop %v324
    %v332 = vmul.f32 %v330, 0.0
    %334 = vrot.lane.b32.xlu0 %v331, 64
    %v335 = vpop.permute.xlu0 %334
    %v337 = vmul.f32 %v330, %v335
    %339 = vrot.lane.b32.xlu0 %v337, 32
    %v340 = vpop.permute.xlu0 %339
    %v342 = vadd.f32 %v332, %v340
    %v343 = vtanh.pop %v342
    %345 = vrot.lane.b32.xlu0 %v343, 64
    %v346 = vpop.permute.xlu0 %345
    %v348 = vmul.f32 %v330, %v346
    %349 = vmatprep.subr.mxu0 0.0
    %350 = vmatpush1.msra.mxu0 0.0
    %351 = vmatprep.subr.mxu0 0.0
    %352 = vmatpush1.msra.mxu0 0.0
    %353 = vmatprep.subr.mxu0 0.0
    %354 = vmatpush1.msra.mxu0 0.0
    %355 = vmatprep.subr.mxu0 0.0
    %356 = vmatpush1.msra.mxu0 0.0
    %357 = vmatprep.subr.mxu0 0.0
    %358 = vmatpush1.msra.mxu0 0.0
    %359 = vmatprep.subr.mxu0 0.0
    %360 = vmatpush1.msra.mxu0 0.0
    %361 = vmatprep.subr.mxu0 0.0
    %362 = vmatpush1.msra.mxu0 0.0
    %363 = vmatprep.subr.mxu0 0.0
    %364 = vmatpush1.msra.mxu0 0.0
    %365 = vmatprep.subr.mxu0 0.0
    %366 = vmatpush1.msra.mxu0 0.0
    %367 = vmatprep.subr.mxu0 0.0
    %368 = vmatpush1.msra.mxu0 0.0
    %369 = vmatprep.subr.mxu0 0.0
    %370 = vmatpush1.msra.mxu0 0.0
    %371 = vmatprep.subr.mxu0 0.0
    %372 = vmatpush1.msra.mxu0 0.0
    %373 = vmatprep.subr.mxu0 0.0
    %374 = vmatpush1.msra.mxu0 %v247
    %375 = vmatprep.subr.mxu0 0.0
    %376 = vmatpush1.msra.mxu0 %v246
    %377 = vmatprep.subr.mxu0 0.0
    %378 = vmatpush1.msra.mxu0 %v245
    %379 = vmatprep.subr.mxu0 0.0
    %380 = vmatpush1.msra.mxu0 %v244
    %381 = vmatprep.subr.mxu0 0.0
    %382 = vmatpush2.msra.mxu0 0.0
    %383 = vmatprep.subr.mxu0 0.0
    %384 = vmatpush2.msra.mxu0 0.0
    %385 = vmatprep.subr.mxu0 0.0
    %386 = vmatpush2.msra.mxu0 0.0
    %387 = vmatprep.subr.mxu0 0.0
    %388 = vmatpush2.msra.mxu0 0.0
    %389 = vmatprep.subr.mxu0 0.0
    %390 = vmatpush2.msra.mxu0 0.0
    %391 = vmatprep.subr.mxu0 0.0
    %392 = vmatpush2.msra.mxu0 0.0
    %393 = vmatprep.subr.mxu0 0.0
    %394 = vmatpush2.msra.mxu0 0.0
    %395 = vmatprep.subr.mxu0 0.0
    %396 = vmatpush2.msra.mxu0 0.0
    %397 = vmatprep.subr.mxu0 0.0
    %398 = vmatpush2.msra.mxu0 0.0
    %399 = vmatprep.subr.mxu0 0.0
    %400 = vmatpush2.msra.mxu0 0.0
    %401 = vmatprep.subr.mxu0 0.0
    %402 = vmatpush2.msra.mxu0 0.0
    %403 = vmatprep.subr.mxu0 0.0
    %404 = vmatpush2.msra.mxu0 0.0
    %405 = vmatprep.subr.mxu0 0.0
    %406 = vmatpush2.msra.mxu0 0.0
    %407 = vmatprep.subr.mxu0 0.0
    %408 = vmatpush2.msra.mxu0 0.0
    %409 = vmatprep.subr.mxu0 0.0
    %410 = vmatpush2.msra.mxu0 0.0
    %411 = vmatprep.subr.mxu0 0.0
    %412 = vmatpush2.msra.mxu0 0.0
    %413 = vmatprep.mubr.f32.mxu0 0.0
    %414 = vmatmul.mubr.f32.gmra.mxu0 %v252
    %v415 = vpop.f32.mrf.mxu0
    %v416 = vadd.f32 0.0, %v415
    %v417 = vpop.f32.mrf.mxu0
    %418 = vdwg.mxu0
    %v420 = vrot.slane %v416, 4
    %v422 = vadd.f32 %v249, %v420
    %v423 = vxor.u32 %v422, 2147483648
    %v424 = vmul.f32 %v423, 1.442695
    %v425 = vpow.pop %v424
    %v426 = vadd.f32 %v425, 1.0
    %v427 = vrcp.pop %v426
    %v428 = vmul.f32 1.0, %v427
    %v429 = vtanh.pop %v422
    %v430 = vmul.f32 %v428, 0.0
    %432 = vrot.lane.b32.xlu0 %v429, 64
    %v433 = vpop.permute.xlu0 %432
    %v435 = vmul.f32 %v428, %v433
    %437 = vrot.lane.b32.xlu0 %v435, 32
    %v438 = vpop.permute.xlu0 %437
    %v440 = vadd.f32 %v430, %v438
    %v441 = vtanh.pop %v440
    %443 = vrot.lane.b32.xlu0 %v441, 64
    %v444 = vpop.permute.xlu0 %443
    %v446 = vmul.f32 %v428, %v444
    %448 = vrot.lane.b32.xlu0 %v348, 32
    %v449 = vpop.permute.xlu0 %448
    %vm451 = vcmask 257024
    %452 = vst.msk [vmem:[#allocation3] sm:$0xf] %vm451, %v449
    %454 = vrot.lane.b32.xlu0 %v446, 32
    %v455 = vpop.permute.xlu0 %454
    %s457 = scalar_lea.vmem [#allocation4], 60
    %vm458 = vcmask 261124
    %459 = vst.msk [vmem:[%s457 - $0x4] sm:$0xf0] %vm458, %v455
    %v460 = vld [vmem:[#allocation2] sm:$0xf0]
    %v461 = vld [vmem:[#allocation2 + $0x78] sm:$0xf]
    %v462 = vsel %vm250, %v449, 0
    %464 = vmatprep.subr.mxu0 0.0
    %465 = vmatpush1.msra.mxu0 0.0
    %466 = vmatprep.subr.mxu0 0.0
    %467 = vmatpush1.msra.mxu0 0.0
    %468 = vmatprep.subr.mxu0 0.0
    %469 = vmatpush1.msra.mxu0 0.0
    %470 = vmatprep.subr.mxu0 0.0
    %471 = vmatpush1.msra.mxu0 0.0
    %472 = vmatprep.subr.mxu0 0.0
    %473 = vmatpush1.msra.mxu0 0.0
    %474 = vmatprep.subr.mxu0 0.0
    %475 = vmatpush1.msra.mxu0 0.0
    %476 = vmatprep.subr.mxu0 0.0
    %477 = vmatpush1.msra.mxu0 0.0
    %478 = vmatprep.subr.mxu0 0.0
    %479 = vmatpush1.msra.mxu0 0.0
    %480 = vmatprep.subr.mxu0 0.0
    %481 = vmatpush1.msra.mxu0 0.0
    %482 = vmatprep.subr.mxu0 0.0
    %483 = vmatpush1.msra.mxu0 0.0
    %484 = vmatprep.subr.mxu0 0.0
    %485 = vmatpush1.msra.mxu0 0.0
    %486 = vmatprep.subr.mxu0 0.0
    %487 = vmatpush1.msra.mxu0 0.0
    %488 = vmatprep.subr.mxu0 0.0
    %489 = vmatpush1.msra.mxu0 %v243
    %490 = vmatprep.subr.mxu0 0.0
    %491 = vmatpush1.msra.mxu0 %v242
    %492 = vmatprep.subr.mxu0 0.0
    %493 = vmatpush1.msra.mxu0 %v241
    %494 = vmatprep.subr.mxu0 0.0
    %495 = vmatpush1.msra.mxu0 %v240
    %496 = vmatprep.subr.mxu0 0.0
    %497 = vmatpush2.msra.mxu0 0.0
    %498 = vmatprep.subr.mxu0 0.0
    %499 = vmatpush2.msra.mxu0 0.0
    %500 = vmatprep.subr.mxu0 0.0
    %501 = vmatpush2.msra.mxu0 0.0
    %502 = vmatprep.subr.mxu0 0.0
    %503 = vmatpush2.msra.mxu0 0.0
    %504 = vmatprep.subr.mxu0 0.0
    %505 = vmatpush2.msra.mxu0 0.0
    %506 = vmatprep.subr.mxu0 0.0
    %507 = vmatpush2.msra.mxu0 0.0
    %508 = vmatprep.subr.mxu0 0.0
    %509 = vmatpush2.msra.mxu0 0.0
    %510 = vmatprep.subr.mxu0 0.0
    %511 = vmatpush2.msra.mxu0 0.0
    %512 = vmatprep.subr.mxu0 0.0
    %513 = vmatpush2.msra.mxu0 0.0
    %514 = vmatprep.subr.mxu0 0.0
    %515 = vmatpush2.msra.mxu0 0.0
    %516 = vmatprep.subr.mxu0 0.0
    %517 = vmatpush2.msra.mxu0 0.0
    %518 = vmatprep.subr.mxu0 0.0
    %519 = vmatpush2.msra.mxu0 0.0
    %520 = vmatprep.subr.mxu0 0.0
    %521 = vmatpush2.msra.mxu0 0.0
    %522 = vmatprep.subr.mxu0 0.0
    %523 = vmatpush2.msra.mxu0 0.0
    %524 = vmatprep.subr.mxu0 0.0
    %525 = vmatpush2.msra.mxu0 0.0
    %526 = vmatprep.subr.mxu0 0.0
    %527 = vmatpush2.msra.mxu0 0.0
    %528 = vmatprep.mubr.f32.mxu0 0.0
    %529 = vmatmul.mubr.f32.gmra.mxu0 %v462
    %v530 = vpop.f32.mrf.mxu0
    %v531 = vadd.f32 0.0, %v530
    %v532 = vpop.f32.mrf.mxu0
    %533 = vdwg.mxu0
    %v535 = vrot.slane %v531, 4
    %v537 = vadd.f32 %v460, %v535
    %v538 = vxor.u32 %v537, 2147483648
    %v539 = vmul.f32 %v538, 1.442695
    %v540 = vpow.pop %v539
    %v541 = vadd.f32 %v540, 1.0
    %v542 = vrcp.pop %v541
    %v543 = vmul.f32 1.0, %v542
    %v544 = vtanh.pop %v537
    %v546 = vrot.slane %v342, 4
    %v548 = vmul.f32 %v543, %v546
    %550 = vrot.lane.b32.xlu0 %v544, 64
    %v551 = vpop.permute.xlu0 %550
    %v553 = vmul.f32 %v543, %v551
    %555 = vrot.lane.b32.xlu0 %v553, 32
    %v556 = vpop.permute.xlu0 %555
    %v558 = vadd.f32 %v548, %v556
    %v559 = vtanh.pop %v558
    %561 = vrot.lane.b32.xlu0 %v559, 64
    %v562 = vpop.permute.xlu0 %561
    %v564 = vmul.f32 %v543, %v562
    %v565 = vrot.slane %v446, 4
    %566 = vrot.lane.b32.xlu0 %v565, 32
    %v567 = vpop.permute.xlu0 %566
    %v568 = vsel %vm250, %v567, 0
    %570 = vmatprep.subr.mxu0 0.0
    %571 = vmatpush1.msra.mxu0 0.0
    %572 = vmatprep.subr.mxu0 0.0
    %573 = vmatpush1.msra.mxu0 0.0
    %574 = vmatprep.subr.mxu0 0.0
    %575 = vmatpush1.msra.mxu0 0.0
    %576 = vmatprep.subr.mxu0 0.0
    %577 = vmatpush1.msra.mxu0 0.0
    %578 = vmatprep.subr.mxu0 0.0
    %579 = vmatpush1.msra.mxu0 0.0
    %580 = vmatprep.subr.mxu0 0.0
    %581 = vmatpush1.msra.mxu0 0.0
    %582 = vmatprep.subr.mxu0 0.0
    %583 = vmatpush1.msra.mxu0 0.0
    %584 = vmatprep.subr.mxu0 0.0
    %585 = vmatpush1.msra.mxu0 0.0
    %586 = vmatprep.subr.mxu0 0.0
    %587 = vmatpush1.msra.mxu0 0.0
    %588 = vmatprep.subr.mxu0 0.0
    %589 = vmatpush1.msra.mxu0 0.0
    %590 = vmatprep.subr.mxu0 0.0
    %591 = vmatpush1.msra.mxu0 0.0
    %592 = vmatprep.subr.mxu0 0.0
    %593 = vmatpush1.msra.mxu0 0.0
    %594 = vmatprep.subr.mxu0 0.0
    %595 = vmatpush1.msra.mxu0 %v247
    %596 = vmatprep.subr.mxu0 0.0
    %597 = vmatpush1.msra.mxu0 %v246
    %598 = vmatprep.subr.mxu0 0.0
    %599 = vmatpush1.msra.mxu0 %v245
    %600 = vmatprep.subr.mxu0 0.0
    %601 = vmatpush1.msra.mxu0 %v244
    %602 = vmatprep.subr.mxu0 0.0
    %603 = vmatpush2.msra.mxu0 0.0
    %604 = vmatprep.subr.mxu0 0.0
    %605 = vmatpush2.msra.mxu0 0.0
    %606 = vmatprep.subr.mxu0 0.0
    %607 = vmatpush2.msra.mxu0 0.0
    %608 = vmatprep.subr.mxu0 0.0
    %609 = vmatpush2.msra.mxu0 0.0
    %610 = vmatprep.subr.mxu0 0.0
    %611 = vmatpush2.msra.mxu0 0.0
    %612 = vmatprep.subr.mxu0 0.0
    %613 = vmatpush2.msra.mxu0 0.0
    %614 = vmatprep.subr.mxu0 0.0
    %615 = vmatpush2.msra.mxu0 0.0
    %616 = vmatprep.subr.mxu0 0.0
    %617 = vmatpush2.msra.mxu0 0.0
    %618 = vmatprep.subr.mxu0 0.0
    %619 = vmatpush2.msra.mxu0 0.0
    %620 = vmatprep.subr.mxu0 0.0
    %621 = vmatpush2.msra.mxu0 0.0
    %622 = vmatprep.subr.mxu0 0.0
    %623 = vmatpush2.msra.mxu0 0.0
    %624 = vmatprep.subr.mxu0 0.0
    %625 = vmatpush2.msra.mxu0 0.0
    %626 = vmatprep.subr.mxu0 0.0
    %627 = vmatpush2.msra.mxu0 0.0
    %628 = vmatprep.subr.mxu0 0.0
    %629 = vmatpush2.msra.mxu0 0.0
    %630 = vmatprep.subr.mxu0 0.0
    %631 = vmatpush2.msra.mxu0 0.0
    %632 = vmatprep.subr.mxu0 0.0
    %633 = vmatpush2.msra.mxu0 0.0
    %634 = vmatprep.mubr.f32.mxu0 0.0
    %635 = vmatmul.mubr.f32.gmra.mxu0 %v568
    %v636 = vpop.f32.mrf.mxu0
    %v637 = vadd.f32 0.0, %v636
    %v638 = vpop.f32.mrf.mxu0
    %639 = vdwg.mxu0
    %v640 = vadd.f32 %v461, %v637
    %v641 = vxor.u32 %v640, 2147483648
    %v642 = vmul.f32 %v641, 1.442695
    %v643 = vpow.pop %v642
    %v644 = vadd.f32 %v643, 1.0
    %v645 = vrcp.pop %v644
    %v646 = vmul.f32 1.0, %v645
    %v647 = vtanh.pop %v640
    %v649 = vrot.slane %v440, 4
    %v651 = vmul.f32 %v646, %v649
    %653 = vrot.lane.b32.xlu0 %v647, 64
    %v654 = vpop.permute.xlu0 %653
    %v656 = vmul.f32 %v646, %v654
    %658 = vrot.lane.b32.xlu0 %v656, 32
    %v659 = vpop.permute.xlu0 %658
    %v661 = vadd.f32 %v651, %v659
    %v662 = vtanh.pop %v661
    %664 = vrot.lane.b32.xlu0 %v662, 64
    %v665 = vpop.permute.xlu0 %664
    %v667 = vmul.f32 %v646, %v665
    %669 = vrot.lane.b32.xlu0 %v564, 32
    %v670 = vpop.permute.xlu0 %669
    %s672 = scalar_lea.vmem [#allocation3], 4
    %673 = vst.msk [vmem:[%s672 - $0x4] sm:$0xf0] %vm458, %v670
    %675 = vrot.lane.b32.xlu0 %v667, 32
    %v676 = vpop.permute.xlu0 %675
    %s678 = scalar_lea.vmem [#allocation4], 56
    %679 = vst.msk [vmem:[%s678] sm:$0xf] %vm451, %v676
    %v680 = vld [vmem:[#allocation2 + $0x10] sm:$0xf]
    %v681 = vld [vmem:[#allocation2 + $0x68] sm:$0xf0]
    %v682 = vrot.slane %v564, 4
    %683 = vrot.lane.b32.xlu0 %v682, 32
    %v684 = vpop.permute.xlu0 %683
    %v685 = vsel %vm250, %v684, 0
    %687 = vmatprep.subr.mxu0 0.0
    %688 = vmatpush1.msra.mxu0 0.0
    %689 = vmatprep.subr.mxu0 0.0
    %690 = vmatpush1.msra.mxu0 0.0
    %691 = vmatprep.subr.mxu0 0.0
    %692 = vmatpush1.msra.mxu0 0.0
    %693 = vmatprep.subr.mxu0 0.0
    %694 = vmatpush1.msra.mxu0 0.0
    %695 = vmatprep.subr.mxu0 0.0
    %696 = vmatpush1.msra.mxu0 0.0
    %697 = vmatprep.subr.mxu0 0.0
    %698 = vmatpush1.msra.mxu0 0.0
    %699 = vmatprep.subr.mxu0 0.0
    %700 = vmatpush1.msra.mxu0 0.0
    %701 = vmatprep.subr.mxu0 0.0
    %702 = vmatpush1.msra.mxu0 0.0
    %703 = vmatprep.subr.mxu0 0.0
    %704 = vmatpush1.msra.mxu0 0.0
    %705 = vmatprep.subr.mxu0 0.0
    %706 = vmatpush1.msra.mxu0 0.0
    %707 = vmatprep.subr.mxu0 0.0
    %708 = vmatpush1.msra.mxu0 0.0
    %709 = vmatprep.subr.mxu0 0.0
    %710 = vmatpush1.msra.mxu0 0.0
    %711 = vmatprep.subr.mxu0 0.0
    %712 = vmatpush1.msra.mxu0 %v243
    %713 = vmatprep.subr.mxu0 0.0
    %714 = vmatpush1.msra.mxu0 %v242
    %715 = vmatprep.subr.mxu0 0.0
    %716 = vmatpush1.msra.mxu0 %v241
    %717 = vmatprep.subr.mxu0 0.0
    %718 = vmatpush1.msra.mxu0 %v240
    %719 = vmatprep.subr.mxu0 0.0
    %720 = vmatpush2.msra.mxu0 0.0
    %721 = vmatprep.subr.mxu0 0.0
    %722 = vmatpush2.msra.mxu0 0.0
    %723 = vmatprep.subr.mxu0 0.0
    %724 = vmatpush2.msra.mxu0 0.0
    %725 = vmatprep.subr.mxu0 0.0
    %726 = vmatpush2.msra.mxu0 0.0
    %727 = vmatprep.subr.mxu0 0.0
    %728 = vmatpush2.msra.mxu0 0.0
    %729 = vmatprep.subr.mxu0 0.0
    %730 = vmatpush2.msra.mxu0 0.0
    %731 = vmatprep.subr.mxu0 0.0
    %732 = vmatpush2.msra.mxu0 0.0
    %733 = vmatprep.subr.mxu0 0.0
    %734 = vmatpush2.msra.mxu0 0.0
    %735 = vmatprep.subr.mxu0 0.0
    %736 = vmatpush2.msra.mxu0 0.0
    %737 = vmatprep.subr.mxu0 0.0
    %738 = vmatpush2.msra.mxu0 0.0
    %739 = vmatprep.subr.mxu0 0.0
    %740 = vmatpush2.msra.mxu0 0.0
    %741 = vmatprep.subr.mxu0 0.0
    %742 = vmatpush2.msra.mxu0 0.0
    %743 = vmatprep.subr.mxu0 0.0
    %744 = vmatpush2.msra.mxu0 0.0
    %745 = vmatprep.subr.mxu0 0.0
    %746 = vmatpush2.msra.mxu0 0.0
    %747 = vmatprep.subr.mxu0 0.0
    %748 = vmatpush2.msra.mxu0 0.0
    %749 = vmatprep.subr.mxu0 0.0
    %750 = vmatpush2.msra.mxu0 0.0
    %751 = vmatprep.mubr.f32.mxu0 0.0
    %752 = vmatmul.mubr.f32.gmra.mxu0 %v685
    %v753 = vpop.f32.mrf.mxu0
    %v754 = vadd.f32 0.0, %v753
    %v755 = vpop.f32.mrf.mxu0
    %756 = vdwg.mxu0
    %v757 = vadd.f32 %v680, %v754
    %v758 = vxor.u32 %v757, 2147483648
    %v759 = vmul.f32 %v758, 1.442695
    %v760 = vpow.pop %v759
    %v761 = vadd.f32 %v760, 1.0
    %v762 = vrcp.pop %v761
    %v763 = vmul.f32 1.0, %v762
    %v764 = vtanh.pop %v757
    %v766 = vrot.slane %v558, 4
    %v768 = vmul.f32 %v763, %v766
    %770 = vrot.lane.b32.xlu0 %v764, 64
    %v771 = vpop.permute.xlu0 %770
    %v773 = vmul.f32 %v763, %v771
    %775 = vrot.lane.b32.xlu0 %v773, 32
    %v776 = vpop.permute.xlu0 %775
    %v778 = vadd.f32 %v768, %v776
    %v779 = vtanh.pop %v778
    %781 = vrot.lane.b32.xlu0 %v779, 64
    %v782 = vpop.permute.xlu0 %781
    %v784 = vmul.f32 %v763, %v782
    %v785 = vsel %vm250, %v676, 0
    %787 = vmatprep.subr.mxu0 0.0
    %788 = vmatpush1.msra.mxu0 0.0
    %789 = vmatprep.subr.mxu0 0.0
    %790 = vmatpush1.msra.mxu0 0.0
    %791 = vmatprep.subr.mxu0 0.0
    %792 = vmatpush1.msra.mxu0 0.0
    %793 = vmatprep.subr.mxu0 0.0
    %794 = vmatpush1.msra.mxu0 0.0
    %795 = vmatprep.subr.mxu0 0.0
    %796 = vmatpush1.msra.mxu0 0.0
    %797 = vmatprep.subr.mxu0 0.0
    %798 = vmatpush1.msra.mxu0 0.0
    %799 = vmatprep.subr.mxu0 0.0
    %800 = vmatpush1.msra.mxu0 0.0
    %801 = vmatprep.subr.mxu0 0.0
    %802 = vmatpush1.msra.mxu0 0.0
    %803 = vmatprep.subr.mxu0 0.0
    %804 = vmatpush1.msra.mxu0 0.0
    %805 = vmatprep.subr.mxu0 0.0
    %806 = vmatpush1.msra.mxu0 0.0
    %807 = vmatprep.subr.mxu0 0.0
    %808 = vmatpush1.msra.mxu0 0.0
    %809 = vmatprep.subr.mxu0 0.0
    %810 = vmatpush1.msra.mxu0 0.0
    %811 = vmatprep.subr.mxu0 0.0
    %812 = vmatpush1.msra.mxu0 %v247
    %813 = vmatprep.subr.mxu0 0.0
    %814 = vmatpush1.msra.mxu0 %v246
    %815 = vmatprep.subr.mxu0 0.0
    %816 = vmatpush1.msra.mxu0 %v245
    %817 = vmatprep.subr.mxu0 0.0
    %818 = vmatpush1.msra.mxu0 %v244
    %819 = vmatprep.subr.mxu0 0.0
    %820 = vmatpush2.msra.mxu0 0.0
    %821 = vmatprep.subr.mxu0 0.0
    %822 = vmatpush2.msra.mxu0 0.0
    %823 = vmatprep.subr.mxu0 0.0
    %824 = vmatpush2.msra.mxu0 0.0
    %825 = vmatprep.subr.mxu0 0.0
    %826 = vmatpush2.msra.mxu0 0.0
    %827 = vmatprep.subr.mxu0 0.0
    %828 = vmatpush2.msra.mxu0 0.0
    %829 = vmatprep.subr.mxu0 0.0
    %830 = vmatpush2.msra.mxu0 0.0
    %831 = vmatprep.subr.mxu0 0.0
    %832 = vmatpush2.msra.mxu0 0.0
    %833 = vmatprep.subr.mxu0 0.0
    %834 = vmatpush2.msra.mxu0 0.0
    %835 = vmatprep.subr.mxu0 0.0
    %836 = vmatpush2.msra.mxu0 0.0
    %837 = vmatprep.subr.mxu0 0.0
    %838 = vmatpush2.msra.mxu0 0.0
    %839 = vmatprep.subr.mxu0 0.0
    %840 = vmatpush2.msra.mxu0 0.0
    %841 = vmatprep.subr.mxu0 0.0
    %842 = vmatpush2.msra.mxu0 0.0
    %843 = vmatprep.subr.mxu0 0.0
    %844 = vmatpush2.msra.mxu0 0.0
    %845 = vmatprep.subr.mxu0 0.0
    %846 = vmatpush2.msra.mxu0 0.0
    %847 = vmatprep.subr.mxu0 0.0
    %848 = vmatpush2.msra.mxu0 0.0
    %849 = vmatprep.subr.mxu0 0.0
    %850 = vmatpush2.msra.mxu0 0.0
    %851 = vmatprep.mubr.f32.mxu0 0.0
    %852 = vmatmul.mubr.f32.gmra.mxu0 %v785
    %v853 = vpop.f32.mrf.mxu0
    %v854 = vadd.f32 0.0, %v853
    %v855 = vpop.f32.mrf.mxu0
    %856 = vdwg.mxu0
    %v858 = vrot.slane %v854, 4
    %v860 = vadd.f32 %v681, %v858
    %v861 = vxor.u32 %v860, 2147483648
    %v862 = vmul.f32 %v861, 1.442695
    %v863 = vpow.pop %v862
    %v864 = vadd.f32 %v863, 1.0
    %v865 = vrcp.pop %v864
    %v866 = vmul.f32 1.0, %v865
    %v867 = vtanh.pop %v860
    %v869 = vrot.slane %v661, 4
    %v871 = vmul.f32 %v866, %v869
    %873 = vrot.lane.b32.xlu0 %v867, 64
    %v874 = vpop.permute.xlu0 %873
    %v876 = vmul.f32 %v866, %v874
    %878 = vrot.lane.b32.xlu0 %v876, 32
    %v879 = vpop.permute.xlu0 %878
    %v881 = vadd.f32 %v871, %v879
    %v882 = vtanh.pop %v881
    %884 = vrot.lane.b32.xlu0 %v882, 64
    %v885 = vpop.permute.xlu0 %884
    %v887 = vmul.f32 %v866, %v885
    %889 = vrot.lane.b32.xlu0 %v784, 32
    %v890 = vpop.permute.xlu0 %889
    %s892 = scalar_lea.vmem [#allocation3], 8
    %893 = vst.msk [vmem:[%s892] sm:$0xf] %vm451, %v890
    %895 = vrot.lane.b32.xlu0 %v887, 32
    %v896 = vpop.permute.xlu0 %895
    %s898 = scalar_lea.vmem [#allocation4], 52
    %899 = vst.msk [vmem:[%s898 - $0x4] sm:$0xf0] %vm458, %v896
    %v900 = vld [vmem:[#allocation2 + $0x10] sm:$0xf0]
    %v901 = vld [vmem:[#allocation2 + $0x68] sm:$0xf]
    %v902 = vsel %vm250, %v890, 0
    %904 = vmatprep.subr.mxu0 0.0
    %905 = vmatpush1.msra.mxu0 0.0
    %906 = vmatprep.subr.mxu0 0.0
    %907 = vmatpush1.msra.mxu0 0.0
    %908 = vmatprep.subr.mxu0 0.0
    %909 = vmatpush1.msra.mxu0 0.0
    %910 = vmatprep.subr.mxu0 0.0
    %911 = vmatpush1.msra.mxu0 0.0
    %912 = vmatprep.subr.mxu0 0.0
    %913 = vmatpush1.msra.mxu0 0.0
    %914 = vmatprep.subr.mxu0 0.0
    %915 = vmatpush1.msra.mxu0 0.0
    %916 = vmatprep.subr.mxu0 0.0
    %917 = vmatpush1.msra.mxu0 0.0
    %918 = vmatprep.subr.mxu0 0.0
    %919 = vmatpush1.msra.mxu0 0.0
    %920 = vmatprep.subr.mxu0 0.0
    %921 = vmatpush1.msra.mxu0 0.0
    %922 = vmatprep.subr.mxu0 0.0
    %923 = vmatpush1.msra.mxu0 0.0
    %924 = vmatprep.subr.mxu0 0.0
    %925 = vmatpush1.msra.mxu0 0.0
    %926 = vmatprep.subr.mxu0 0.0
    %927 = vmatpush1.msra.mxu0 0.0
    %928 = vmatprep.subr.mxu0 0.0
    %929 = vmatpush1.msra.mxu0 %v243
    %930 = vmatprep.subr.mxu0 0.0
    %931 = vmatpush1.msra.mxu0 %v242
    %932 = vmatprep.subr.mxu0 0.0
    %933 = vmatpush1.msra.mxu0 %v241
    %934 = vmatprep.subr.mxu0 0.0
    %935 = vmatpush1.msra.mxu0 %v240
    %936 = vmatprep.subr.mxu0 0.0
    %937 = vmatpush2.msra.mxu0 0.0
    %938 = vmatprep.subr.mxu0 0.0
    %939 = vmatpush2.msra.mxu0 0.0
    %940 = vmatprep.subr.mxu0 0.0
    %941 = vmatpush2.msra.mxu0 0.0
    %942 = vmatprep.subr.mxu0 0.0
    %943 = vmatpush2.msra.mxu0 0.0
    %944 = vmatprep.subr.mxu0 0.0
    %945 = vmatpush2.msra.mxu0 0.0
    %946 = vmatprep.subr.mxu0 0.0
    %947 = vmatpush2.msra.mxu0 0.0
    %948 = vmatprep.subr.mxu0 0.0
    %949 = vmatpush2.msra.mxu0 0.0
    %950 = vmatprep.subr.mxu0 0.0
    %951 = vmatpush2.msra.mxu0 0.0
    %952 = vmatprep.subr.mxu0 0.0
    %953 = vmatpush2.msra.mxu0 0.0
    %954 = vmatprep.subr.mxu0 0.0
    %955 = vmatpush2.msra.mxu0 0.0
    %956 = vmatprep.subr.mxu0 0.0
    %957 = vmatpush2.msra.mxu0 0.0
    %958 = vmatprep.subr.mxu0 0.0
    %959 = vmatpush2.msra.mxu0 0.0
    %960 = vmatprep.subr.mxu0 0.0
    %961 = vmatpush2.msra.mxu0 0.0
    %962 = vmatprep.subr.mxu0 0.0
    %963 = vmatpush2.msra.mxu0 0.0
    %964 = vmatprep.subr.mxu0 0.0
    %965 = vmatpush2.msra.mxu0 0.0
    %966 = vmatprep.subr.mxu0 0.0
    %967 = vmatpush2.msra.mxu0 0.0
    %968 = vmatprep.mubr.f32.mxu0 0.0
    %969 = vmatmul.mubr.f32.gmra.mxu0 %v902
    %v970 = vpop.f32.mrf.mxu0
    %v971 = vadd.f32 0.0, %v970
    %v972 = vpop.f32.mrf.mxu0
    %973 = vdwg.mxu0
    %v975 = vrot.slane %v971, 4
    %v977 = vadd.f32 %v900, %v975
    %v978 = vxor.u32 %v977, 2147483648
    %v979 = vmul.f32 %v978, 1.442695
    %v980 = vpow.pop %v979
    %v981 = vadd.f32 %v980, 1.0
    %v982 = vrcp.pop %v981
    %v983 = vmul.f32 1.0, %v982
    %v984 = vtanh.pop %v977
    %v986 = vrot.slane %v778, 4
    %v988 = vmul.f32 %v983, %v986
    %990 = vrot.lane.b32.xlu0 %v984, 64
    %v991 = vpop.permute.xlu0 %990
    %v993 = vmul.f32 %v983, %v991
    %995 = vrot.lane.b32.xlu0 %v993, 32
    %v996 = vpop.permute.xlu0 %995
    %v998 = vadd.f32 %v988, %v996
    %v999 = vtanh.pop %v998
    %1001 = vrot.lane.b32.xlu0 %v999, 64
    %v1002 = vpop.permute.xlu0 %1001
    %v1004 = vmul.f32 %v983, %v1002
    %v1005 = vrot.slane %v887, 4
    %1006 = vrot.lane.b32.xlu0 %v1005, 32
    %v1007 = vpop.permute.xlu0 %1006
    %v1008 = vsel %vm250, %v1007, 0
    %1010 = vmatprep.subr.mxu0 0.0
    %1011 = vmatpush1.msra.mxu0 0.0
    %1012 = vmatprep.subr.mxu0 0.0
    %1013 = vmatpush1.msra.mxu0 0.0
    %1014 = vmatprep.subr.mxu0 0.0
    %1015 = vmatpush1.msra.mxu0 0.0
    %1016 = vmatprep.subr.mxu0 0.0
    %1017 = vmatpush1.msra.mxu0 0.0
    %1018 = vmatprep.subr.mxu0 0.0
    %1019 = vmatpush1.msra.mxu0 0.0
    %1020 = vmatprep.subr.mxu0 0.0
    %1021 = vmatpush1.msra.mxu0 0.0
    %1022 = vmatprep.subr.mxu0 0.0
    %1023 = vmatpush1.msra.mxu0 0.0
    %1024 = vmatprep.subr.mxu0 0.0
    %1025 = vmatpush1.msra.mxu0 0.0
    %1026 = vmatprep.subr.mxu0 0.0
    %1027 = vmatpush1.msra.mxu0 0.0
    %1028 = vmatprep.subr.mxu0 0.0
    %1029 = vmatpush1.msra.mxu0 0.0
    %1030 = vmatprep.subr.mxu0 0.0
    %1031 = vmatpush1.msra.mxu0 0.0
    %1032 = vmatprep.subr.mxu0 0.0
    %1033 = vmatpush1.msra.mxu0 0.0
    %1034 = vmatprep.subr.mxu0 0.0
    %1035 = vmatpush1.msra.mxu0 %v247
    %1036 = vmatprep.subr.mxu0 0.0
    %1037 = vmatpush1.msra.mxu0 %v246
    %1038 = vmatprep.subr.mxu0 0.0
    %1039 = vmatpush1.msra.mxu0 %v245
    %1040 = vmatprep.subr.mxu0 0.0
    %1041 = vmatpush1.msra.mxu0 %v244
    %1042 = vmatprep.subr.mxu0 0.0
    %1043 = vmatpush2.msra.mxu0 0.0
    %1044 = vmatprep.subr.mxu0 0.0
    %1045 = vmatpush2.msra.mxu0 0.0
    %1046 = vmatprep.subr.mxu0 0.0
    %1047 = vmatpush2.msra.mxu0 0.0
    %1048 = vmatprep.subr.mxu0 0.0
    %1049 = vmatpush2.msra.mxu0 0.0
    %1050 = vmatprep.subr.mxu0 0.0
    %1051 = vmatpush2.msra.mxu0 0.0
    %1052 = vmatprep.subr.mxu0 0.0
    %1053 = vmatpush2.msra.mxu0 0.0
    %1054 = vmatprep.subr.mxu0 0.0
    %1055 = vmatpush2.msra.mxu0 0.0
    %1056 = vmatprep.subr.mxu0 0.0
    %1057 = vmatpush2.msra.mxu0 0.0
    %1058 = vmatprep.subr.mxu0 0.0
    %1059 = vmatpush2.msra.mxu0 0.0
    %1060 = vmatprep.subr.mxu0 0.0
    %1061 = vmatpush2.msra.mxu0 0.0
    %1062 = vmatprep.subr.mxu0 0.0
    %1063 = vmatpush2.msra.mxu0 0.0
    %1064 = vmatprep.subr.mxu0 0.0
    %1065 = vmatpush2.msra.mxu0 0.0
    %1066 = vmatprep.subr.mxu0 0.0
    %1067 = vmatpush2.msra.mxu0 0.0
    %1068 = vmatprep.subr.mxu0 0.0
    %1069 = vmatpush2.msra.mxu0 0.0
    %1070 = vmatprep.subr.mxu0 0.0
    %1071 = vmatpush2.msra.mxu0 0.0
    %1072 = vmatprep.subr.mxu0 0.0
    %1073 = vmatpush2.msra.mxu0 0.0
    %1074 = vmatprep.mubr.f32.mxu0 0.0
    %1075 = vmatmul.mubr.f32.gmra.mxu0 %v1008
    %v1076 = vpop.f32.mrf.mxu0
    %v1077 = vadd.f32 0.0, %v1076
    %v1078 = vpop.f32.mrf.mxu0
    %1079 = vdwg.mxu0
    %v1080 = vadd.f32 %v901, %v1077
    %v1081 = vxor.u32 %v1080, 2147483648
    %v1082 = vmul.f32 %v1081, 1.442695
    %v1083 = vpow.pop %v1082
    %v1084 = vadd.f32 %v1083, 1.0
    %v1085 = vrcp.pop %v1084
    %v1086 = vmul.f32 1.0, %v1085
    %v1087 = vtanh.pop %v1080
    %v1089 = vrot.slane %v881, 4
    %v1091 = vmul.f32 %v1086, %v1089
    %1093 = vrot.lane.b32.xlu0 %v1087, 64
    %v1094 = vpop.permute.xlu0 %1093
    %v1096 = vmul.f32 %v1086, %v1094
    %1098 = vrot.lane.b32.xlu0 %v1096, 32
    %v1099 = vpop.permute.xlu0 %1098
    %v1101 = vadd.f32 %v1091, %v1099
    %v1102 = vtanh.pop %v1101
    %1104 = vrot.lane.b32.xlu0 %v1102, 64
    %v1105 = vpop.permute.xlu0 %1104
    %v1107 = vmul.f32 %v1086, %v1105
    %1109 = vrot.lane.b32.xlu0 %v1004, 32
    %v1110 = vpop.permute.xlu0 %1109
    %s1112 = scalar_lea.vmem [#allocation3], 12
    %1113 = vst.msk [vmem:[%s1112 - $0x4] sm:$0xf0] %vm458, %v1110
    %1115 = vrot.lane.b32.xlu0 %v1107, 32
    %v1116 = vpop.permute.xlu0 %1115
    %s1118 = scalar_lea.vmem [#allocation4], 48
    %1119 = vst.msk [vmem:[%s1118] sm:$0xf] %vm451, %v1116
    %v1120 = vld [vmem:[#allocation2 + $0x20] sm:$0xf]
    %v1121 = vld [vmem:[#allocation2 + $0x58] sm:$0xf0]
    %v1122 = vrot.slane %v1004, 4
    %1123 = vrot.lane.b32.xlu0 %v1122, 32
    %v1124 = vpop.permute.xlu0 %1123
    %v1125 = vsel %vm250, %v1124, 0
    %1127 = vmatprep.subr.mxu0 0.0
    %1128 = vmatpush1.msra.mxu0 0.0
    %1129 = vmatprep.subr.mxu0 0.0
    %1130 = vmatpush1.msra.mxu0 0.0
    %1131 = vmatprep.subr.mxu0 0.0
    %1132 = vmatpush1.msra.mxu0 0.0
    %1133 = vmatprep.subr.mxu0 0.0
    %1134 = vmatpush1.msra.mxu0 0.0
    %1135 = vmatprep.subr.mxu0 0.0
    %1136 = vmatpush1.msra.mxu0 0.0
    %1137 = vmatprep.subr.mxu0 0.0
    %1138 = vmatpush1.msra.mxu0 0.0
    %1139 = vmatprep.subr.mxu0 0.0
    %1140 = vmatpush1.msra.mxu0 0.0
    %1141 = vmatprep.subr.mxu0 0.0
    %1142 = vmatpush1.msra.mxu0 0.0
    %1143 = vmatprep.subr.mxu0 0.0
    %1144 = vmatpush1.msra.mxu0 0.0
    %1145 = vmatprep.subr.mxu0 0.0
    %1146 = vmatpush1.msra.mxu0 0.0
    %1147 = vmatprep.subr.mxu0 0.0
    %1148 = vmatpush1.msra.mxu0 0.0
    %1149 = vmatprep.subr.mxu0 0.0
    %1150 = vmatpush1.msra.mxu0 0.0
    %1151 = vmatprep.subr.mxu0 0.0
    %1152 = vmatpush1.msra.mxu0 %v243
    %1153 = vmatprep.subr.mxu0 0.0
    %1154 = vmatpush1.msra.mxu0 %v242
    %1155 = vmatprep.subr.mxu0 0.0
    %1156 = vmatpush1.msra.mxu0 %v241
    %1157 = vmatprep.subr.mxu0 0.0
    %1158 = vmatpush1.msra.mxu0 %v240
    %1159 = vmatprep.subr.mxu0 0.0
    %1160 = vmatpush2.msra.mxu0 0.0
    %1161 = vmatprep.subr.mxu0 0.0
    %1162 = vmatpush2.msra.mxu0 0.0
    %1163 = vmatprep.subr.mxu0 0.0
    %1164 = vmatpush2.msra.mxu0 0.0
    %1165 = vmatprep.subr.mxu0 0.0
    %1166 = vmatpush2.msra.mxu0 0.0
    %1167 = vmatprep.subr.mxu0 0.0
    %1168 = vmatpush2.msra.mxu0 0.0
    %1169 = vmatprep.subr.mxu0 0.0
    %1170 = vmatpush2.msra.mxu0 0.0
    %1171 = vmatprep.subr.mxu0 0.0
    %1172 = vmatpush2.msra.mxu0 0.0
    %1173 = vmatprep.subr.mxu0 0.0
    %1174 = vmatpush2.msra.mxu0 0.0
    %1175 = vmatprep.subr.mxu0 0.0
    %1176 = vmatpush2.msra.mxu0 0.0
    %1177 = vmatprep.subr.mxu0 0.0
    %1178 = vmatpush2.msra.mxu0 0.0
    %1179 = vmatprep.subr.mxu0 0.0
    %1180 = vmatpush2.msra.mxu0 0.0
    %1181 = vmatprep.subr.mxu0 0.0
    %1182 = vmatpush2.msra.mxu0 0.0
    %1183 = vmatprep.subr.mxu0 0.0
    %1184 = vmatpush2.msra.mxu0 0.0
    %1185 = vmatprep.subr.mxu0 0.0
    %1186 = vmatpush2.msra.mxu0 0.0
    %1187 = vmatprep.subr.mxu0 0.0
    %1188 = vmatpush2.msra.mxu0 0.0
    %1189 = vmatprep.subr.mxu0 0.0
    %1190 = vmatpush2.msra.mxu0 0.0
    %1191 = vmatprep.mubr.f32.mxu0 0.0
    %1192 = vmatmul.mubr.f32.gmra.mxu0 %v1125
    %v1193 = vpop.f32.mrf.mxu0
    %v1194 = vadd.f32 0.0, %v1193
    %v1195 = vpop.f32.mrf.mxu0
    %1196 = vdwg.mxu0
    %v1197 = vadd.f32 %v1120, %v1194
    %v1198 = vxor.u32 %v1197, 2147483648
    %v1199 = vmul.f32 %v1198, 1.442695
    %v1200 = vpow.pop %v1199
    %v1201 = vadd.f32 %v1200, 1.0
    %v1202 = vrcp.pop %v1201
    %v1203 = vmul.f32 1.0, %v1202
    %v1204 = vtanh.pop %v1197
    %v1206 = vrot.slane %v998, 4
    %v1208 = vmul.f32 %v1203, %v1206
    %1210 = vrot.lane.b32.xlu0 %v1204, 64
    %v1211 = vpop.permute.xlu0 %1210
    %v1213 = vmul.f32 %v1203, %v1211
    %1215 = vrot.lane.b32.xlu0 %v1213, 32
    %v1216 = vpop.permute.xlu0 %1215
    %v1218 = vadd.f32 %v1208, %v1216
    %v1219 = vtanh.pop %v1218
    %1221 = vrot.lane.b32.xlu0 %v1219, 64
    %v1222 = vpop.permute.xlu0 %1221
    %v1224 = vmul.f32 %v1203, %v1222
    %v1225 = vsel %vm250, %v1116, 0
    %1227 = vmatprep.subr.mxu0 0.0
    %1228 = vmatpush1.msra.mxu0 0.0
    %1229 = vmatprep.subr.mxu0 0.0
    %1230 = vmatpush1.msra.mxu0 0.0
    %1231 = vmatprep.subr.mxu0 0.0
    %1232 = vmatpush1.msra.mxu0 0.0
    %1233 = vmatprep.subr.mxu0 0.0
    %1234 = vmatpush1.msra.mxu0 0.0
    %1235 = vmatprep.subr.mxu0 0.0
    %1236 = vmatpush1.msra.mxu0 0.0
    %1237 = vmatprep.subr.mxu0 0.0
    %1238 = vmatpush1.msra.mxu0 0.0
    %1239 = vmatprep.subr.mxu0 0.0
    %1240 = vmatpush1.msra.mxu0 0.0
    %1241 = vmatprep.subr.mxu0 0.0
    %1242 = vmatpush1.msra.mxu0 0.0
    %1243 = vmatprep.subr.mxu0 0.0
    %1244 = vmatpush1.msra.mxu0 0.0
    %1245 = vmatprep.subr.mxu0 0.0
    %1246 = vmatpush1.msra.mxu0 0.0
    %1247 = vmatprep.subr.mxu0 0.0
    %1248 = vmatpush1.msra.mxu0 0.0
    %1249 = vmatprep.subr.mxu0 0.0
    %1250 = vmatpush1.msra.mxu0 0.0
    %1251 = vmatprep.subr.mxu0 0.0
    %1252 = vmatpush1.msra.mxu0 %v247
    %1253 = vmatprep.subr.mxu0 0.0
    %1254 = vmatpush1.msra.mxu0 %v246
    %1255 = vmatprep.subr.mxu0 0.0
    %1256 = vmatpush1.msra.mxu0 %v245
    %1257 = vmatprep.subr.mxu0 0.0
    %1258 = vmatpush1.msra.mxu0 %v244
    %1259 = vmatprep.subr.mxu0 0.0
    %1260 = vmatpush2.msra.mxu0 0.0
    %1261 = vmatprep.subr.mxu0 0.0
    %1262 = vmatpush2.msra.mxu0 0.0
    %1263 = vmatprep.subr.mxu0 0.0
    %1264 = vmatpush2.msra.mxu0 0.0
    %1265 = vmatprep.subr.mxu0 0.0
    %1266 = vmatpush2.msra.mxu0 0.0
    %1267 = vmatprep.subr.mxu0 0.0
    %1268 = vmatpush2.msra.mxu0 0.0
    %1269 = vmatprep.subr.mxu0 0.0
    %1270 = vmatpush2.msra.mxu0 0.0
    %1271 = vmatprep.subr.mxu0 0.0
    %1272 = vmatpush2.msra.mxu0 0.0
    %1273 = vmatprep.subr.mxu0 0.0
    %1274 = vmatpush2.msra.mxu0 0.0
    %1275 = vmatprep.subr.mxu0 0.0
    %1276 = vmatpush2.msra.mxu0 0.0
    %1277 = vmatprep.subr.mxu0 0.0
    %1278 = vmatpush2.msra.mxu0 0.0
    %1279 = vmatprep.subr.mxu0 0.0
    %1280 = vmatpush2.msra.mxu0 0.0
    %1281 = vmatprep.subr.mxu0 0.0
    %1282 = vmatpush2.msra.mxu0 0.0
    %1283 = vmatprep.subr.mxu0 0.0
    %1284 = vmatpush2.msra.mxu0 0.0
    %1285 = vmatprep.subr.mxu0 0.0
    %1286 = vmatpush2.msra.mxu0 0.0
    %1287 = vmatprep.subr.mxu0 0.0
    %1288 = vmatpush2.msra.mxu0 0.0
    %1289 = vmatprep.subr.mxu0 0.0
    %1290 = vmatpush2.msra.mxu0 0.0
    %1291 = vmatprep.mubr.f32.mxu0 0.0
    %1292 = vmatmul.mubr.f32.gmra.mxu0 %v1225
    %v1293 = vpop.f32.mrf.mxu0
    %v1294 = vadd.f32 0.0, %v1293
    %v1295 = vpop.f32.mrf.mxu0
    %1296 = vdwg.mxu0
    %v1298 = vrot.slane %v1294, 4
    %v1300 = vadd.f32 %v1121, %v1298
    %v1301 = vxor.u32 %v1300, 2147483648
    %v1302 = vmul.f32 %v1301, 1.442695
    %v1303 = vpow.pop %v1302
    %v1304 = vadd.f32 %v1303, 1.0
    %v1305 = vrcp.pop %v1304
    %v1306 = vmul.f32 1.0, %v1305
    %v1307 = vtanh.pop %v1300
    %v1309 = vrot.slane %v1101, 4
    %v1311 = vmul.f32 %v1306, %v1309
    %1313 = vrot.lane.b32.xlu0 %v1307, 64
    %v1314 = vpop.permute.xlu0 %1313
    %v1316 = vmul.f32 %v1306, %v1314
    %1318 = vrot.lane.b32.xlu0 %v1316, 32
    %v1319 = vpop.permute.xlu0 %1318
    %v1321 = vadd.f32 %v1311, %v1319
    %v1322 = vtanh.pop %v1321
    %1324 = vrot.lane.b32.xlu0 %v1322, 64
    %v1325 = vpop.permute.xlu0 %1324
    %v1327 = vmul.f32 %v1306, %v1325
    %1329 = vrot.lane.b32.xlu0 %v1224, 32
    %v1330 = vpop.permute.xlu0 %1329
    %s1332 = scalar_lea.vmem [#allocation3], 16
    %1333 = vst.msk [vmem:[%s1332] sm:$0xf] %vm451, %v1330
    %1335 = vrot.lane.b32.xlu0 %v1327, 32
    %v1336 = vpop.permute.xlu0 %1335
    %s1338 = scalar_lea.vmem [#allocation4], 44
    %1339 = vst.msk [vmem:[%s1338 - $0x4] sm:$0xf0] %vm458, %v1336
    %v1340 = vld [vmem:[#allocation2 + $0x20] sm:$0xf0]
    %v1341 = vld [vmem:[#allocation2 + $0x58] sm:$0xf]
    %v1342 = vsel %vm250, %v1330, 0
    %1344 = vmatprep.subr.mxu0 0.0
    %1345 = vmatpush1.msra.mxu0 0.0
    %1346 = vmatprep.subr.mxu0 0.0
    %1347 = vmatpush1.msra.mxu0 0.0
    %1348 = vmatprep.subr.mxu0 0.0
    %1349 = vmatpush1.msra.mxu0 0.0
    %1350 = vmatprep.subr.mxu0 0.0
    %1351 = vmatpush1.msra.mxu0 0.0
    %1352 = vmatprep.subr.mxu0 0.0
    %1353 = vmatpush1.msra.mxu0 0.0
    %1354 = vmatprep.subr.mxu0 0.0
    %1355 = vmatpush1.msra.mxu0 0.0
    %1356 = vmatprep.subr.mxu0 0.0
    %1357 = vmatpush1.msra.mxu0 0.0
    %1358 = vmatprep.subr.mxu0 0.0
    %1359 = vmatpush1.msra.mxu0 0.0
    %1360 = vmatprep.subr.mxu0 0.0
    %1361 = vmatpush1.msra.mxu0 0.0
    %1362 = vmatprep.subr.mxu0 0.0
    %1363 = vmatpush1.msra.mxu0 0.0
    %1364 = vmatprep.subr.mxu0 0.0
    %1365 = vmatpush1.msra.mxu0 0.0
    %1366 = vmatprep.subr.mxu0 0.0
    %1367 = vmatpush1.msra.mxu0 0.0
    %1368 = vmatprep.subr.mxu0 0.0
    %1369 = vmatpush1.msra.mxu0 %v243
    %1370 = vmatprep.subr.mxu0 0.0
    %1371 = vmatpush1.msra.mxu0 %v242
    %1372 = vmatprep.subr.mxu0 0.0
    %1373 = vmatpush1.msra.mxu0 %v241
    %1374 = vmatprep.subr.mxu0 0.0
    %1375 = vmatpush1.msra.mxu0 %v240
    %1376 = vmatprep.subr.mxu0 0.0
    %1377 = vmatpush2.msra.mxu0 0.0
    %1378 = vmatprep.subr.mxu0 0.0
    %1379 = vmatpush2.msra.mxu0 0.0
    %1380 = vmatprep.subr.mxu0 0.0
    %1381 = vmatpush2.msra.mxu0 0.0
    %1382 = vmatprep.subr.mxu0 0.0
    %1383 = vmatpush2.msra.mxu0 0.0
    %1384 = vmatprep.subr.mxu0 0.0
    %1385 = vmatpush2.msra.mxu0 0.0
    %1386 = vmatprep.subr.mxu0 0.0
    %1387 = vmatpush2.msra.mxu0 0.0
    %1388 = vmatprep.subr.mxu0 0.0
    %1389 = vmatpush2.msra.mxu0 0.0
    %1390 = vmatprep.subr.mxu0 0.0
    %1391 = vmatpush2.msra.mxu0 0.0
    %1392 = vmatprep.subr.mxu0 0.0
    %1393 = vmatpush2.msra.mxu0 0.0
    %1394 = vmatprep.subr.mxu0 0.0
    %1395 = vmatpush2.msra.mxu0 0.0
    %1396 = vmatprep.subr.mxu0 0.0
    %1397 = vmatpush2.msra.mxu0 0.0
    %1398 = vmatprep.subr.mxu0 0.0
    %1399 = vmatpush2.msra.mxu0 0.0
    %1400 = vmatprep.subr.mxu0 0.0
    %1401 = vmatpush2.msra.mxu0 0.0
    %1402 = vmatprep.subr.mxu0 0.0
    %1403 = vmatpush2.msra.mxu0 0.0
    %1404 = vmatprep.subr.mxu0 0.0
    %1405 = vmatpush2.msra.mxu0 0.0
    %1406 = vmatprep.subr.mxu0 0.0
    %1407 = vmatpush2.msra.mxu0 0.0
    %1408 = vmatprep.mubr.f32.mxu0 0.0
    %1409 = vmatmul.mubr.f32.gmra.mxu0 %v1342
    %v1410 = vpop.f32.mrf.mxu0
    %v1411 = vadd.f32 0.0, %v1410
    %v1412 = vpop.f32.mrf.mxu0
    %1413 = vdwg.mxu0
    %v1415 = vrot.slane %v1411, 4
    %v1417 = vadd.f32 %v1340, %v1415
    %v1418 = vxor.u32 %v1417, 2147483648
    %v1419 = vmul.f32 %v1418, 1.442695
    %v1420 = vpow.pop %v1419
    %v1421 = vadd.f32 %v1420, 1.0
    %v1422 = vrcp.pop %v1421
    %v1423 = vmul.f32 1.0, %v1422
    %v1424 = vtanh.pop %v1417
    %v1426 = vrot.slane %v1218, 4
    %v1428 = vmul.f32 %v1423, %v1426
    %1430 = vrot.lane.b32.xlu0 %v1424, 64
    %v1431 = vpop.permute.xlu0 %1430
    %v1433 = vmul.f32 %v1423, %v1431
    %1435 = vrot.lane.b32.xlu0 %v1433, 32
    %v1436 = vpop.permute.xlu0 %1435
    %v1438 = vadd.f32 %v1428, %v1436
    %v1439 = vtanh.pop %v1438
    %1441 = vrot.lane.b32.xlu0 %v1439, 64
    %v1442 = vpop.permute.xlu0 %1441
    %v1444 = vmul.f32 %v1423, %v1442
    %v1445 = vrot.slane %v1327, 4
    %1446 = vrot.lane.b32.xlu0 %v1445, 32
    %v1447 = vpop.permute.xlu0 %1446
    %v1448 = vsel %vm250, %v1447, 0
    %1450 = vmatprep.subr.mxu0 0.0
    %1451 = vmatpush1.msra.mxu0 0.0
    %1452 = vmatprep.subr.mxu0 0.0
    %1453 = vmatpush1.msra.mxu0 0.0
    %1454 = vmatprep.subr.mxu0 0.0
    %1455 = vmatpush1.msra.mxu0 0.0
    %1456 = vmatprep.subr.mxu0 0.0
    %1457 = vmatpush1.msra.mxu0 0.0
    %1458 = vmatprep.subr.mxu0 0.0
    %1459 = vmatpush1.msra.mxu0 0.0
    %1460 = vmatprep.subr.mxu0 0.0
    %1461 = vmatpush1.msra.mxu0 0.0
    %1462 = vmatprep.subr.mxu0 0.0
    %1463 = vmatpush1.msra.mxu0 0.0
    %1464 = vmatprep.subr.mxu0 0.0
    %1465 = vmatpush1.msra.mxu0 0.0
    %1466 = vmatprep.subr.mxu0 0.0
    %1467 = vmatpush1.msra.mxu0 0.0
    %1468 = vmatprep.subr.mxu0 0.0
    %1469 = vmatpush1.msra.mxu0 0.0
    %1470 = vmatprep.subr.mxu0 0.0
    %1471 = vmatpush1.msra.mxu0 0.0
    %1472 = vmatprep.subr.mxu0 0.0
    %1473 = vmatpush1.msra.mxu0 0.0
    %1474 = vmatprep.subr.mxu0 0.0
    %1475 = vmatpush1.msra.mxu0 %v247
    %1476 = vmatprep.subr.mxu0 0.0
    %1477 = vmatpush1.msra.mxu0 %v246
    %1478 = vmatprep.subr.mxu0 0.0
    %1479 = vmatpush1.msra.mxu0 %v245
    %1480 = vmatprep.subr.mxu0 0.0
    %1481 = vmatpush1.msra.mxu0 %v244
    %1482 = vmatprep.subr.mxu0 0.0
    %1483 = vmatpush2.msra.mxu0 0.0
    %1484 = vmatprep.subr.mxu0 0.0
    %1485 = vmatpush2.msra.mxu0 0.0
    %1486 = vmatprep.subr.mxu0 0.0
    %1487 = vmatpush2.msra.mxu0 0.0
    %1488 = vmatprep.subr.mxu0 0.0
    %1489 = vmatpush2.msra.mxu0 0.0
    %1490 = vmatprep.subr.mxu0 0.0
    %1491 = vmatpush2.msra.mxu0 0.0
    %1492 = vmatprep.subr.mxu0 0.0
    %1493 = vmatpush2.msra.mxu0 0.0
    %1494 = vmatprep.subr.mxu0 0.0
    %1495 = vmatpush2.msra.mxu0 0.0
    %1496 = vmatprep.subr.mxu0 0.0
    %1497 = vmatpush2.msra.mxu0 0.0
    %1498 = vmatprep.subr.mxu0 0.0
    %1499 = vmatpush2.msra.mxu0 0.0
    %1500 = vmatprep.subr.mxu0 0.0
    %1501 = vmatpush2.msra.mxu0 0.0
    %1502 = vmatprep.subr.mxu0 0.0
    %1503 = vmatpush2.msra.mxu0 0.0
    %1504 = vmatprep.subr.mxu0 0.0
    %1505 = vmatpush2.msra.mxu0 0.0
    %1506 = vmatprep.subr.mxu0 0.0
    %1507 = vmatpush2.msra.mxu0 0.0
    %1508 = vmatprep.subr.mxu0 0.0
    %1509 = vmatpush2.msra.mxu0 0.0
    %1510 = vmatprep.subr.mxu0 0.0
    %1511 = vmatpush2.msra.mxu0 0.0
    %1512 = vmatprep.subr.mxu0 0.0
    %1513 = vmatpush2.msra.mxu0 0.0
    %1514 = vmatprep.mubr.f32.mxu0 0.0
    %1515 = vmatmul.mubr.f32.gmra.mxu0 %v1448
    %v1516 = vpop.f32.mrf.mxu0
    %v1517 = vadd.f32 0.0, %v1516
    %v1518 = vpop.f32.mrf.mxu0
    %1519 = vdwg.mxu0
    %v1520 = vadd.f32 %v1341, %v1517
    %v1521 = vxor.u32 %v1520, 2147483648
    %v1522 = vmul.f32 %v1521, 1.442695
    %v1523 = vpow.pop %v1522
    %v1524 = vadd.f32 %v1523, 1.0
    %v1525 = vrcp.pop %v1524
    %v1526 = vmul.f32 1.0, %v1525
    %v1527 = vtanh.pop %v1520
    %v1529 = vrot.slane %v1321, 4
    %v1531 = vmul.f32 %v1526, %v1529
    %1533 = vrot.lane.b32.xlu0 %v1527, 64
    %v1534 = vpop.permute.xlu0 %1533
    %v1536 = vmul.f32 %v1526, %v1534
    %1538 = vrot.lane.b32.xlu0 %v1536, 32
    %v1539 = vpop.permute.xlu0 %1538
    %v1541 = vadd.f32 %v1531, %v1539
    %v1542 = vtanh.pop %v1541
    %1544 = vrot.lane.b32.xlu0 %v1542, 64
    %v1545 = vpop.permute.xlu0 %1544
    %v1547 = vmul.f32 %v1526, %v1545
    %1549 = vrot.lane.b32.xlu0 %v1444, 32
    %v1550 = vpop.permute.xlu0 %1549
    %s1552 = scalar_lea.vmem [#allocation3], 20
    %1553 = vst.msk [vmem:[%s1552 - $0x4] sm:$0xf0] %vm458, %v1550
    %1555 = vrot.lane.b32.xlu0 %v1547, 32
    %v1556 = vpop.permute.xlu0 %1555
    %s1558 = scalar_lea.vmem [#allocation4], 40
    %1559 = vst.msk [vmem:[%s1558] sm:$0xf] %vm451, %v1556
    %v1560 = vld [vmem:[#allocation2 + $0x30] sm:$0xf]
    %v1561 = vld [vmem:[#allocation2 + $0x48] sm:$0xf0]
    %v1562 = vrot.slane %v1444, 4
    %1563 = vrot.lane.b32.xlu0 %v1562, 32
    %v1564 = vpop.permute.xlu0 %1563
    %v1565 = vsel %vm250, %v1564, 0
    %1567 = vmatprep.subr.mxu0 0.0
    %1568 = vmatpush1.msra.mxu0 0.0
    %1569 = vmatprep.subr.mxu0 0.0
    %1570 = vmatpush1.msra.mxu0 0.0
    %1571 = vmatprep.subr.mxu0 0.0
    %1572 = vmatpush1.msra.mxu0 0.0
    %1573 = vmatprep.subr.mxu0 0.0
    %1574 = vmatpush1.msra.mxu0 0.0
    %1575 = vmatprep.subr.mxu0 0.0
    %1576 = vmatpush1.msra.mxu0 0.0
    %1577 = vmatprep.subr.mxu0 0.0
    %1578 = vmatpush1.msra.mxu0 0.0
    %1579 = vmatprep.subr.mxu0 0.0
    %1580 = vmatpush1.msra.mxu0 0.0
    %1581 = vmatprep.subr.mxu0 0.0
    %1582 = vmatpush1.msra.mxu0 0.0
    %1583 = vmatprep.subr.mxu0 0.0
    %1584 = vmatpush1.msra.mxu0 0.0
    %1585 = vmatprep.subr.mxu0 0.0
    %1586 = vmatpush1.msra.mxu0 0.0
    %1587 = vmatprep.subr.mxu0 0.0
    %1588 = vmatpush1.msra.mxu0 0.0
    %1589 = vmatprep.subr.mxu0 0.0
    %1590 = vmatpush1.msra.mxu0 0.0
    %1591 = vmatprep.subr.mxu0 0.0
    %1592 = vmatpush1.msra.mxu0 %v243
    %1593 = vmatprep.subr.mxu0 0.0
    %1594 = vmatpush1.msra.mxu0 %v242
    %1595 = vmatprep.subr.mxu0 0.0
    %1596 = vmatpush1.msra.mxu0 %v241
    %1597 = vmatprep.subr.mxu0 0.0
    %1598 = vmatpush1.msra.mxu0 %v240
    %1599 = vmatprep.subr.mxu0 0.0
    %1600 = vmatpush2.msra.mxu0 0.0
    %1601 = vmatprep.subr.mxu0 0.0
    %1602 = vmatpush2.msra.mxu0 0.0
    %1603 = vmatprep.subr.mxu0 0.0
    %1604 = vmatpush2.msra.mxu0 0.0
    %1605 = vmatprep.subr.mxu0 0.0
    %1606 = vmatpush2.msra.mxu0 0.0
    %1607 = vmatprep.subr.mxu0 0.0
    %1608 = vmatpush2.msra.mxu0 0.0
    %1609 = vmatprep.subr.mxu0 0.0
    %1610 = vmatpush2.msra.mxu0 0.0
    %1611 = vmatprep.subr.mxu0 0.0
    %1612 = vmatpush2.msra.mxu0 0.0
    %1613 = vmatprep.subr.mxu0 0.0
    %1614 = vmatpush2.msra.mxu0 0.0
    %1615 = vmatprep.subr.mxu0 0.0
    %1616 = vmatpush2.msra.mxu0 0.0
    %1617 = vmatprep.subr.mxu0 0.0
    %1618 = vmatpush2.msra.mxu0 0.0
    %1619 = vmatprep.subr.mxu0 0.0
    %1620 = vmatpush2.msra.mxu0 0.0
    %1621 = vmatprep.subr.mxu0 0.0
    %1622 = vmatpush2.msra.mxu0 0.0
    %1623 = vmatprep.subr.mxu0 0.0
    %1624 = vmatpush2.msra.mxu0 0.0
    %1625 = vmatprep.subr.mxu0 0.0
    %1626 = vmatpush2.msra.mxu0 0.0
    %1627 = vmatprep.subr.mxu0 0.0
    %1628 = vmatpush2.msra.mxu0 0.0
    %1629 = vmatprep.subr.mxu0 0.0
    %1630 = vmatpush2.msra.mxu0 0.0
    %1631 = vmatprep.mubr.f32.mxu0 0.0
    %1632 = vmatmul.mubr.f32.gmra.mxu0 %v1565
    %v1633 = vpop.f32.mrf.mxu0
    %v1634 = vadd.f32 0.0, %v1633
    %v1635 = vpop.f32.mrf.mxu0
    %1636 = vdwg.mxu0
    %v1637 = vadd.f32 %v1560, %v1634
    %v1638 = vxor.u32 %v1637, 2147483648
    %v1639 = vmul.f32 %v1638, 1.442695
    %v1640 = vpow.pop %v1639
    %v1641 = vadd.f32 %v1640, 1.0
    %v1642 = vrcp.pop %v1641
    %v1643 = vmul.f32 1.0, %v1642
    %v1644 = vtanh.pop %v1637
    %v1646 = vrot.slane %v1438, 4
    %v1648 = vmul.f32 %v1643, %v1646
    %1650 = vrot.lane.b32.xlu0 %v1644, 64
    %v1651 = vpop.permute.xlu0 %1650
    %v1653 = vmul.f32 %v1643, %v1651
    %1655 = vrot.lane.b32.xlu0 %v1653, 32
    %v1656 = vpop.permute.xlu0 %1655
    %v1658 = vadd.f32 %v1648, %v1656
    %v1659 = vtanh.pop %v1658
    %1661 = vrot.lane.b32.xlu0 %v1659, 64
    %v1662 = vpop.permute.xlu0 %1661
    %v1664 = vmul.f32 %v1643, %v1662
    %v1665 = vsel %vm250, %v1556, 0
    %1667 = vmatprep.subr.mxu0 0.0
    %1668 = vmatpush1.msra.mxu0 0.0
    %1669 = vmatprep.subr.mxu0 0.0
    %1670 = vmatpush1.msra.mxu0 0.0
    %1671 = vmatprep.subr.mxu0 0.0
    %1672 = vmatpush1.msra.mxu0 0.0
    %1673 = vmatprep.subr.mxu0 0.0
    %1674 = vmatpush1.msra.mxu0 0.0
    %1675 = vmatprep.subr.mxu0 0.0
    %1676 = vmatpush1.msra.mxu0 0.0
    %1677 = vmatprep.subr.mxu0 0.0
    %1678 = vmatpush1.msra.mxu0 0.0
    %1679 = vmatprep.subr.mxu0 0.0
    %1680 = vmatpush1.msra.mxu0 0.0
    %1681 = vmatprep.subr.mxu0 0.0
    %1682 = vmatpush1.msra.mxu0 0.0
    %1683 = vmatprep.subr.mxu0 0.0
    %1684 = vmatpush1.msra.mxu0 0.0
    %1685 = vmatprep.subr.mxu0 0.0
    %1686 = vmatpush1.msra.mxu0 0.0
    %1687 = vmatprep.subr.mxu0 0.0
    %1688 = vmatpush1.msra.mxu0 0.0
    %1689 = vmatprep.subr.mxu0 0.0
    %1690 = vmatpush1.msra.mxu0 0.0
    %1691 = vmatprep.subr.mxu0 0.0
    %1692 = vmatpush1.msra.mxu0 %v247
    %1693 = vmatprep.subr.mxu0 0.0
    %1694 = vmatpush1.msra.mxu0 %v246
    %1695 = vmatprep.subr.mxu0 0.0
    %1696 = vmatpush1.msra.mxu0 %v245
    %1697 = vmatprep.subr.mxu0 0.0
    %1698 = vmatpush1.msra.mxu0 %v244
    %1699 = vmatprep.subr.mxu0 0.0
    %1700 = vmatpush2.msra.mxu0 0.0
    %1701 = vmatprep.subr.mxu0 0.0
    %1702 = vmatpush2.msra.mxu0 0.0
    %1703 = vmatprep.subr.mxu0 0.0
    %1704 = vmatpush2.msra.mxu0 0.0
    %1705 = vmatprep.subr.mxu0 0.0
    %1706 = vmatpush2.msra.mxu0 0.0
    %1707 = vmatprep.subr.mxu0 0.0
    %1708 = vmatpush2.msra.mxu0 0.0
    %1709 = vmatprep.subr.mxu0 0.0
    %1710 = vmatpush2.msra.mxu0 0.0
    %1711 = vmatprep.subr.mxu0 0.0
    %1712 = vmatpush2.msra.mxu0 0.0
    %1713 = vmatprep.subr.mxu0 0.0
    %1714 = vmatpush2.msra.mxu0 0.0
    %1715 = vmatprep.subr.mxu0 0.0
    %1716 = vmatpush2.msra.mxu0 0.0
    %1717 = vmatprep.subr.mxu0 0.0
    %1718 = vmatpush2.msra.mxu0 0.0
    %1719 = vmatprep.subr.mxu0 0.0
    %1720 = vmatpush2.msra.mxu0 0.0
    %1721 = vmatprep.subr.mxu0 0.0
    %1722 = vmatpush2.msra.mxu0 0.0
    %1723 = vmatprep.subr.mxu0 0.0
    %1724 = vmatpush2.msra.mxu0 0.0
    %1725 = vmatprep.subr.mxu0 0.0
    %1726 = vmatpush2.msra.mxu0 0.0
    %1727 = vmatprep.subr.mxu0 0.0
    %1728 = vmatpush2.msra.mxu0 0.0
    %1729 = vmatprep.subr.mxu0 0.0
    %1730 = vmatpush2.msra.mxu0 0.0
    %1731 = vmatprep.mubr.f32.mxu0 0.0
    %1732 = vmatmul.mubr.f32.gmra.mxu0 %v1665
    %v1733 = vpop.f32.mrf.mxu0
    %v1734 = vadd.f32 0.0, %v1733
    %v1735 = vpop.f32.mrf.mxu0
    %1736 = vdwg.mxu0
    %v1738 = vrot.slane %v1734, 4
    %v1740 = vadd.f32 %v1561, %v1738
    %v1741 = vxor.u32 %v1740, 2147483648
    %v1742 = vmul.f32 %v1741, 1.442695
    %v1743 = vpow.pop %v1742
    %v1744 = vadd.f32 %v1743, 1.0
    %v1745 = vrcp.pop %v1744
    %v1746 = vmul.f32 1.0, %v1745
    %v1747 = vtanh.pop %v1740
    %v1749 = vrot.slane %v1541, 4
    %v1751 = vmul.f32 %v1746, %v1749
    %1753 = vrot.lane.b32.xlu0 %v1747, 64
    %v1754 = vpop.permute.xlu0 %1753
    %v1756 = vmul.f32 %v1746, %v1754
    %1758 = vrot.lane.b32.xlu0 %v1756, 32
    %v1759 = vpop.permute.xlu0 %1758
    %v1761 = vadd.f32 %v1751, %v1759
    %v1762 = vtanh.pop %v1761
    %1764 = vrot.lane.b32.xlu0 %v1762, 64
    %v1765 = vpop.permute.xlu0 %1764
    %v1767 = vmul.f32 %v1746, %v1765
    %1769 = vrot.lane.b32.xlu0 %v1664, 32
    %v1770 = vpop.permute.xlu0 %1769
    %s1772 = scalar_lea.vmem [#allocation3], 24
    %1773 = vst.msk [vmem:[%s1772] sm:$0xf] %vm451, %v1770
    %1775 = vrot.lane.b32.xlu0 %v1767, 32
    %v1776 = vpop.permute.xlu0 %1775
    %s1778 = scalar_lea.vmem [#allocation4], 36
    %1779 = vst.msk [vmem:[%s1778 - $0x4] sm:$0xf0] %vm458, %v1776
    %v1780 = vld [vmem:[#allocation2 + $0x30] sm:$0xf0]
    %v1781 = vld [vmem:[#allocation2 + $0x48] sm:$0xf]
    %v1782 = vsel %vm250, %v1770, 0
    %1784 = vmatprep.subr.mxu0 0.0
    %1785 = vmatpush1.msra.mxu0 0.0
    %1786 = vmatprep.subr.mxu0 0.0
    %1787 = vmatpush1.msra.mxu0 0.0
    %1788 = vmatprep.subr.mxu0 0.0
    %1789 = vmatpush1.msra.mxu0 0.0
    %1790 = vmatprep.subr.mxu0 0.0
    %1791 = vmatpush1.msra.mxu0 0.0
    %1792 = vmatprep.subr.mxu0 0.0
    %1793 = vmatpush1.msra.mxu0 0.0
    %1794 = vmatprep.subr.mxu0 0.0
    %1795 = vmatpush1.msra.mxu0 0.0
    %1796 = vmatprep.subr.mxu0 0.0
    %1797 = vmatpush1.msra.mxu0 0.0
    %1798 = vmatprep.subr.mxu0 0.0
    %1799 = vmatpush1.msra.mxu0 0.0
    %1800 = vmatprep.subr.mxu0 0.0
    %1801 = vmatpush1.msra.mxu0 0.0
    %1802 = vmatprep.subr.mxu0 0.0
    %1803 = vmatpush1.msra.mxu0 0.0
    %1804 = vmatprep.subr.mxu0 0.0
    %1805 = vmatpush1.msra.mxu0 0.0
    %1806 = vmatprep.subr.mxu0 0.0
    %1807 = vmatpush1.msra.mxu0 0.0
    %1808 = vmatprep.subr.mxu0 0.0
    %1809 = vmatpush1.msra.mxu0 %v243
    %1810 = vmatprep.subr.mxu0 0.0
    %1811 = vmatpush1.msra.mxu0 %v242
    %1812 = vmatprep.subr.mxu0 0.0
    %1813 = vmatpush1.msra.mxu0 %v241
    %1814 = vmatprep.subr.mxu0 0.0
    %1815 = vmatpush1.msra.mxu0 %v240
    %1816 = vmatprep.subr.mxu0 0.0
    %1817 = vmatpush2.msra.mxu0 0.0
    %1818 = vmatprep.subr.mxu0 0.0
    %1819 = vmatpush2.msra.mxu0 0.0
    %1820 = vmatprep.subr.mxu0 0.0
    %1821 = vmatpush2.msra.mxu0 0.0
    %1822 = vmatprep.subr.mxu0 0.0
    %1823 = vmatpush2.msra.mxu0 0.0
    %1824 = vmatprep.subr.mxu0 0.0
    %1825 = vmatpush2.msra.mxu0 0.0
    %1826 = vmatprep.subr.mxu0 0.0
    %1827 = vmatpush2.msra.mxu0 0.0
    %1828 = vmatprep.subr.mxu0 0.0
    %1829 = vmatpush2.msra.mxu0 0.0
    %1830 = vmatprep.subr.mxu0 0.0
    %1831 = vmatpush2.msra.mxu0 0.0
    %1832 = vmatprep.subr.mxu0 0.0
    %1833 = vmatpush2.msra.mxu0 0.0
    %1834 = vmatprep.subr.mxu0 0.0
    %1835 = vmatpush2.msra.mxu0 0.0
    %1836 = vmatprep.subr.mxu0 0.0
    %1837 = vmatpush2.msra.mxu0 0.0
    %1838 = vmatprep.subr.mxu0 0.0
    %1839 = vmatpush2.msra.mxu0 0.0
    %1840 = vmatprep.subr.mxu0 0.0
    %1841 = vmatpush2.msra.mxu0 0.0
    %1842 = vmatprep.subr.mxu0 0.0
    %1843 = vmatpush2.msra.mxu0 0.0
    %1844 = vmatprep.subr.mxu0 0.0
    %1845 = vmatpush2.msra.mxu0 0.0
    %1846 = vmatprep.subr.mxu0 0.0
    %1847 = vmatpush2.msra.mxu0 0.0
    %1848 = vmatprep.mubr.f32.mxu0 0.0
    %1849 = vmatmul.mubr.f32.gmra.mxu0 %v1782
    %v1850 = vpop.f32.mrf.mxu0
    %v1851 = vadd.f32 0.0, %v1850
    %v1852 = vpop.f32.mrf.mxu0
    %1853 = vdwg.mxu0
    %v1855 = vrot.slane %v1851, 4
    %v1857 = vadd.f32 %v1780, %v1855
    %v1858 = vxor.u32 %v1857, 2147483648
    %v1859 = vmul.f32 %v1858, 1.442695
    %v1860 = vpow.pop %v1859
    %v1861 = vadd.f32 %v1860, 1.0
    %v1862 = vrcp.pop %v1861
    %v1863 = vmul.f32 1.0, %v1862
    %v1864 = vtanh.pop %v1857
    %v1866 = vrot.slane %v1658, 4
    %v1868 = vmul.f32 %v1863, %v1866
    %1870 = vrot.lane.b32.xlu0 %v1864, 64
    %v1871 = vpop.permute.xlu0 %1870
    %v1873 = vmul.f32 %v1863, %v1871
    %1875 = vrot.lane.b32.xlu0 %v1873, 32
    %v1876 = vpop.permute.xlu0 %1875
    %v1878 = vadd.f32 %v1868, %v1876
    %v1879 = vtanh.pop %v1878
    %1881 = vrot.lane.b32.xlu0 %v1879, 64
    %v1882 = vpop.permute.xlu0 %1881
    %v1884 = vmul.f32 %v1863, %v1882
    %v1885 = vrot.slane %v1767, 4
    %1886 = vrot.lane.b32.xlu0 %v1885, 32
    %v1887 = vpop.permute.xlu0 %1886
    %v1888 = vsel %vm250, %v1887, 0
    %1890 = vmatprep.subr.mxu0 0.0
    %1891 = vmatpush1.msra.mxu0 0.0
    %1892 = vmatprep.subr.mxu0 0.0
    %1893 = vmatpush1.msra.mxu0 0.0
    %1894 = vmatprep.subr.mxu0 0.0
    %1895 = vmatpush1.msra.mxu0 0.0
    %1896 = vmatprep.subr.mxu0 0.0
    %1897 = vmatpush1.msra.mxu0 0.0
    %1898 = vmatprep.subr.mxu0 0.0
    %1899 = vmatpush1.msra.mxu0 0.0
    %1900 = vmatprep.subr.mxu0 0.0
    %1901 = vmatpush1.msra.mxu0 0.0
    %1902 = vmatprep.subr.mxu0 0.0
    %1903 = vmatpush1.msra.mxu0 0.0
    %1904 = vmatprep.subr.mxu0 0.0
    %1905 = vmatpush1.msra.mxu0 0.0
    %1906 = vmatprep.subr.mxu0 0.0
    %1907 = vmatpush1.msra.mxu0 0.0
    %1908 = vmatprep.subr.mxu0 0.0
    %1909 = vmatpush1.msra.mxu0 0.0
    %1910 = vmatprep.subr.mxu0 0.0
    %1911 = vmatpush1.msra.mxu0 0.0
    %1912 = vmatprep.subr.mxu0 0.0
    %1913 = vmatpush1.msra.mxu0 0.0
    %1914 = vmatprep.subr.mxu0 0.0
    %1915 = vmatpush1.msra.mxu0 %v247
    %1916 = vmatprep.subr.mxu0 0.0
    %1917 = vmatpush1.msra.mxu0 %v246
    %1918 = vmatprep.subr.mxu0 0.0
    %1919 = vmatpush1.msra.mxu0 %v245
    %1920 = vmatprep.subr.mxu0 0.0
    %1921 = vmatpush1.msra.mxu0 %v244
    %1922 = vmatprep.subr.mxu0 0.0
    %1923 = vmatpush2.msra.mxu0 0.0
    %1924 = vmatprep.subr.mxu0 0.0
    %1925 = vmatpush2.msra.mxu0 0.0
    %1926 = vmatprep.subr.mxu0 0.0
    %1927 = vmatpush2.msra.mxu0 0.0
    %1928 = vmatprep.subr.mxu0 0.0
    %1929 = vmatpush2.msra.mxu0 0.0
    %1930 = vmatprep.subr.mxu0 0.0
    %1931 = vmatpush2.msra.mxu0 0.0
    %1932 = vmatprep.subr.mxu0 0.0
    %1933 = vmatpush2.msra.mxu0 0.0
    %1934 = vmatprep.subr.mxu0 0.0
    %1935 = vmatpush2.msra.mxu0 0.0
    %1936 = vmatprep.subr.mxu0 0.0
    %1937 = vmatpush2.msra.mxu0 0.0
    %1938 = vmatprep.subr.mxu0 0.0
    %1939 = vmatpush2.msra.mxu0 0.0
    %1940 = vmatprep.subr.mxu0 0.0
    %1941 = vmatpush2.msra.mxu0 0.0
    %1942 = vmatprep.subr.mxu0 0.0
    %1943 = vmatpush2.msra.mxu0 0.0
    %1944 = vmatprep.subr.mxu0 0.0
    %1945 = vmatpush2.msra.mxu0 0.0
    %1946 = vmatprep.subr.mxu0 0.0
    %1947 = vmatpush2.msra.mxu0 0.0
    %1948 = vmatprep.subr.mxu0 0.0
    %1949 = vmatpush2.msra.mxu0 0.0
    %1950 = vmatprep.subr.mxu0 0.0
    %1951 = vmatpush2.msra.mxu0 0.0
    %1952 = vmatprep.subr.mxu0 0.0
    %1953 = vmatpush2.msra.mxu0 0.0
    %1954 = vmatprep.mubr.f32.mxu0 0.0
    %1955 = vmatmul.mubr.f32.gmra.mxu0 %v1888
    %v1956 = vpop.f32.mrf.mxu0
    %v1957 = vadd.f32 0.0, %v1956
    %v1958 = vpop.f32.mrf.mxu0
    %1959 = vdwg.mxu0
    %v1960 = vadd.f32 %v1781, %v1957
    %v1961 = vxor.u32 %v1960, 2147483648
    %v1962 = vmul.f32 %v1961, 1.442695
    %v1963 = vpow.pop %v1962
    %v1964 = vadd.f32 %v1963, 1.0
    %v1965 = vrcp.pop %v1964
    %v1966 = vmul.f32 1.0, %v1965
    %v1967 = vtanh.pop %v1960
    %v1969 = vrot.slane %v1761, 4
    %v1971 = vmul.f32 %v1966, %v1969
    %1973 = vrot.lane.b32.xlu0 %v1967, 64
    %v1974 = vpop.permute.xlu0 %1973
    %v1976 = vmul.f32 %v1966, %v1974
    %1978 = vrot.lane.b32.xlu0 %v1976, 32
    %v1979 = vpop.permute.xlu0 %1978
    %v1981 = vadd.f32 %v1971, %v1979
    %v1982 = vtanh.pop %v1981
    %1984 = vrot.lane.b32.xlu0 %v1982, 64
    %v1985 = vpop.permute.xlu0 %1984
    %v1987 = vmul.f32 %v1966, %v1985
    %1989 = vrot.lane.b32.xlu0 %v1884, 32
    %v1990 = vpop.permute.xlu0 %1989
    %s1992 = scalar_lea.vmem [#allocation3], 28
    %1993 = vst.msk [vmem:[%s1992 - $0x4] sm:$0xf0] %vm458, %v1990
    %1995 = vrot.lane.b32.xlu0 %v1987, 32
    %v1996 = vpop.permute.xlu0 %1995
    %s1998 = scalar_lea.vmem [#allocation4], 32
    %1999 = vst.msk [vmem:[%s1998] sm:$0xf] %vm451, %v1996
    %v2000 = vld [vmem:[#allocation2 + $0x40] sm:$0xf]
    %v2001 = vld [vmem:[#allocation2 + $0x38] sm:$0xf0]
    %v2002 = vrot.slane %v1884, 4
    %2003 = vrot.lane.b32.xlu0 %v2002, 32
    %v2004 = vpop.permute.xlu0 %2003
    %v2005 = vsel %vm250, %v2004, 0
    %2007 = vmatprep.subr.mxu0 0.0
    %2008 = vmatpush1.msra.mxu0 0.0
    %2009 = vmatprep.subr.mxu0 0.0
    %2010 = vmatpush1.msra.mxu0 0.0
    %2011 = vmatprep.subr.mxu0 0.0
    %2012 = vmatpush1.msra.mxu0 0.0
    %2013 = vmatprep.subr.mxu0 0.0
    %2014 = vmatpush1.msra.mxu0 0.0
    %2015 = vmatprep.subr.mxu0 0.0
    %2016 = vmatpush1.msra.mxu0 0.0
    %2017 = vmatprep.subr.mxu0 0.0
    %2018 = vmatpush1.msra.mxu0 0.0
    %2019 = vmatprep.subr.mxu0 0.0
    %2020 = vmatpush1.msra.mxu0 0.0
    %2021 = vmatprep.subr.mxu0 0.0
    %2022 = vmatpush1.msra.mxu0 0.0
    %2023 = vmatprep.subr.mxu0 0.0
    %2024 = vmatpush1.msra.mxu0 0.0
    %2025 = vmatprep.subr.mxu0 0.0
    %2026 = vmatpush1.msra.mxu0 0.0
    %2027 = vmatprep.subr.mxu0 0.0
    %2028 = vmatpush1.msra.mxu0 0.0
    %2029 = vmatprep.subr.mxu0 0.0
    %2030 = vmatpush1.msra.mxu0 0.0
    %2031 = vmatprep.subr.mxu0 0.0
    %2032 = vmatpush1.msra.mxu0 %v243
    %2033 = vmatprep.subr.mxu0 0.0
    %2034 = vmatpush1.msra.mxu0 %v242
    %2035 = vmatprep.subr.mxu0 0.0
    %2036 = vmatpush1.msra.mxu0 %v241
    %2037 = vmatprep.subr.mxu0 0.0
    %2038 = vmatpush1.msra.mxu0 %v240
    %2039 = vmatprep.subr.mxu0 0.0
    %2040 = vmatpush2.msra.mxu0 0.0
    %2041 = vmatprep.subr.mxu0 0.0
    %2042 = vmatpush2.msra.mxu0 0.0
    %2043 = vmatprep.subr.mxu0 0.0
    %2044 = vmatpush2.msra.mxu0 0.0
    %2045 = vmatprep.subr.mxu0 0.0
    %2046 = vmatpush2.msra.mxu0 0.0
    %2047 = vmatprep.subr.mxu0 0.0
    %2048 = vmatpush2.msra.mxu0 0.0
    %2049 = vmatprep.subr.mxu0 0.0
    %2050 = vmatpush2.msra.mxu0 0.0
    %2051 = vmatprep.subr.mxu0 0.0
    %2052 = vmatpush2.msra.mxu0 0.0
    %2053 = vmatprep.subr.mxu0 0.0
    %2054 = vmatpush2.msra.mxu0 0.0
    %2055 = vmatprep.subr.mxu0 0.0
    %2056 = vmatpush2.msra.mxu0 0.0
    %2057 = vmatprep.subr.mxu0 0.0
    %2058 = vmatpush2.msra.mxu0 0.0
    %2059 = vmatprep.subr.mxu0 0.0
    %2060 = vmatpush2.msra.mxu0 0.0
    %2061 = vmatprep.subr.mxu0 0.0
    %2062 = vmatpush2.msra.mxu0 0.0
    %2063 = vmatprep.subr.mxu0 0.0
    %2064 = vmatpush2.msra.mxu0 0.0
    %2065 = vmatprep.subr.mxu0 0.0
    %2066 = vmatpush2.msra.mxu0 0.0
    %2067 = vmatprep.subr.mxu0 0.0
    %2068 = vmatpush2.msra.mxu0 0.0
    %2069 = vmatprep.subr.mxu0 0.0
    %2070 = vmatpush2.msra.mxu0 0.0
    %2071 = vmatprep.mubr.f32.mxu0 0.0
    %2072 = vmatmul.mubr.f32.gmra.mxu0 %v2005
    %v2073 = vpop.f32.mrf.mxu0
    %v2074 = vadd.f32 0.0, %v2073
    %v2075 = vpop.f32.mrf.mxu0
    %2076 = vdwg.mxu0
    %v2077 = vadd.f32 %v2000, %v2074
    %v2078 = vxor.u32 %v2077, 2147483648
    %v2079 = vmul.f32 %v2078, 1.442695
    %v2080 = vpow.pop %v2079
    %v2081 = vadd.f32 %v2080, 1.0
    %v2082 = vrcp.pop %v2081
    %v2083 = vmul.f32 1.0, %v2082
    %v2084 = vtanh.pop %v2077
    %v2086 = vrot.slane %v1878, 4
    %v2088 = vmul.f32 %v2083, %v2086
    %2090 = vrot.lane.b32.xlu0 %v2084, 64
    %v2091 = vpop.permute.xlu0 %2090
    %v2093 = vmul.f32 %v2083, %v2091
    %2095 = vrot.lane.b32.xlu0 %v2093, 32
    %v2096 = vpop.permute.xlu0 %2095
    %v2098 = vadd.f32 %v2088, %v2096
    %v2099 = vtanh.pop %v2098
    %2101 = vrot.lane.b32.xlu0 %v2099, 64
    %v2102 = vpop.permute.xlu0 %2101
    %v2104 = vmul.f32 %v2083, %v2102
    %v2105 = vsel %vm250, %v1996, 0
    %2107 = vmatprep.subr.mxu0 0.0
    %2108 = vmatpush1.msra.mxu0 0.0
    %2109 = vmatprep.subr.mxu0 0.0
    %2110 = vmatpush1.msra.mxu0 0.0
    %2111 = vmatprep.subr.mxu0 0.0
    %2112 = vmatpush1.msra.mxu0 0.0
    %2113 = vmatprep.subr.mxu0 0.0
    %2114 = vmatpush1.msra.mxu0 0.0
    %2115 = vmatprep.subr.mxu0 0.0
    %2116 = vmatpush1.msra.mxu0 0.0
    %2117 = vmatprep.subr.mxu0 0.0
    %2118 = vmatpush1.msra.mxu0 0.0
    %2119 = vmatprep.subr.mxu0 0.0
    %2120 = vmatpush1.msra.mxu0 0.0
    %2121 = vmatprep.subr.mxu0 0.0
    %2122 = vmatpush1.msra.mxu0 0.0
    %2123 = vmatprep.subr.mxu0 0.0
    %2124 = vmatpush1.msra.mxu0 0.0
    %2125 = vmatprep.subr.mxu0 0.0
    %2126 = vmatpush1.msra.mxu0 0.0
    %2127 = vmatprep.subr.mxu0 0.0
    %2128 = vmatpush1.msra.mxu0 0.0
    %2129 = vmatprep.subr.mxu0 0.0
    %2130 = vmatpush1.msra.mxu0 0.0
    %2131 = vmatprep.subr.mxu0 0.0
    %2132 = vmatpush1.msra.mxu0 %v247
    %2133 = vmatprep.subr.mxu0 0.0
    %2134 = vmatpush1.msra.mxu0 %v246
    %2135 = vmatprep.subr.mxu0 0.0
    %2136 = vmatpush1.msra.mxu0 %v245
    %2137 = vmatprep.subr.mxu0 0.0
    %2138 = vmatpush1.msra.mxu0 %v244
    %2139 = vmatprep.subr.mxu0 0.0
    %2140 = vmatpush2.msra.mxu0 0.0
    %2141 = vmatprep.subr.mxu0 0.0
    %2142 = vmatpush2.msra.mxu0 0.0
    %2143 = vmatprep.subr.mxu0 0.0
    %2144 = vmatpush2.msra.mxu0 0.0
    %2145 = vmatprep.subr.mxu0 0.0
    %2146 = vmatpush2.msra.mxu0 0.0
    %2147 = vmatprep.subr.mxu0 0.0
    %2148 = vmatpush2.msra.mxu0 0.0
    %2149 = vmatprep.subr.mxu0 0.0
    %2150 = vmatpush2.msra.mxu0 0.0
    %2151 = vmatprep.subr.mxu0 0.0
    %2152 = vmatpush2.msra.mxu0 0.0
    %2153 = vmatprep.subr.mxu0 0.0
    %2154 = vmatpush2.msra.mxu0 0.0
    %2155 = vmatprep.subr.mxu0 0.0
    %2156 = vmatpush2.msra.mxu0 0.0
    %2157 = vmatprep.subr.mxu0 0.0
    %2158 = vmatpush2.msra.mxu0 0.0
    %2159 = vmatprep.subr.mxu0 0.0
    %2160 = vmatpush2.msra.mxu0 0.0
    %2161 = vmatprep.subr.mxu0 0.0
    %2162 = vmatpush2.msra.mxu0 0.0
    %2163 = vmatprep.subr.mxu0 0.0
    %2164 = vmatpush2.msra.mxu0 0.0
    %2165 = vmatprep.subr.mxu0 0.0
    %2166 = vmatpush2.msra.mxu0 0.0
    %2167 = vmatprep.subr.mxu0 0.0
    %2168 = vmatpush2.msra.mxu0 0.0
    %2169 = vmatprep.subr.mxu0 0.0
    %2170 = vmatpush2.msra.mxu0 0.0
    %2171 = vmatprep.mubr.f32.mxu0 0.0
    %2172 = vmatmul.mubr.f32.gmra.mxu0 %v2105
    %v2173 = vpop.f32.mrf.mxu0
    %v2174 = vadd.f32 0.0, %v2173
    %v2175 = vpop.f32.mrf.mxu0
    %2176 = vdwg.mxu0
    %v2178 = vrot.slane %v2174, 4
    %v2180 = vadd.f32 %v2001, %v2178
    %v2181 = vxor.u32 %v2180, 2147483648
    %v2182 = vmul.f32 %v2181, 1.442695
    %v2183 = vpow.pop %v2182
    %v2184 = vadd.f32 %v2183, 1.0
    %v2185 = vrcp.pop %v2184
    %v2186 = vmul.f32 1.0, %v2185
    %v2187 = vtanh.pop %v2180
    %v2189 = vrot.slane %v1981, 4
    %v2191 = vmul.f32 %v2186, %v2189
    %2193 = vrot.lane.b32.xlu0 %v2187, 64
    %v2194 = vpop.permute.xlu0 %2193
    %v2196 = vmul.f32 %v2186, %v2194
    %2198 = vrot.lane.b32.xlu0 %v2196, 32
    %v2199 = vpop.permute.xlu0 %2198
    %v2201 = vadd.f32 %v2191, %v2199
    %v2202 = vtanh.pop %v2201
    %2204 = vrot.lane.b32.xlu0 %v2202, 64
    %v2205 = vpop.permute.xlu0 %2204
    %v2207 = vmul.f32 %v2186, %v2205
    %2209 = vrot.lane.b32.xlu0 %v2104, 32
    %v2210 = vpop.permute.xlu0 %2209
    %s2212 = scalar_lea.vmem [#allocation3], 32
    %2213 = vst.msk [vmem:[%s2212] sm:$0xf] %vm451, %v2210
    %2215 = vrot.lane.b32.xlu0 %v2207, 32
    %v2216 = vpop.permute.xlu0 %2215
    %s2218 = scalar_lea.vmem [#allocation4], 28
    %2219 = vst.msk [vmem:[%s2218 - $0x4] sm:$0xf0] %vm458, %v2216
    %v2220 = vld [vmem:[#allocation2 + $0x40] sm:$0xf0]
    %v2221 = vld [vmem:[#allocation2 + $0x38] sm:$0xf]
    %v2222 = vsel %vm250, %v2210, 0
    %2224 = vmatprep.subr.mxu0 0.0
    %2225 = vmatpush1.msra.mxu0 0.0
    %2226 = vmatprep.subr.mxu0 0.0
    %2227 = vmatpush1.msra.mxu0 0.0
    %2228 = vmatprep.subr.mxu0 0.0
    %2229 = vmatpush1.msra.mxu0 0.0
    %2230 = vmatprep.subr.mxu0 0.0
    %2231 = vmatpush1.msra.mxu0 0.0
    %2232 = vmatprep.subr.mxu0 0.0
    %2233 = vmatpush1.msra.mxu0 0.0
    %2234 = vmatprep.subr.mxu0 0.0
    %2235 = vmatpush1.msra.mxu0 0.0
    %2236 = vmatprep.subr.mxu0 0.0
    %2237 = vmatpush1.msra.mxu0 0.0
    %2238 = vmatprep.subr.mxu0 0.0
    %2239 = vmatpush1.msra.mxu0 0.0
    %2240 = vmatprep.subr.mxu0 0.0
    %2241 = vmatpush1.msra.mxu0 0.0
    %2242 = vmatprep.subr.mxu0 0.0
    %2243 = vmatpush1.msra.mxu0 0.0
    %2244 = vmatprep.subr.mxu0 0.0
    %2245 = vmatpush1.msra.mxu0 0.0
    %2246 = vmatprep.subr.mxu0 0.0
    %2247 = vmatpush1.msra.mxu0 0.0
    %2248 = vmatprep.subr.mxu0 0.0
    %2249 = vmatpush1.msra.mxu0 %v243
    %2250 = vmatprep.subr.mxu0 0.0
    %2251 = vmatpush1.msra.mxu0 %v242
    %2252 = vmatprep.subr.mxu0 0.0
    %2253 = vmatpush1.msra.mxu0 %v241
    %2254 = vmatprep.subr.mxu0 0.0
    %2255 = vmatpush1.msra.mxu0 %v240
    %2256 = vmatprep.subr.mxu0 0.0
    %2257 = vmatpush2.msra.mxu0 0.0
    %2258 = vmatprep.subr.mxu0 0.0
    %2259 = vmatpush2.msra.mxu0 0.0
    %2260 = vmatprep.subr.mxu0 0.0
    %2261 = vmatpush2.msra.mxu0 0.0
    %2262 = vmatprep.subr.mxu0 0.0
    %2263 = vmatpush2.msra.mxu0 0.0
    %2264 = vmatprep.subr.mxu0 0.0
    %2265 = vmatpush2.msra.mxu0 0.0
    %2266 = vmatprep.subr.mxu0 0.0
    %2267 = vmatpush2.msra.mxu0 0.0
    %2268 = vmatprep.subr.mxu0 0.0
    %2269 = vmatpush2.msra.mxu0 0.0
    %2270 = vmatprep.subr.mxu0 0.0
    %2271 = vmatpush2.msra.mxu0 0.0
    %2272 = vmatprep.subr.mxu0 0.0
    %2273 = vmatpush2.msra.mxu0 0.0
    %2274 = vmatprep.subr.mxu0 0.0
    %2275 = vmatpush2.msra.mxu0 0.0
    %2276 = vmatprep.subr.mxu0 0.0
    %2277 = vmatpush2.msra.mxu0 0.0
    %2278 = vmatprep.subr.mxu0 0.0
    %2279 = vmatpush2.msra.mxu0 0.0
    %2280 = vmatprep.subr.mxu0 0.0
    %2281 = vmatpush2.msra.mxu0 0.0
    %2282 = vmatprep.subr.mxu0 0.0
    %2283 = vmatpush2.msra.mxu0 0.0
    %2284 = vmatprep.subr.mxu0 0.0
    %2285 = vmatpush2.msra.mxu0 0.0
    %2286 = vmatprep.subr.mxu0 0.0
    %2287 = vmatpush2.msra.mxu0 0.0
    %2288 = vmatprep.mubr.f32.mxu0 0.0
    %2289 = vmatmul.mubr.f32.gmra.mxu0 %v2222
    %v2290 = vpop.f32.mrf.mxu0
    %v2291 = vadd.f32 0.0, %v2290
    %v2292 = vpop.f32.mrf.mxu0
    %2293 = vdwg.mxu0
    %v2295 = vrot.slane %v2291, 4
    %v2297 = vadd.f32 %v2220, %v2295
    %v2298 = vxor.u32 %v2297, 2147483648
    %v2299 = vmul.f32 %v2298, 1.442695
    %v2300 = vpow.pop %v2299
    %v2301 = vadd.f32 %v2300, 1.0
    %v2302 = vrcp.pop %v2301
    %v2303 = vmul.f32 1.0, %v2302
    %v2304 = vtanh.pop %v2297
    %v2306 = vrot.slane %v2098, 4
    %v2308 = vmul.f32 %v2303, %v2306
    %2310 = vrot.lane.b32.xlu0 %v2304, 64
    %v2311 = vpop.permute.xlu0 %2310
    %v2313 = vmul.f32 %v2303, %v2311
    %2315 = vrot.lane.b32.xlu0 %v2313, 32
    %v2316 = vpop.permute.xlu0 %2315
    %v2318 = vadd.f32 %v2308, %v2316
    %v2319 = vtanh.pop %v2318
    %2321 = vrot.lane.b32.xlu0 %v2319, 64
    %v2322 = vpop.permute.xlu0 %2321
    %v2324 = vmul.f32 %v2303, %v2322
    %v2325 = vrot.slane %v2207, 4
    %2326 = vrot.lane.b32.xlu0 %v2325, 32
    %v2327 = vpop.permute.xlu0 %2326
    %v2328 = vsel %vm250, %v2327, 0
    %2330 = vmatprep.subr.mxu0 0.0
    %2331 = vmatpush1.msra.mxu0 0.0
    %2332 = vmatprep.subr.mxu0 0.0
    %2333 = vmatpush1.msra.mxu0 0.0
    %2334 = vmatprep.subr.mxu0 0.0
    %2335 = vmatpush1.msra.mxu0 0.0
    %2336 = vmatprep.subr.mxu0 0.0
    %2337 = vmatpush1.msra.mxu0 0.0
    %2338 = vmatprep.subr.mxu0 0.0
    %2339 = vmatpush1.msra.mxu0 0.0
    %2340 = vmatprep.subr.mxu0 0.0
    %2341 = vmatpush1.msra.mxu0 0.0
    %2342 = vmatprep.subr.mxu0 0.0
    %2343 = vmatpush1.msra.mxu0 0.0
    %2344 = vmatprep.subr.mxu0 0.0
    %2345 = vmatpush1.msra.mxu0 0.0
    %2346 = vmatprep.subr.mxu0 0.0
    %2347 = vmatpush1.msra.mxu0 0.0
    %2348 = vmatprep.subr.mxu0 0.0
    %2349 = vmatpush1.msra.mxu0 0.0
    %2350 = vmatprep.subr.mxu0 0.0
    %2351 = vmatpush1.msra.mxu0 0.0
    %2352 = vmatprep.subr.mxu0 0.0
    %2353 = vmatpush1.msra.mxu0 0.0
    %2354 = vmatprep.subr.mxu0 0.0
    %2355 = vmatpush1.msra.mxu0 %v247
    %2356 = vmatprep.subr.mxu0 0.0
    %2357 = vmatpush1.msra.mxu0 %v246
    %2358 = vmatprep.subr.mxu0 0.0
    %2359 = vmatpush1.msra.mxu0 %v245
    %2360 = vmatprep.subr.mxu0 0.0
    %2361 = vmatpush1.msra.mxu0 %v244
    %2362 = vmatprep.subr.mxu0 0.0
    %2363 = vmatpush2.msra.mxu0 0.0
    %2364 = vmatprep.subr.mxu0 0.0
    %2365 = vmatpush2.msra.mxu0 0.0
    %2366 = vmatprep.subr.mxu0 0.0
    %2367 = vmatpush2.msra.mxu0 0.0
    %2368 = vmatprep.subr.mxu0 0.0
    %2369 = vmatpush2.msra.mxu0 0.0
    %2370 = vmatprep.subr.mxu0 0.0
    %2371 = vmatpush2.msra.mxu0 0.0
    %2372 = vmatprep.subr.mxu0 0.0
    %2373 = vmatpush2.msra.mxu0 0.0
    %2374 = vmatprep.subr.mxu0 0.0
    %2375 = vmatpush2.msra.mxu0 0.0
    %2376 = vmatprep.subr.mxu0 0.0
    %2377 = vmatpush2.msra.mxu0 0.0
    %2378 = vmatprep.subr.mxu0 0.0
    %2379 = vmatpush2.msra.mxu0 0.0
    %2380 = vmatprep.subr.mxu0 0.0
    %2381 = vmatpush2.msra.mxu0 0.0
    %2382 = vmatprep.subr.mxu0 0.0
    %2383 = vmatpush2.msra.mxu0 0.0
    %2384 = vmatprep.subr.mxu0 0.0
    %2385 = vmatpush2.msra.mxu0 0.0
    %2386 = vmatprep.subr.mxu0 0.0
    %2387 = vmatpush2.msra.mxu0 0.0
    %2388 = vmatprep.subr.mxu0 0.0
    %2389 = vmatpush2.msra.mxu0 0.0
    %2390 = vmatprep.subr.mxu0 0.0
    %2391 = vmatpush2.msra.mxu0 0.0
    %2392 = vmatprep.subr.mxu0 0.0
    %2393 = vmatpush2.msra.mxu0 0.0
    %2394 = vmatprep.mubr.f32.mxu0 0.0
    %2395 = vmatmul.mubr.f32.gmra.mxu0 %v2328
    %v2396 = vpop.f32.mrf.mxu0
    %v2397 = vadd.f32 0.0, %v2396
    %v2398 = vpop.f32.mrf.mxu0
    %2399 = vdwg.mxu0
    %v2400 = vadd.f32 %v2221, %v2397
    %v2401 = vxor.u32 %v2400, 2147483648
    %v2402 = vmul.f32 %v2401, 1.442695
    %v2403 = vpow.pop %v2402
    %v2404 = vadd.f32 %v2403, 1.0
    %v2405 = vrcp.pop %v2404
    %v2406 = vmul.f32 1.0, %v2405
    %v2407 = vtanh.pop %v2400
    %v2409 = vrot.slane %v2201, 4
    %v2411 = vmul.f32 %v2406, %v2409
    %2413 = vrot.lane.b32.xlu0 %v2407, 64
    %v2414 = vpop.permute.xlu0 %2413
    %v2416 = vmul.f32 %v2406, %v2414
    %2418 = vrot.lane.b32.xlu0 %v2416, 32
    %v2419 = vpop.permute.xlu0 %2418
    %v2421 = vadd.f32 %v2411, %v2419
    %v2422 = vtanh.pop %v2421
    %2424 = vrot.lane.b32.xlu0 %v2422, 64
    %v2425 = vpop.permute.xlu0 %2424
    %v2427 = vmul.f32 %v2406, %v2425
    %2429 = vrot.lane.b32.xlu0 %v2324, 32
    %v2430 = vpop.permute.xlu0 %2429
    %s2432 = scalar_lea.vmem [#allocation3], 36
    %2433 = vst.msk [vmem:[%s2432 - $0x4] sm:$0xf0] %vm458, %v2430
    %2435 = vrot.lane.b32.xlu0 %v2427, 32
    %v2436 = vpop.permute.xlu0 %2435
    %s2438 = scalar_lea.vmem [#allocation4], 24
    %2439 = vst.msk [vmem:[%s2438] sm:$0xf] %vm451, %v2436
    %v2440 = vld [vmem:[#allocation2 + $0x50] sm:$0xf]
    %v2441 = vld [vmem:[#allocation2 + $0x28] sm:$0xf0]
    %v2442 = vrot.slane %v2324, 4
    %2443 = vrot.lane.b32.xlu0 %v2442, 32
    %v2444 = vpop.permute.xlu0 %2443
    %v2445 = vsel %vm250, %v2444, 0
    %2447 = vmatprep.subr.mxu0 0.0
    %2448 = vmatpush1.msra.mxu0 0.0
    %2449 = vmatprep.subr.mxu0 0.0
    %2450 = vmatpush1.msra.mxu0 0.0
    %2451 = vmatprep.subr.mxu0 0.0
    %2452 = vmatpush1.msra.mxu0 0.0
    %2453 = vmatprep.subr.mxu0 0.0
    %2454 = vmatpush1.msra.mxu0 0.0
    %2455 = vmatprep.subr.mxu0 0.0
    %2456 = vmatpush1.msra.mxu0 0.0
    %2457 = vmatprep.subr.mxu0 0.0
    %2458 = vmatpush1.msra.mxu0 0.0
    %2459 = vmatprep.subr.mxu0 0.0
    %2460 = vmatpush1.msra.mxu0 0.0
    %2461 = vmatprep.subr.mxu0 0.0
    %2462 = vmatpush1.msra.mxu0 0.0
    %2463 = vmatprep.subr.mxu0 0.0
    %2464 = vmatpush1.msra.mxu0 0.0
    %2465 = vmatprep.subr.mxu0 0.0
    %2466 = vmatpush1.msra.mxu0 0.0
    %2467 = vmatprep.subr.mxu0 0.0
    %2468 = vmatpush1.msra.mxu0 0.0
    %2469 = vmatprep.subr.mxu0 0.0
    %2470 = vmatpush1.msra.mxu0 0.0
    %2471 = vmatprep.subr.mxu0 0.0
    %2472 = vmatpush1.msra.mxu0 %v243
    %2473 = vmatprep.subr.mxu0 0.0
    %2474 = vmatpush1.msra.mxu0 %v242
    %2475 = vmatprep.subr.mxu0 0.0
    %2476 = vmatpush1.msra.mxu0 %v241
    %2477 = vmatprep.subr.mxu0 0.0
    %2478 = vmatpush1.msra.mxu0 %v240
    %2479 = vmatprep.subr.mxu0 0.0
    %2480 = vmatpush2.msra.mxu0 0.0
    %2481 = vmatprep.subr.mxu0 0.0
    %2482 = vmatpush2.msra.mxu0 0.0
    %2483 = vmatprep.subr.mxu0 0.0
    %2484 = vmatpush2.msra.mxu0 0.0
    %2485 = vmatprep.subr.mxu0 0.0
    %2486 = vmatpush2.msra.mxu0 0.0
    %2487 = vmatprep.subr.mxu0 0.0
    %2488 = vmatpush2.msra.mxu0 0.0
    %2489 = vmatprep.subr.mxu0 0.0
    %2490 = vmatpush2.msra.mxu0 0.0
    %2491 = vmatprep.subr.mxu0 0.0
    %2492 = vmatpush2.msra.mxu0 0.0
    %2493 = vmatprep.subr.mxu0 0.0
    %2494 = vmatpush2.msra.mxu0 0.0
    %2495 = vmatprep.subr.mxu0 0.0
    %2496 = vmatpush2.msra.mxu0 0.0
    %2497 = vmatprep.subr.mxu0 0.0
    %2498 = vmatpush2.msra.mxu0 0.0
    %2499 = vmatprep.subr.mxu0 0.0
    %2500 = vmatpush2.msra.mxu0 0.0
    %2501 = vmatprep.subr.mxu0 0.0
    %2502 = vmatpush2.msra.mxu0 0.0
    %2503 = vmatprep.subr.mxu0 0.0
    %2504 = vmatpush2.msra.mxu0 0.0
    %2505 = vmatprep.subr.mxu0 0.0
    %2506 = vmatpush2.msra.mxu0 0.0
    %2507 = vmatprep.subr.mxu0 0.0
    %2508 = vmatpush2.msra.mxu0 0.0
    %2509 = vmatprep.subr.mxu0 0.0
    %2510 = vmatpush2.msra.mxu0 0.0
    %2511 = vmatprep.mubr.f32.mxu0 0.0
    %2512 = vmatmul.mubr.f32.gmra.mxu0 %v2445
    %v2513 = vpop.f32.mrf.mxu0
    %v2514 = vadd.f32 0.0, %v2513
    %v2515 = vpop.f32.mrf.mxu0
    %2516 = vdwg.mxu0
    %v2517 = vadd.f32 %v2440, %v2514
    %v2518 = vxor.u32 %v2517, 2147483648
    %v2519 = vmul.f32 %v2518, 1.442695
    %v2520 = vpow.pop %v2519
    %v2521 = vadd.f32 %v2520, 1.0
    %v2522 = vrcp.pop %v2521
    %v2523 = vmul.f32 1.0, %v2522
    %v2524 = vtanh.pop %v2517
    %v2526 = vrot.slane %v2318, 4
    %v2528 = vmul.f32 %v2523, %v2526
    %2530 = vrot.lane.b32.xlu0 %v2524, 64
    %v2531 = vpop.permute.xlu0 %2530
    %v2533 = vmul.f32 %v2523, %v2531
    %2535 = vrot.lane.b32.xlu0 %v2533, 32
    %v2536 = vpop.permute.xlu0 %2535
    %v2538 = vadd.f32 %v2528, %v2536
    %v2539 = vtanh.pop %v2538
    %2541 = vrot.lane.b32.xlu0 %v2539, 64
    %v2542 = vpop.permute.xlu0 %2541
    %v2544 = vmul.f32 %v2523, %v2542
    %v2545 = vsel %vm250, %v2436, 0
    %2547 = vmatprep.subr.mxu0 0.0
    %2548 = vmatpush1.msra.mxu0 0.0
    %2549 = vmatprep.subr.mxu0 0.0
    %2550 = vmatpush1.msra.mxu0 0.0
    %2551 = vmatprep.subr.mxu0 0.0
    %2552 = vmatpush1.msra.mxu0 0.0
    %2553 = vmatprep.subr.mxu0 0.0
    %2554 = vmatpush1.msra.mxu0 0.0
    %2555 = vmatprep.subr.mxu0 0.0
    %2556 = vmatpush1.msra.mxu0 0.0
    %2557 = vmatprep.subr.mxu0 0.0
    %2558 = vmatpush1.msra.mxu0 0.0
    %2559 = vmatprep.subr.mxu0 0.0
    %2560 = vmatpush1.msra.mxu0 0.0
    %2561 = vmatprep.subr.mxu0 0.0
    %2562 = vmatpush1.msra.mxu0 0.0
    %2563 = vmatprep.subr.mxu0 0.0
    %2564 = vmatpush1.msra.mxu0 0.0
    %2565 = vmatprep.subr.mxu0 0.0
    %2566 = vmatpush1.msra.mxu0 0.0
    %2567 = vmatprep.subr.mxu0 0.0
    %2568 = vmatpush1.msra.mxu0 0.0
    %2569 = vmatprep.subr.mxu0 0.0
    %2570 = vmatpush1.msra.mxu0 0.0
    %2571 = vmatprep.subr.mxu0 0.0
    %2572 = vmatpush1.msra.mxu0 %v247
    %2573 = vmatprep.subr.mxu0 0.0
    %2574 = vmatpush1.msra.mxu0 %v246
    %2575 = vmatprep.subr.mxu0 0.0
    %2576 = vmatpush1.msra.mxu0 %v245
    %2577 = vmatprep.subr.mxu0 0.0
    %2578 = vmatpush1.msra.mxu0 %v244
    %2579 = vmatprep.subr.mxu0 0.0
    %2580 = vmatpush2.msra.mxu0 0.0
    %2581 = vmatprep.subr.mxu0 0.0
    %2582 = vmatpush2.msra.mxu0 0.0
    %2583 = vmatprep.subr.mxu0 0.0
    %2584 = vmatpush2.msra.mxu0 0.0
    %2585 = vmatprep.subr.mxu0 0.0
    %2586 = vmatpush2.msra.mxu0 0.0
    %2587 = vmatprep.subr.mxu0 0.0
    %2588 = vmatpush2.msra.mxu0 0.0
    %2589 = vmatprep.subr.mxu0 0.0
    %2590 = vmatpush2.msra.mxu0 0.0
    %2591 = vmatprep.subr.mxu0 0.0
    %2592 = vmatpush2.msra.mxu0 0.0
    %2593 = vmatprep.subr.mxu0 0.0
    %2594 = vmatpush2.msra.mxu0 0.0
    %2595 = vmatprep.subr.mxu0 0.0
    %2596 = vmatpush2.msra.mxu0 0.0
    %2597 = vmatprep.subr.mxu0 0.0
    %2598 = vmatpush2.msra.mxu0 0.0
    %2599 = vmatprep.subr.mxu0 0.0
    %2600 = vmatpush2.msra.mxu0 0.0
    %2601 = vmatprep.subr.mxu0 0.0
    %2602 = vmatpush2.msra.mxu0 0.0
    %2603 = vmatprep.subr.mxu0 0.0
    %2604 = vmatpush2.msra.mxu0 0.0
    %2605 = vmatprep.subr.mxu0 0.0
    %2606 = vmatpush2.msra.mxu0 0.0
    %2607 = vmatprep.subr.mxu0 0.0
    %2608 = vmatpush2.msra.mxu0 0.0
    %2609 = vmatprep.subr.mxu0 0.0
    %2610 = vmatpush2.msra.mxu0 0.0
    %2611 = vmatprep.mubr.f32.mxu0 0.0
    %2612 = vmatmul.mubr.f32.gmra.mxu0 %v2545
    %v2613 = vpop.f32.mrf.mxu0
    %v2614 = vadd.f32 0.0, %v2613
    %v2615 = vpop.f32.mrf.mxu0
    %2616 = vdwg.mxu0
    %v2618 = vrot.slane %v2614, 4
    %v2620 = vadd.f32 %v2441, %v2618
    %v2621 = vxor.u32 %v2620, 2147483648
    %v2622 = vmul.f32 %v2621, 1.442695
    %v2623 = vpow.pop %v2622
    %v2624 = vadd.f32 %v2623, 1.0
    %v2625 = vrcp.pop %v2624
    %v2626 = vmul.f32 1.0, %v2625
    %v2627 = vtanh.pop %v2620
    %v2629 = vrot.slane %v2421, 4
    %v2631 = vmul.f32 %v2626, %v2629
    %2633 = vrot.lane.b32.xlu0 %v2627, 64
    %v2634 = vpop.permute.xlu0 %2633
    %v2636 = vmul.f32 %v2626, %v2634
    %2638 = vrot.lane.b32.xlu0 %v2636, 32
    %v2639 = vpop.permute.xlu0 %2638
    %v2641 = vadd.f32 %v2631, %v2639
    %v2642 = vtanh.pop %v2641
    %2644 = vrot.lane.b32.xlu0 %v2642, 64
    %v2645 = vpop.permute.xlu0 %2644
    %v2647 = vmul.f32 %v2626, %v2645
    %2649 = vrot.lane.b32.xlu0 %v2544, 32
    %v2650 = vpop.permute.xlu0 %2649
    %s2652 = scalar_lea.vmem [#allocation3], 40
    %2653 = vst.msk [vmem:[%s2652] sm:$0xf] %vm451, %v2650
    %2655 = vrot.lane.b32.xlu0 %v2647, 32
    %v2656 = vpop.permute.xlu0 %2655
    %s2658 = scalar_lea.vmem [#allocation4], 20
    %2659 = vst.msk [vmem:[%s2658 - $0x4] sm:$0xf0] %vm458, %v2656
    %v2660 = vld [vmem:[#allocation2 + $0x50] sm:$0xf0]
    %v2661 = vld [vmem:[#allocation2 + $0x28] sm:$0xf]
    %v2662 = vsel %vm250, %v2650, 0
    %2664 = vmatprep.subr.mxu0 0.0
    %2665 = vmatpush1.msra.mxu0 0.0
    %2666 = vmatprep.subr.mxu0 0.0
    %2667 = vmatpush1.msra.mxu0 0.0
    %2668 = vmatprep.subr.mxu0 0.0
    %2669 = vmatpush1.msra.mxu0 0.0
    %2670 = vmatprep.subr.mxu0 0.0
    %2671 = vmatpush1.msra.mxu0 0.0
    %2672 = vmatprep.subr.mxu0 0.0
    %2673 = vmatpush1.msra.mxu0 0.0
    %2674 = vmatprep.subr.mxu0 0.0
    %2675 = vmatpush1.msra.mxu0 0.0
    %2676 = vmatprep.subr.mxu0 0.0
    %2677 = vmatpush1.msra.mxu0 0.0
    %2678 = vmatprep.subr.mxu0 0.0
    %2679 = vmatpush1.msra.mxu0 0.0
    %2680 = vmatprep.subr.mxu0 0.0
    %2681 = vmatpush1.msra.mxu0 0.0
    %2682 = vmatprep.subr.mxu0 0.0
    %2683 = vmatpush1.msra.mxu0 0.0
    %2684 = vmatprep.subr.mxu0 0.0
    %2685 = vmatpush1.msra.mxu0 0.0
    %2686 = vmatprep.subr.mxu0 0.0
    %2687 = vmatpush1.msra.mxu0 0.0
    %2688 = vmatprep.subr.mxu0 0.0
    %2689 = vmatpush1.msra.mxu0 %v243
    %2690 = vmatprep.subr.mxu0 0.0
    %2691 = vmatpush1.msra.mxu0 %v242
    %2692 = vmatprep.subr.mxu0 0.0
    %2693 = vmatpush1.msra.mxu0 %v241
    %2694 = vmatprep.subr.mxu0 0.0
    %2695 = vmatpush1.msra.mxu0 %v240
    %2696 = vmatprep.subr.mxu0 0.0
    %2697 = vmatpush2.msra.mxu0 0.0
    %2698 = vmatprep.subr.mxu0 0.0
    %2699 = vmatpush2.msra.mxu0 0.0
    %2700 = vmatprep.subr.mxu0 0.0
    %2701 = vmatpush2.msra.mxu0 0.0
    %2702 = vmatprep.subr.mxu0 0.0
    %2703 = vmatpush2.msra.mxu0 0.0
    %2704 = vmatprep.subr.mxu0 0.0
    %2705 = vmatpush2.msra.mxu0 0.0
    %2706 = vmatprep.subr.mxu0 0.0
    %2707 = vmatpush2.msra.mxu0 0.0
    %2708 = vmatprep.subr.mxu0 0.0
    %2709 = vmatpush2.msra.mxu0 0.0
    %2710 = vmatprep.subr.mxu0 0.0
    %2711 = vmatpush2.msra.mxu0 0.0
    %2712 = vmatprep.subr.mxu0 0.0
    %2713 = vmatpush2.msra.mxu0 0.0
    %2714 = vmatprep.subr.mxu0 0.0
    %2715 = vmatpush2.msra.mxu0 0.0
    %2716 = vmatprep.subr.mxu0 0.0
    %2717 = vmatpush2.msra.mxu0 0.0
    %2718 = vmatprep.subr.mxu0 0.0
    %2719 = vmatpush2.msra.mxu0 0.0
    %2720 = vmatprep.subr.mxu0 0.0
    %2721 = vmatpush2.msra.mxu0 0.0
    %2722 = vmatprep.subr.mxu0 0.0
    %2723 = vmatpush2.msra.mxu0 0.0
    %2724 = vmatprep.subr.mxu0 0.0
    %2725 = vmatpush2.msra.mxu0 0.0
    %2726 = vmatprep.subr.mxu0 0.0
    %2727 = vmatpush2.msra.mxu0 0.0
    %2728 = vmatprep.mubr.f32.mxu0 0.0
    %2729 = vmatmul.mubr.f32.gmra.mxu0 %v2662
    %v2730 = vpop.f32.mrf.mxu0
    %v2731 = vadd.f32 0.0, %v2730
    %v2732 = vpop.f32.mrf.mxu0
    %2733 = vdwg.mxu0
    %v2735 = vrot.slane %v2731, 4
    %v2737 = vadd.f32 %v2660, %v2735
    %v2738 = vxor.u32 %v2737, 2147483648
    %v2739 = vmul.f32 %v2738, 1.442695
    %v2740 = vpow.pop %v2739
    %v2741 = vadd.f32 %v2740, 1.0
    %v2742 = vrcp.pop %v2741
    %v2743 = vmul.f32 1.0, %v2742
    %v2744 = vtanh.pop %v2737
    %v2746 = vrot.slane %v2538, 4
    %v2748 = vmul.f32 %v2743, %v2746
    %2750 = vrot.lane.b32.xlu0 %v2744, 64
    %v2751 = vpop.permute.xlu0 %2750
    %v2753 = vmul.f32 %v2743, %v2751
    %2755 = vrot.lane.b32.xlu0 %v2753, 32
    %v2756 = vpop.permute.xlu0 %2755
    %v2758 = vadd.f32 %v2748, %v2756
    %v2759 = vtanh.pop %v2758
    %2761 = vrot.lane.b32.xlu0 %v2759, 64
    %v2762 = vpop.permute.xlu0 %2761
    %v2764 = vmul.f32 %v2743, %v2762
    %v2765 = vrot.slane %v2647, 4
    %2766 = vrot.lane.b32.xlu0 %v2765, 32
    %v2767 = vpop.permute.xlu0 %2766
    %v2768 = vsel %vm250, %v2767, 0
    %2770 = vmatprep.subr.mxu0 0.0
    %2771 = vmatpush1.msra.mxu0 0.0
    %2772 = vmatprep.subr.mxu0 0.0
    %2773 = vmatpush1.msra.mxu0 0.0
    %2774 = vmatprep.subr.mxu0 0.0
    %2775 = vmatpush1.msra.mxu0 0.0
    %2776 = vmatprep.subr.mxu0 0.0
    %2777 = vmatpush1.msra.mxu0 0.0
    %2778 = vmatprep.subr.mxu0 0.0
    %2779 = vmatpush1.msra.mxu0 0.0
    %2780 = vmatprep.subr.mxu0 0.0
    %2781 = vmatpush1.msra.mxu0 0.0
    %2782 = vmatprep.subr.mxu0 0.0
    %2783 = vmatpush1.msra.mxu0 0.0
    %2784 = vmatprep.subr.mxu0 0.0
    %2785 = vmatpush1.msra.mxu0 0.0
    %2786 = vmatprep.subr.mxu0 0.0
    %2787 = vmatpush1.msra.mxu0 0.0
    %2788 = vmatprep.subr.mxu0 0.0
    %2789 = vmatpush1.msra.mxu0 0.0
    %2790 = vmatprep.subr.mxu0 0.0
    %2791 = vmatpush1.msra.mxu0 0.0
    %2792 = vmatprep.subr.mxu0 0.0
    %2793 = vmatpush1.msra.mxu0 0.0
    %2794 = vmatprep.subr.mxu0 0.0
    %2795 = vmatpush1.msra.mxu0 %v247
    %2796 = vmatprep.subr.mxu0 0.0
    %2797 = vmatpush1.msra.mxu0 %v246
    %2798 = vmatprep.subr.mxu0 0.0
    %2799 = vmatpush1.msra.mxu0 %v245
    %2800 = vmatprep.subr.mxu0 0.0
    %2801 = vmatpush1.msra.mxu0 %v244
    %2802 = vmatprep.subr.mxu0 0.0
    %2803 = vmatpush2.msra.mxu0 0.0
    %2804 = vmatprep.subr.mxu0 0.0
    %2805 = vmatpush2.msra.mxu0 0.0
    %2806 = vmatprep.subr.mxu0 0.0
    %2807 = vmatpush2.msra.mxu0 0.0
    %2808 = vmatprep.subr.mxu0 0.0
    %2809 = vmatpush2.msra.mxu0 0.0
    %2810 = vmatprep.subr.mxu0 0.0
    %2811 = vmatpush2.msra.mxu0 0.0
    %2812 = vmatprep.subr.mxu0 0.0
    %2813 = vmatpush2.msra.mxu0 0.0
    %2814 = vmatprep.subr.mxu0 0.0
    %2815 = vmatpush2.msra.mxu0 0.0
    %2816 = vmatprep.subr.mxu0 0.0
    %2817 = vmatpush2.msra.mxu0 0.0
    %2818 = vmatprep.subr.mxu0 0.0
    %2819 = vmatpush2.msra.mxu0 0.0
    %2820 = vmatprep.subr.mxu0 0.0
    %2821 = vmatpush2.msra.mxu0 0.0
    %2822 = vmatprep.subr.mxu0 0.0
    %2823 = vmatpush2.msra.mxu0 0.0
    %2824 = vmatprep.subr.mxu0 0.0
    %2825 = vmatpush2.msra.mxu0 0.0
    %2826 = vmatprep.subr.mxu0 0.0
    %2827 = vmatpush2.msra.mxu0 0.0
    %2828 = vmatprep.subr.mxu0 0.0
    %2829 = vmatpush2.msra.mxu0 0.0
    %2830 = vmatprep.subr.mxu0 0.0
    %2831 = vmatpush2.msra.mxu0 0.0
    %2832 = vmatprep.subr.mxu0 0.0
    %2833 = vmatpush2.msra.mxu0 0.0
    %2834 = vmatprep.mubr.f32.mxu0 0.0
    %2835 = vmatmul.mubr.f32.gmra.mxu0 %v2768
    %v2836 = vpop.f32.mrf.mxu0
    %v2837 = vadd.f32 0.0, %v2836
    %v2838 = vpop.f32.mrf.mxu0
    %2839 = vdwg.mxu0
    %v2840 = vadd.f32 %v2661, %v2837
    %v2841 = vxor.u32 %v2840, 2147483648
    %v2842 = vmul.f32 %v2841, 1.442695
    %v2843 = vpow.pop %v2842
    %v2844 = vadd.f32 %v2843, 1.0
    %v2845 = vrcp.pop %v2844
    %v2846 = vmul.f32 1.0, %v2845
    %v2847 = vtanh.pop %v2840
    %v2849 = vrot.slane %v2641, 4
    %v2851 = vmul.f32 %v2846, %v2849
    %2853 = vrot.lane.b32.xlu0 %v2847, 64
    %v2854 = vpop.permute.xlu0 %2853
    %v2856 = vmul.f32 %v2846, %v2854
    %2858 = vrot.lane.b32.xlu0 %v2856, 32
    %v2859 = vpop.permute.xlu0 %2858
    %v2861 = vadd.f32 %v2851, %v2859
    %v2862 = vtanh.pop %v2861
    %2864 = vrot.lane.b32.xlu0 %v2862, 64
    %v2865 = vpop.permute.xlu0 %2864
    %v2867 = vmul.f32 %v2846, %v2865
    %2869 = vrot.lane.b32.xlu0 %v2764, 32
    %v2870 = vpop.permute.xlu0 %2869
    %s2872 = scalar_lea.vmem [#allocation3], 44
    %2873 = vst.msk [vmem:[%s2872 - $0x4] sm:$0xf0] %vm458, %v2870
    %2875 = vrot.lane.b32.xlu0 %v2867, 32
    %v2876 = vpop.permute.xlu0 %2875
    %s2878 = scalar_lea.vmem [#allocation4], 16
    %2879 = vst.msk [vmem:[%s2878] sm:$0xf] %vm451, %v2876
    %v2880 = vld [vmem:[#allocation2 + $0x60] sm:$0xf]
    %v2881 = vld [vmem:[#allocation2 + $0x18] sm:$0xf0]
    %v2882 = vrot.slane %v2764, 4
    %2883 = vrot.lane.b32.xlu0 %v2882, 32
    %v2884 = vpop.permute.xlu0 %2883
    %v2885 = vsel %vm250, %v2884, 0
    %2887 = vmatprep.subr.mxu0 0.0
    %2888 = vmatpush1.msra.mxu0 0.0
    %2889 = vmatprep.subr.mxu0 0.0
    %2890 = vmatpush1.msra.mxu0 0.0
    %2891 = vmatprep.subr.mxu0 0.0
    %2892 = vmatpush1.msra.mxu0 0.0
    %2893 = vmatprep.subr.mxu0 0.0
    %2894 = vmatpush1.msra.mxu0 0.0
    %2895 = vmatprep.subr.mxu0 0.0
    %2896 = vmatpush1.msra.mxu0 0.0
    %2897 = vmatprep.subr.mxu0 0.0
    %2898 = vmatpush1.msra.mxu0 0.0
    %2899 = vmatprep.subr.mxu0 0.0
    %2900 = vmatpush1.msra.mxu0 0.0
    %2901 = vmatprep.subr.mxu0 0.0
    %2902 = vmatpush1.msra.mxu0 0.0
    %2903 = vmatprep.subr.mxu0 0.0
    %2904 = vmatpush1.msra.mxu0 0.0
    %2905 = vmatprep.subr.mxu0 0.0
    %2906 = vmatpush1.msra.mxu0 0.0
    %2907 = vmatprep.subr.mxu0 0.0
    %2908 = vmatpush1.msra.mxu0 0.0
    %2909 = vmatprep.subr.mxu0 0.0
    %2910 = vmatpush1.msra.mxu0 0.0
    %2911 = vmatprep.subr.mxu0 0.0
    %2912 = vmatpush1.msra.mxu0 %v243
    %2913 = vmatprep.subr.mxu0 0.0
    %2914 = vmatpush1.msra.mxu0 %v242
    %2915 = vmatprep.subr.mxu0 0.0
    %2916 = vmatpush1.msra.mxu0 %v241
    %2917 = vmatprep.subr.mxu0 0.0
    %2918 = vmatpush1.msra.mxu0 %v240
    %2919 = vmatprep.subr.mxu0 0.0
    %2920 = vmatpush2.msra.mxu0 0.0
    %2921 = vmatprep.subr.mxu0 0.0
    %2922 = vmatpush2.msra.mxu0 0.0
    %2923 = vmatprep.subr.mxu0 0.0
    %2924 = vmatpush2.msra.mxu0 0.0
    %2925 = vmatprep.subr.mxu0 0.0
    %2926 = vmatpush2.msra.mxu0 0.0
    %2927 = vmatprep.subr.mxu0 0.0
    %2928 = vmatpush2.msra.mxu0 0.0
    %2929 = vmatprep.subr.mxu0 0.0
    %2930 = vmatpush2.msra.mxu0 0.0
    %2931 = vmatprep.subr.mxu0 0.0
    %2932 = vmatpush2.msra.mxu0 0.0
    %2933 = vmatprep.subr.mxu0 0.0
    %2934 = vmatpush2.msra.mxu0 0.0
    %2935 = vmatprep.subr.mxu0 0.0
    %2936 = vmatpush2.msra.mxu0 0.0
    %2937 = vmatprep.subr.mxu0 0.0
    %2938 = vmatpush2.msra.mxu0 0.0
    %2939 = vmatprep.subr.mxu0 0.0
    %2940 = vmatpush2.msra.mxu0 0.0
    %2941 = vmatprep.subr.mxu0 0.0
    %2942 = vmatpush2.msra.mxu0 0.0
    %2943 = vmatprep.subr.mxu0 0.0
    %2944 = vmatpush2.msra.mxu0 0.0
    %2945 = vmatprep.subr.mxu0 0.0
    %2946 = vmatpush2.msra.mxu0 0.0
    %2947 = vmatprep.subr.mxu0 0.0
    %2948 = vmatpush2.msra.mxu0 0.0
    %2949 = vmatprep.subr.mxu0 0.0
    %2950 = vmatpush2.msra.mxu0 0.0
    %2951 = vmatprep.mubr.f32.mxu0 0.0
    %2952 = vmatmul.mubr.f32.gmra.mxu0 %v2885
    %v2953 = vpop.f32.mrf.mxu0
    %v2954 = vadd.f32 0.0, %v2953
    %v2955 = vpop.f32.mrf.mxu0
    %2956 = vdwg.mxu0
    %v2957 = vadd.f32 %v2880, %v2954
    %v2958 = vxor.u32 %v2957, 2147483648
    %v2959 = vmul.f32 %v2958, 1.442695
    %v2960 = vpow.pop %v2959
    %v2961 = vadd.f32 %v2960, 1.0
    %v2962 = vrcp.pop %v2961
    %v2963 = vmul.f32 1.0, %v2962
    %v2964 = vtanh.pop %v2957
    %v2966 = vrot.slane %v2758, 4
    %v2968 = vmul.f32 %v2963, %v2966
    %2970 = vrot.lane.b32.xlu0 %v2964, 64
    %v2971 = vpop.permute.xlu0 %2970
    %v2973 = vmul.f32 %v2963, %v2971
    %2975 = vrot.lane.b32.xlu0 %v2973, 32
    %v2976 = vpop.permute.xlu0 %2975
    %v2978 = vadd.f32 %v2968, %v2976
    %v2979 = vtanh.pop %v2978
    %2981 = vrot.lane.b32.xlu0 %v2979, 64
    %v2982 = vpop.permute.xlu0 %2981
    %v2984 = vmul.f32 %v2963, %v2982
    %v2985 = vsel %vm250, %v2876, 0
    %2987 = vmatprep.subr.mxu0 0.0
    %2988 = vmatpush1.msra.mxu0 0.0
    %2989 = vmatprep.subr.mxu0 0.0
    %2990 = vmatpush1.msra.mxu0 0.0
    %2991 = vmatprep.subr.mxu0 0.0
    %2992 = vmatpush1.msra.mxu0 0.0
    %2993 = vmatprep.subr.mxu0 0.0
    %2994 = vmatpush1.msra.mxu0 0.0
    %2995 = vmatprep.subr.mxu0 0.0
    %2996 = vmatpush1.msra.mxu0 0.0
    %2997 = vmatprep.subr.mxu0 0.0
    %2998 = vmatpush1.msra.mxu0 0.0
    %2999 = vmatprep.subr.mxu0 0.0
    %3000 = vmatpush1.msra.mxu0 0.0
    %3001 = vmatprep.subr.mxu0 0.0
    %3002 = vmatpush1.msra.mxu0 0.0
    %3003 = vmatprep.subr.mxu0 0.0
    %3004 = vmatpush1.msra.mxu0 0.0
    %3005 = vmatprep.subr.mxu0 0.0
    %3006 = vmatpush1.msra.mxu0 0.0
    %3007 = vmatprep.subr.mxu0 0.0
    %3008 = vmatpush1.msra.mxu0 0.0
    %3009 = vmatprep.subr.mxu0 0.0
    %3010 = vmatpush1.msra.mxu0 0.0
    %3011 = vmatprep.subr.mxu0 0.0
    %3012 = vmatpush1.msra.mxu0 %v247
    %3013 = vmatprep.subr.mxu0 0.0
    %3014 = vmatpush1.msra.mxu0 %v246
    %3015 = vmatprep.subr.mxu0 0.0
    %3016 = vmatpush1.msra.mxu0 %v245
    %3017 = vmatprep.subr.mxu0 0.0
    %3018 = vmatpush1.msra.mxu0 %v244
    %3019 = vmatprep.subr.mxu0 0.0
    %3020 = vmatpush2.msra.mxu0 0.0
    %3021 = vmatprep.subr.mxu0 0.0
    %3022 = vmatpush2.msra.mxu0 0.0
    %3023 = vmatprep.subr.mxu0 0.0
    %3024 = vmatpush2.msra.mxu0 0.0
    %3025 = vmatprep.subr.mxu0 0.0
    %3026 = vmatpush2.msra.mxu0 0.0
    %3027 = vmatprep.subr.mxu0 0.0
    %3028 = vmatpush2.msra.mxu0 0.0
    %3029 = vmatprep.subr.mxu0 0.0
    %3030 = vmatpush2.msra.mxu0 0.0
    %3031 = vmatprep.subr.mxu0 0.0
    %3032 = vmatpush2.msra.mxu0 0.0
    %3033 = vmatprep.subr.mxu0 0.0
    %3034 = vmatpush2.msra.mxu0 0.0
    %3035 = vmatprep.subr.mxu0 0.0
    %3036 = vmatpush2.msra.mxu0 0.0
    %3037 = vmatprep.subr.mxu0 0.0
    %3038 = vmatpush2.msra.mxu0 0.0
    %3039 = vmatprep.subr.mxu0 0.0
    %3040 = vmatpush2.msra.mxu0 0.0
    %3041 = vmatprep.subr.mxu0 0.0
    %3042 = vmatpush2.msra.mxu0 0.0
    %3043 = vmatprep.subr.mxu0 0.0
    %3044 = vmatpush2.msra.mxu0 0.0
    %3045 = vmatprep.subr.mxu0 0.0
    %3046 = vmatpush2.msra.mxu0 0.0
    %3047 = vmatprep.subr.mxu0 0.0
    %3048 = vmatpush2.msra.mxu0 0.0
    %3049 = vmatprep.subr.mxu0 0.0
    %3050 = vmatpush2.msra.mxu0 0.0
    %3051 = vmatprep.mubr.f32.mxu0 0.0
    %3052 = vmatmul.mubr.f32.gmra.mxu0 %v2985
    %v3053 = vpop.f32.mrf.mxu0
    %v3054 = vadd.f32 0.0, %v3053
    %v3055 = vpop.f32.mrf.mxu0
    %3056 = vdwg.mxu0
    %v3058 = vrot.slane %v3054, 4
    %v3060 = vadd.f32 %v2881, %v3058
    %v3061 = vxor.u32 %v3060, 2147483648
    %v3062 = vmul.f32 %v3061, 1.442695
    %v3063 = vpow.pop %v3062
    %v3064 = vadd.f32 %v3063, 1.0
    %v3065 = vrcp.pop %v3064
    %v3066 = vmul.f32 1.0, %v3065
    %v3067 = vtanh.pop %v3060
    %v3069 = vrot.slane %v2861, 4
    %v3071 = vmul.f32 %v3066, %v3069
    %3073 = vrot.lane.b32.xlu0 %v3067, 64
    %v3074 = vpop.permute.xlu0 %3073
    %v3076 = vmul.f32 %v3066, %v3074
    %3078 = vrot.lane.b32.xlu0 %v3076, 32
    %v3079 = vpop.permute.xlu0 %3078
    %v3081 = vadd.f32 %v3071, %v3079
    %v3082 = vtanh.pop %v3081
    %3084 = vrot.lane.b32.xlu0 %v3082, 64
    %v3085 = vpop.permute.xlu0 %3084
    %v3087 = vmul.f32 %v3066, %v3085
    %3089 = vrot.lane.b32.xlu0 %v2984, 32
    %v3090 = vpop.permute.xlu0 %3089
    %s3092 = scalar_lea.vmem [#allocation3], 48
    %3093 = vst.msk [vmem:[%s3092] sm:$0xf] %vm451, %v3090
    %3095 = vrot.lane.b32.xlu0 %v3087, 32
    %v3096 = vpop.permute.xlu0 %3095
    %s3098 = scalar_lea.vmem [#allocation4], 12
    %3099 = vst.msk [vmem:[%s3098 - $0x4] sm:$0xf0] %vm458, %v3096
    %v3100 = vld [vmem:[#allocation2 + $0x60] sm:$0xf0]
    %v3101 = vld [vmem:[#allocation2 + $0x18] sm:$0xf]
    %v3102 = vsel %vm250, %v3090, 0
    %3104 = vmatprep.subr.mxu0 0.0
    %3105 = vmatpush1.msra.mxu0 0.0
    %3106 = vmatprep.subr.mxu0 0.0
    %3107 = vmatpush1.msra.mxu0 0.0
    %3108 = vmatprep.subr.mxu0 0.0
    %3109 = vmatpush1.msra.mxu0 0.0
    %3110 = vmatprep.subr.mxu0 0.0
    %3111 = vmatpush1.msra.mxu0 0.0
    %3112 = vmatprep.subr.mxu0 0.0
    %3113 = vmatpush1.msra.mxu0 0.0
    %3114 = vmatprep.subr.mxu0 0.0
    %3115 = vmatpush1.msra.mxu0 0.0
    %3116 = vmatprep.subr.mxu0 0.0
    %3117 = vmatpush1.msra.mxu0 0.0
    %3118 = vmatprep.subr.mxu0 0.0
    %3119 = vmatpush1.msra.mxu0 0.0
    %3120 = vmatprep.subr.mxu0 0.0
    %3121 = vmatpush1.msra.mxu0 0.0
    %3122 = vmatprep.subr.mxu0 0.0
    %3123 = vmatpush1.msra.mxu0 0.0
    %3124 = vmatprep.subr.mxu0 0.0
    %3125 = vmatpush1.msra.mxu0 0.0
    %3126 = vmatprep.subr.mxu0 0.0
    %3127 = vmatpush1.msra.mxu0 0.0
    %3128 = vmatprep.subr.mxu0 0.0
    %3129 = vmatpush1.msra.mxu0 %v243
    %3130 = vmatprep.subr.mxu0 0.0
    %3131 = vmatpush1.msra.mxu0 %v242
    %3132 = vmatprep.subr.mxu0 0.0
    %3133 = vmatpush1.msra.mxu0 %v241
    %3134 = vmatprep.subr.mxu0 0.0
    %3135 = vmatpush1.msra.mxu0 %v240
    %3136 = vmatprep.subr.mxu0 0.0
    %3137 = vmatpush2.msra.mxu0 0.0
    %3138 = vmatprep.subr.mxu0 0.0
    %3139 = vmatpush2.msra.mxu0 0.0
    %3140 = vmatprep.subr.mxu0 0.0
    %3141 = vmatpush2.msra.mxu0 0.0
    %3142 = vmatprep.subr.mxu0 0.0
    %3143 = vmatpush2.msra.mxu0 0.0
    %3144 = vmatprep.subr.mxu0 0.0
    %3145 = vmatpush2.msra.mxu0 0.0
    %3146 = vmatprep.subr.mxu0 0.0
    %3147 = vmatpush2.msra.mxu0 0.0
    %3148 = vmatprep.subr.mxu0 0.0
    %3149 = vmatpush2.msra.mxu0 0.0
    %3150 = vmatprep.subr.mxu0 0.0
    %3151 = vmatpush2.msra.mxu0 0.0
    %3152 = vmatprep.subr.mxu0 0.0
    %3153 = vmatpush2.msra.mxu0 0.0
    %3154 = vmatprep.subr.mxu0 0.0
    %3155 = vmatpush2.msra.mxu0 0.0
    %3156 = vmatprep.subr.mxu0 0.0
    %3157 = vmatpush2.msra.mxu0 0.0
    %3158 = vmatprep.subr.mxu0 0.0
    %3159 = vmatpush2.msra.mxu0 0.0
    %3160 = vmatprep.subr.mxu0 0.0
    %3161 = vmatpush2.msra.mxu0 0.0
    %3162 = vmatprep.subr.mxu0 0.0
    %3163 = vmatpush2.msra.mxu0 0.0
    %3164 = vmatprep.subr.mxu0 0.0
    %3165 = vmatpush2.msra.mxu0 0.0
    %3166 = vmatprep.subr.mxu0 0.0
    %3167 = vmatpush2.msra.mxu0 0.0
    %3168 = vmatprep.mubr.f32.mxu0 0.0
    %3169 = vmatmul.mubr.f32.gmra.mxu0 %v3102
    %v3170 = vpop.f32.mrf.mxu0
    %v3171 = vadd.f32 0.0, %v3170
    %v3172 = vpop.f32.mrf.mxu0
    %3173 = vdwg.mxu0
    %v3175 = vrot.slane %v3171, 4
    %v3177 = vadd.f32 %v3100, %v3175
    %v3178 = vxor.u32 %v3177, 2147483648
    %v3179 = vmul.f32 %v3178, 1.442695
    %v3180 = vpow.pop %v3179
    %v3181 = vadd.f32 %v3180, 1.0
    %v3182 = vrcp.pop %v3181
    %v3183 = vmul.f32 1.0, %v3182
    %v3184 = vtanh.pop %v3177
    %v3186 = vrot.slane %v2978, 4
    %v3188 = vmul.f32 %v3183, %v3186
    %3190 = vrot.lane.b32.xlu0 %v3184, 64
    %v3191 = vpop.permute.xlu0 %3190
    %v3193 = vmul.f32 %v3183, %v3191
    %3195 = vrot.lane.b32.xlu0 %v3193, 32
    %v3196 = vpop.permute.xlu0 %3195
    %v3198 = vadd.f32 %v3188, %v3196
    %v3199 = vtanh.pop %v3198
    %3201 = vrot.lane.b32.xlu0 %v3199, 64
    %v3202 = vpop.permute.xlu0 %3201
    %v3204 = vmul.f32 %v3183, %v3202
    %v3205 = vrot.slane %v3087, 4
    %3206 = vrot.lane.b32.xlu0 %v3205, 32
    %v3207 = vpop.permute.xlu0 %3206
    %v3208 = vsel %vm250, %v3207, 0
    %3210 = vmatprep.subr.mxu0 0.0
    %3211 = vmatpush1.msra.mxu0 0.0
    %3212 = vmatprep.subr.mxu0 0.0
    %3213 = vmatpush1.msra.mxu0 0.0
    %3214 = vmatprep.subr.mxu0 0.0
    %3215 = vmatpush1.msra.mxu0 0.0
    %3216 = vmatprep.subr.mxu0 0.0
    %3217 = vmatpush1.msra.mxu0 0.0
    %3218 = vmatprep.subr.mxu0 0.0
    %3219 = vmatpush1.msra.mxu0 0.0
    %3220 = vmatprep.subr.mxu0 0.0
    %3221 = vmatpush1.msra.mxu0 0.0
    %3222 = vmatprep.subr.mxu0 0.0
    %3223 = vmatpush1.msra.mxu0 0.0
    %3224 = vmatprep.subr.mxu0 0.0
    %3225 = vmatpush1.msra.mxu0 0.0
    %3226 = vmatprep.subr.mxu0 0.0
    %3227 = vmatpush1.msra.mxu0 0.0
    %3228 = vmatprep.subr.mxu0 0.0
    %3229 = vmatpush1.msra.mxu0 0.0
    %3230 = vmatprep.subr.mxu0 0.0
    %3231 = vmatpush1.msra.mxu0 0.0
    %3232 = vmatprep.subr.mxu0 0.0
    %3233 = vmatpush1.msra.mxu0 0.0
    %3234 = vmatprep.subr.mxu0 0.0
    %3235 = vmatpush1.msra.mxu0 %v247
    %3236 = vmatprep.subr.mxu0 0.0
    %3237 = vmatpush1.msra.mxu0 %v246
    %3238 = vmatprep.subr.mxu0 0.0
    %3239 = vmatpush1.msra.mxu0 %v245
    %3240 = vmatprep.subr.mxu0 0.0
    %3241 = vmatpush1.msra.mxu0 %v244
    %3242 = vmatprep.subr.mxu0 0.0
    %3243 = vmatpush2.msra.mxu0 0.0
    %3244 = vmatprep.subr.mxu0 0.0
    %3245 = vmatpush2.msra.mxu0 0.0
    %3246 = vmatprep.subr.mxu0 0.0
    %3247 = vmatpush2.msra.mxu0 0.0
    %3248 = vmatprep.subr.mxu0 0.0
    %3249 = vmatpush2.msra.mxu0 0.0
    %3250 = vmatprep.subr.mxu0 0.0
    %3251 = vmatpush2.msra.mxu0 0.0
    %3252 = vmatprep.subr.mxu0 0.0
    %3253 = vmatpush2.msra.mxu0 0.0
    %3254 = vmatprep.subr.mxu0 0.0
    %3255 = vmatpush2.msra.mxu0 0.0
    %3256 = vmatprep.subr.mxu0 0.0
    %3257 = vmatpush2.msra.mxu0 0.0
    %3258 = vmatprep.subr.mxu0 0.0
    %3259 = vmatpush2.msra.mxu0 0.0
    %3260 = vmatprep.subr.mxu0 0.0
    %3261 = vmatpush2.msra.mxu0 0.0
    %3262 = vmatprep.subr.mxu0 0.0
    %3263 = vmatpush2.msra.mxu0 0.0
    %3264 = vmatprep.subr.mxu0 0.0
    %3265 = vmatpush2.msra.mxu0 0.0
    %3266 = vmatprep.subr.mxu0 0.0
    %3267 = vmatpush2.msra.mxu0 0.0
    %3268 = vmatprep.subr.mxu0 0.0
    %3269 = vmatpush2.msra.mxu0 0.0
    %3270 = vmatprep.subr.mxu0 0.0
    %3271 = vmatpush2.msra.mxu0 0.0
    %3272 = vmatprep.subr.mxu0 0.0
    %3273 = vmatpush2.msra.mxu0 0.0
    %3274 = vmatprep.mubr.f32.mxu0 0.0
    %3275 = vmatmul.mubr.f32.gmra.mxu0 %v3208
    %v3276 = vpop.f32.mrf.mxu0
    %v3277 = vadd.f32 0.0, %v3276
    %v3278 = vpop.f32.mrf.mxu0
    %3279 = vdwg.mxu0
    %v3280 = vadd.f32 %v3101, %v3277
    %v3281 = vxor.u32 %v3280, 2147483648
    %v3282 = vmul.f32 %v3281, 1.442695
    %v3283 = vpow.pop %v3282
    %v3284 = vadd.f32 %v3283, 1.0
    %v3285 = vrcp.pop %v3284
    %v3286 = vmul.f32 1.0, %v3285
    %v3287 = vtanh.pop %v3280
    %v3289 = vrot.slane %v3081, 4
    %v3291 = vmul.f32 %v3286, %v3289
    %3293 = vrot.lane.b32.xlu0 %v3287, 64
    %v3294 = vpop.permute.xlu0 %3293
    %v3296 = vmul.f32 %v3286, %v3294
    %3298 = vrot.lane.b32.xlu0 %v3296, 32
    %v3299 = vpop.permute.xlu0 %3298
    %v3301 = vadd.f32 %v3291, %v3299
    %v3302 = vtanh.pop %v3301
    %3304 = vrot.lane.b32.xlu0 %v3302, 64
    %v3305 = vpop.permute.xlu0 %3304
    %v3307 = vmul.f32 %v3286, %v3305
    %3309 = vrot.lane.b32.xlu0 %v3204, 32
    %v3310 = vpop.permute.xlu0 %3309
    %s3312 = scalar_lea.vmem [#allocation3], 52
    %3313 = vst.msk [vmem:[%s3312 - $0x4] sm:$0xf0] %vm458, %v3310
    %3315 = vrot.lane.b32.xlu0 %v3307, 32
    %v3316 = vpop.permute.xlu0 %3315
    %s3318 = scalar_lea.vmem [#allocation4], 8
    %3319 = vst.msk [vmem:[%s3318] sm:$0xf] %vm451, %v3316
    %v3320 = vld [vmem:[#allocation2 + $0x70] sm:$0xf]
    %v3321 = vld [vmem:[#allocation2 + $0x8] sm:$0xf0]
    %v3322 = vrot.slane %v3204, 4
    %3323 = vrot.lane.b32.xlu0 %v3322, 32
    %v3324 = vpop.permute.xlu0 %3323
    %v3325 = vsel %vm250, %v3324, 0
    %3327 = vmatprep.subr.mxu0 0.0
    %3328 = vmatpush1.msra.mxu0 0.0
    %3329 = vmatprep.subr.mxu0 0.0
    %3330 = vmatpush1.msra.mxu0 0.0
    %3331 = vmatprep.subr.mxu0 0.0
    %3332 = vmatpush1.msra.mxu0 0.0
    %3333 = vmatprep.subr.mxu0 0.0
    %3334 = vmatpush1.msra.mxu0 0.0
    %3335 = vmatprep.subr.mxu0 0.0
    %3336 = vmatpush1.msra.mxu0 0.0
    %3337 = vmatprep.subr.mxu0 0.0
    %3338 = vmatpush1.msra.mxu0 0.0
    %3339 = vmatprep.subr.mxu0 0.0
    %3340 = vmatpush1.msra.mxu0 0.0
    %3341 = vmatprep.subr.mxu0 0.0
    %3342 = vmatpush1.msra.mxu0 0.0
    %3343 = vmatprep.subr.mxu0 0.0
    %3344 = vmatpush1.msra.mxu0 0.0
    %3345 = vmatprep.subr.mxu0 0.0
    %3346 = vmatpush1.msra.mxu0 0.0
    %3347 = vmatprep.subr.mxu0 0.0
    %3348 = vmatpush1.msra.mxu0 0.0
    %3349 = vmatprep.subr.mxu0 0.0
    %3350 = vmatpush1.msra.mxu0 0.0
    %3351 = vmatprep.subr.mxu0 0.0
    %3352 = vmatpush1.msra.mxu0 %v243
    %3353 = vmatprep.subr.mxu0 0.0
    %3354 = vmatpush1.msra.mxu0 %v242
    %3355 = vmatprep.subr.mxu0 0.0
    %3356 = vmatpush1.msra.mxu0 %v241
    %3357 = vmatprep.subr.mxu0 0.0
    %3358 = vmatpush1.msra.mxu0 %v240
    %3359 = vmatprep.subr.mxu0 0.0
    %3360 = vmatpush2.msra.mxu0 0.0
    %3361 = vmatprep.subr.mxu0 0.0
    %3362 = vmatpush2.msra.mxu0 0.0
    %3363 = vmatprep.subr.mxu0 0.0
    %3364 = vmatpush2.msra.mxu0 0.0
    %3365 = vmatprep.subr.mxu0 0.0
    %3366 = vmatpush2.msra.mxu0 0.0
    %3367 = vmatprep.subr.mxu0 0.0
    %3368 = vmatpush2.msra.mxu0 0.0
    %3369 = vmatprep.subr.mxu0 0.0
    %3370 = vmatpush2.msra.mxu0 0.0
    %3371 = vmatprep.subr.mxu0 0.0
    %3372 = vmatpush2.msra.mxu0 0.0
    %3373 = vmatprep.subr.mxu0 0.0
    %3374 = vmatpush2.msra.mxu0 0.0
    %3375 = vmatprep.subr.mxu0 0.0
    %3376 = vmatpush2.msra.mxu0 0.0
    %3377 = vmatprep.subr.mxu0 0.0
    %3378 = vmatpush2.msra.mxu0 0.0
    %3379 = vmatprep.subr.mxu0 0.0
    %3380 = vmatpush2.msra.mxu0 0.0
    %3381 = vmatprep.subr.mxu0 0.0
    %3382 = vmatpush2.msra.mxu0 0.0
    %3383 = vmatprep.subr.mxu0 0.0
    %3384 = vmatpush2.msra.mxu0 0.0
    %3385 = vmatprep.subr.mxu0 0.0
    %3386 = vmatpush2.msra.mxu0 0.0
    %3387 = vmatprep.subr.mxu0 0.0
    %3388 = vmatpush2.msra.mxu0 0.0
    %3389 = vmatprep.subr.mxu0 0.0
    %3390 = vmatpush2.msra.mxu0 0.0
    %3391 = vmatprep.mubr.f32.mxu0 0.0
    %3392 = vmatmul.mubr.f32.gmra.mxu0 %v3325
    %v3393 = vpop.f32.mrf.mxu0
    %v3394 = vadd.f32 0.0, %v3393
    %v3395 = vpop.f32.mrf.mxu0
    %3396 = vdwg.mxu0
    %v3397 = vadd.f32 %v3320, %v3394
    %v3398 = vxor.u32 %v3397, 2147483648
    %v3399 = vmul.f32 %v3398, 1.442695
    %v3400 = vpow.pop %v3399
    %v3401 = vadd.f32 %v3400, 1.0
    %v3402 = vrcp.pop %v3401
    %v3403 = vmul.f32 1.0, %v3402
    %v3404 = vtanh.pop %v3397
    %v3406 = vrot.slane %v3198, 4
    %v3408 = vmul.f32 %v3403, %v3406
    %3410 = vrot.lane.b32.xlu0 %v3404, 64
    %v3411 = vpop.permute.xlu0 %3410
    %v3413 = vmul.f32 %v3403, %v3411
    %3415 = vrot.lane.b32.xlu0 %v3413, 32
    %v3416 = vpop.permute.xlu0 %3415
    %v3418 = vadd.f32 %v3408, %v3416
    %v3419 = vtanh.pop %v3418
    %3421 = vrot.lane.b32.xlu0 %v3419, 64
    %v3422 = vpop.permute.xlu0 %3421
    %v3424 = vmul.f32 %v3403, %v3422
    %v3425 = vsel %vm250, %v3316, 0
    %3427 = vmatprep.subr.mxu0 0.0
    %3428 = vmatpush1.msra.mxu0 0.0
    %3429 = vmatprep.subr.mxu0 0.0
    %3430 = vmatpush1.msra.mxu0 0.0
    %3431 = vmatprep.subr.mxu0 0.0
    %3432 = vmatpush1.msra.mxu0 0.0
    %3433 = vmatprep.subr.mxu0 0.0
    %3434 = vmatpush1.msra.mxu0 0.0
    %3435 = vmatprep.subr.mxu0 0.0
    %3436 = vmatpush1.msra.mxu0 0.0
    %3437 = vmatprep.subr.mxu0 0.0
    %3438 = vmatpush1.msra.mxu0 0.0
    %3439 = vmatprep.subr.mxu0 0.0
    %3440 = vmatpush1.msra.mxu0 0.0
    %3441 = vmatprep.subr.mxu0 0.0
    %3442 = vmatpush1.msra.mxu0 0.0
    %3443 = vmatprep.subr.mxu0 0.0
    %3444 = vmatpush1.msra.mxu0 0.0
    %3445 = vmatprep.subr.mxu0 0.0
    %3446 = vmatpush1.msra.mxu0 0.0
    %3447 = vmatprep.subr.mxu0 0.0
    %3448 = vmatpush1.msra.mxu0 0.0
    %3449 = vmatprep.subr.mxu0 0.0
    %3450 = vmatpush1.msra.mxu0 0.0
    %3451 = vmatprep.subr.mxu0 0.0
    %3452 = vmatpush1.msra.mxu0 %v247
    %3453 = vmatprep.subr.mxu0 0.0
    %3454 = vmatpush1.msra.mxu0 %v246
    %3455 = vmatprep.subr.mxu0 0.0
    %3456 = vmatpush1.msra.mxu0 %v245
    %3457 = vmatprep.subr.mxu0 0.0
    %3458 = vmatpush1.msra.mxu0 %v244
    %3459 = vmatprep.subr.mxu0 0.0
    %3460 = vmatpush2.msra.mxu0 0.0
    %3461 = vmatprep.subr.mxu0 0.0
    %3462 = vmatpush2.msra.mxu0 0.0
    %3463 = vmatprep.subr.mxu0 0.0
    %3464 = vmatpush2.msra.mxu0 0.0
    %3465 = vmatprep.subr.mxu0 0.0
    %3466 = vmatpush2.msra.mxu0 0.0
    %3467 = vmatprep.subr.mxu0 0.0
    %3468 = vmatpush2.msra.mxu0 0.0
    %3469 = vmatprep.subr.mxu0 0.0
    %3470 = vmatpush2.msra.mxu0 0.0
    %3471 = vmatprep.subr.mxu0 0.0
    %3472 = vmatpush2.msra.mxu0 0.0
    %3473 = vmatprep.subr.mxu0 0.0
    %3474 = vmatpush2.msra.mxu0 0.0
    %3475 = vmatprep.subr.mxu0 0.0
    %3476 = vmatpush2.msra.mxu0 0.0
    %3477 = vmatprep.subr.mxu0 0.0
    %3478 = vmatpush2.msra.mxu0 0.0
    %3479 = vmatprep.subr.mxu0 0.0
    %3480 = vmatpush2.msra.mxu0 0.0
    %3481 = vmatprep.subr.mxu0 0.0
    %3482 = vmatpush2.msra.mxu0 0.0
    %3483 = vmatprep.subr.mxu0 0.0
    %3484 = vmatpush2.msra.mxu0 0.0
    %3485 = vmatprep.subr.mxu0 0.0
    %3486 = vmatpush2.msra.mxu0 0.0
    %3487 = vmatprep.subr.mxu0 0.0
    %3488 = vmatpush2.msra.mxu0 0.0
    %3489 = vmatprep.subr.mxu0 0.0
    %3490 = vmatpush2.msra.mxu0 0.0
    %3491 = vmatprep.mubr.f32.mxu0 0.0
    %3492 = vmatmul.mubr.f32.gmra.mxu0 %v3425
    %v3493 = vpop.f32.mrf.mxu0
    %v3494 = vadd.f32 0.0, %v3493
    %v3495 = vpop.f32.mrf.mxu0
    %3496 = vdwg.mxu0
    %v3498 = vrot.slane %v3494, 4
    %v3500 = vadd.f32 %v3321, %v3498
    %v3501 = vxor.u32 %v3500, 2147483648
    %v3502 = vmul.f32 %v3501, 1.442695
    %v3503 = vpow.pop %v3502
    %v3504 = vadd.f32 %v3503, 1.0
    %v3505 = vrcp.pop %v3504
    %v3506 = vmul.f32 1.0, %v3505
    %v3507 = vtanh.pop %v3500
    %v3509 = vrot.slane %v3301, 4
    %v3511 = vmul.f32 %v3506, %v3509
    %3513 = vrot.lane.b32.xlu0 %v3507, 64
    %v3514 = vpop.permute.xlu0 %3513
    %v3516 = vmul.f32 %v3506, %v3514
    %3518 = vrot.lane.b32.xlu0 %v3516, 32
    %v3519 = vpop.permute.xlu0 %3518
    %v3521 = vadd.f32 %v3511, %v3519
    %v3522 = vtanh.pop %v3521
    %3524 = vrot.lane.b32.xlu0 %v3522, 64
    %v3525 = vpop.permute.xlu0 %3524
    %v3527 = vmul.f32 %v3506, %v3525
    %3529 = vrot.lane.b32.xlu0 %v3424, 32
    %v3530 = vpop.permute.xlu0 %3529
    %s3532 = scalar_lea.vmem [#allocation3], 56
    %3533 = vst.msk [vmem:[%s3532] sm:$0xf] %vm451, %v3530
    %3535 = vrot.lane.b32.xlu0 %v3527, 32
    %v3536 = vpop.permute.xlu0 %3535
    %s3538 = scalar_lea.vmem [#allocation4], 4
    %3539 = vst.msk [vmem:[%s3538 - $0x4] sm:$0xf0] %vm458, %v3536
    %v3540 = vld [vmem:[#allocation2 + $0x70] sm:$0xf0]
    %v3541 = vld [vmem:[#allocation2 + $0x8] sm:$0xf]
    %v3542 = vsel %vm250, %v3530, 0
    %3544 = vmatprep.subr.mxu0 0.0
    %3545 = vmatpush1.msra.mxu0 0.0
    %3546 = vmatprep.subr.mxu0 0.0
    %3547 = vmatpush1.msra.mxu0 0.0
    %3548 = vmatprep.subr.mxu0 0.0
    %3549 = vmatpush1.msra.mxu0 0.0
    %3550 = vmatprep.subr.mxu0 0.0
    %3551 = vmatpush1.msra.mxu0 0.0
    %3552 = vmatprep.subr.mxu0 0.0
    %3553 = vmatpush1.msra.mxu0 0.0
    %3554 = vmatprep.subr.mxu0 0.0
    %3555 = vmatpush1.msra.mxu0 0.0
    %3556 = vmatprep.subr.mxu0 0.0
    %3557 = vmatpush1.msra.mxu0 0.0
    %3558 = vmatprep.subr.mxu0 0.0
    %3559 = vmatpush1.msra.mxu0 0.0
    %3560 = vmatprep.subr.mxu0 0.0
    %3561 = vmatpush1.msra.mxu0 0.0
    %3562 = vmatprep.subr.mxu0 0.0
    %3563 = vmatpush1.msra.mxu0 0.0
    %3564 = vmatprep.subr.mxu0 0.0
    %3565 = vmatpush1.msra.mxu0 0.0
    %3566 = vmatprep.subr.mxu0 0.0
    %3567 = vmatpush1.msra.mxu0 0.0
    %3568 = vmatprep.subr.mxu0 0.0
    %3569 = vmatpush1.msra.mxu0 %v243
    %3570 = vmatprep.subr.mxu0 0.0
    %3571 = vmatpush1.msra.mxu0 %v242
    %3572 = vmatprep.subr.mxu0 0.0
    %3573 = vmatpush1.msra.mxu0 %v241
    %3574 = vmatprep.subr.mxu0 0.0
    %3575 = vmatpush1.msra.mxu0 %v240
    %3576 = vmatprep.subr.mxu0 0.0
    %3577 = vmatpush2.msra.mxu0 0.0
    %3578 = vmatprep.subr.mxu0 0.0
    %3579 = vmatpush2.msra.mxu0 0.0
    %3580 = vmatprep.subr.mxu0 0.0
    %3581 = vmatpush2.msra.mxu0 0.0
    %3582 = vmatprep.subr.mxu0 0.0
    %3583 = vmatpush2.msra.mxu0 0.0
    %3584 = vmatprep.subr.mxu0 0.0
    %3585 = vmatpush2.msra.mxu0 0.0
    %3586 = vmatprep.subr.mxu0 0.0
    %3587 = vmatpush2.msra.mxu0 0.0
    %3588 = vmatprep.subr.mxu0 0.0
    %3589 = vmatpush2.msra.mxu0 0.0
    %3590 = vmatprep.subr.mxu0 0.0
    %3591 = vmatpush2.msra.mxu0 0.0
    %3592 = vmatprep.subr.mxu0 0.0
    %3593 = vmatpush2.msra.mxu0 0.0
    %3594 = vmatprep.subr.mxu0 0.0
    %3595 = vmatpush2.msra.mxu0 0.0
    %3596 = vmatprep.subr.mxu0 0.0
    %3597 = vmatpush2.msra.mxu0 0.0
    %3598 = vmatprep.subr.mxu0 0.0
    %3599 = vmatpush2.msra.mxu0 0.0
    %3600 = vmatprep.subr.mxu0 0.0
    %3601 = vmatpush2.msra.mxu0 0.0
    %3602 = vmatprep.subr.mxu0 0.0
    %3603 = vmatpush2.msra.mxu0 0.0
    %3604 = vmatprep.subr.mxu0 0.0
    %3605 = vmatpush2.msra.mxu0 0.0
    %3606 = vmatprep.subr.mxu0 0.0
    %3607 = vmatpush2.msra.mxu0 0.0
    %3608 = vmatprep.mubr.f32.mxu0 0.0
    %3609 = vmatmul.mubr.f32.gmra.mxu0 %v3542
    %v3610 = vpop.f32.mrf.mxu0
    %v3611 = vadd.f32 0.0, %v3610
    %v3612 = vpop.f32.mrf.mxu0
    %3613 = vdwg.mxu0
    %v3615 = vrot.slane %v3611, 4
    %v3617 = vadd.f32 %v3540, %v3615
    %v3618 = vxor.u32 %v3617, 2147483648
    %v3619 = vmul.f32 %v3618, 1.442695
    %v3620 = vpow.pop %v3619
    %v3621 = vadd.f32 %v3620, 1.0
    %v3622 = vrcp.pop %v3621
    %v3623 = vmul.f32 1.0, %v3622
    %v3624 = vtanh.pop %v3617
    %v3626 = vrot.slane %v3418, 4
    %v3628 = vmul.f32 %v3623, %v3626
    %3630 = vrot.lane.b32.xlu0 %v3624, 64
    %v3631 = vpop.permute.xlu0 %3630
    %v3633 = vmul.f32 %v3623, %v3631
    %3635 = vrot.lane.b32.xlu0 %v3633, 32
    %v3636 = vpop.permute.xlu0 %3635
    %v3638 = vadd.f32 %v3628, %v3636
    %v3639 = vtanh.pop %v3638
    %3641 = vrot.lane.b32.xlu0 %v3639, 64
    %v3642 = vpop.permute.xlu0 %3641
    %v3644 = vmul.f32 %v3623, %v3642
    %v3645 = vrot.slane %v3527, 4
    %3646 = vrot.lane.b32.xlu0 %v3645, 32
    %v3647 = vpop.permute.xlu0 %3646
    %v3648 = vsel %vm250, %v3647, 0
    %3650 = vmatprep.subr.mxu0 0.0
    %3651 = vmatpush1.msra.mxu0 0.0
    %3652 = vmatprep.subr.mxu0 0.0
    %3653 = vmatpush1.msra.mxu0 0.0
    %3654 = vmatprep.subr.mxu0 0.0
    %3655 = vmatpush1.msra.mxu0 0.0
    %3656 = vmatprep.subr.mxu0 0.0
    %3657 = vmatpush1.msra.mxu0 0.0
    %3658 = vmatprep.subr.mxu0 0.0
    %3659 = vmatpush1.msra.mxu0 0.0
    %3660 = vmatprep.subr.mxu0 0.0
    %3661 = vmatpush1.msra.mxu0 0.0
    %3662 = vmatprep.subr.mxu0 0.0
    %3663 = vmatpush1.msra.mxu0 0.0
    %3664 = vmatprep.subr.mxu0 0.0
    %3665 = vmatpush1.msra.mxu0 0.0
    %3666 = vmatprep.subr.mxu0 0.0
    %3667 = vmatpush1.msra.mxu0 0.0
    %3668 = vmatprep.subr.mxu0 0.0
    %3669 = vmatpush1.msra.mxu0 0.0
    %3670 = vmatprep.subr.mxu0 0.0
    %3671 = vmatpush1.msra.mxu0 0.0
    %3672 = vmatprep.subr.mxu0 0.0
    %3673 = vmatpush1.msra.mxu0 0.0
    %3674 = vmatprep.subr.mxu0 0.0
    %3675 = vmatpush1.msra.mxu0 %v247
    %3676 = vmatprep.subr.mxu0 0.0
    %3677 = vmatpush1.msra.mxu0 %v246
    %3678 = vmatprep.subr.mxu0 0.0
    %3679 = vmatpush1.msra.mxu0 %v245
    %3680 = vmatprep.subr.mxu0 0.0
    %3681 = vmatpush1.msra.mxu0 %v244
    %3682 = vmatprep.subr.mxu0 0.0
    %3683 = vmatpush2.msra.mxu0 0.0
    %3684 = vmatprep.subr.mxu0 0.0
    %3685 = vmatpush2.msra.mxu0 0.0
    %3686 = vmatprep.subr.mxu0 0.0
    %3687 = vmatpush2.msra.mxu0 0.0
    %3688 = vmatprep.subr.mxu0 0.0
    %3689 = vmatpush2.msra.mxu0 0.0
    %3690 = vmatprep.subr.mxu0 0.0
    %3691 = vmatpush2.msra.mxu0 0.0
    %3692 = vmatprep.subr.mxu0 0.0
    %3693 = vmatpush2.msra.mxu0 0.0
    %3694 = vmatprep.subr.mxu0 0.0
    %3695 = vmatpush2.msra.mxu0 0.0
    %3696 = vmatprep.subr.mxu0 0.0
    %3697 = vmatpush2.msra.mxu0 0.0
    %3698 = vmatprep.subr.mxu0 0.0
    %3699 = vmatpush2.msra.mxu0 0.0
    %3700 = vmatprep.subr.mxu0 0.0
    %3701 = vmatpush2.msra.mxu0 0.0
    %3702 = vmatprep.subr.mxu0 0.0
    %3703 = vmatpush2.msra.mxu0 0.0
    %3704 = vmatprep.subr.mxu0 0.0
    %3705 = vmatpush2.msra.mxu0 0.0
    %3706 = vmatprep.subr.mxu0 0.0
    %3707 = vmatpush2.msra.mxu0 0.0
    %3708 = vmatprep.subr.mxu0 0.0
    %3709 = vmatpush2.msra.mxu0 0.0
    %3710 = vmatprep.subr.mxu0 0.0
    %3711 = vmatpush2.msra.mxu0 0.0
    %3712 = vmatprep.subr.mxu0 0.0
    %3713 = vmatpush2.msra.mxu0 0.0
    %3714 = vmatprep.mubr.f32.mxu0 0.0
    %3715 = vmatmul.mubr.f32.gmra.mxu0 %v3648
    %v3716 = vpop.f32.mrf.mxu0
    %v3717 = vadd.f32 0.0, %v3716
    %v3718 = vpop.f32.mrf.mxu0
    %3719 = vdwg.mxu0
    %v3720 = vadd.f32 %v3541, %v3717
    %v3721 = vxor.u32 %v3720, 2147483648
    %v3722 = vmul.f32 %v3721, 1.442695
    %v3723 = vpow.pop %v3722
    %v3724 = vadd.f32 %v3723, 1.0
    %v3725 = vrcp.pop %v3724
    %v3726 = vmul.f32 1.0, %v3725
    %v3727 = vtanh.pop %v3720
    %v3729 = vrot.slane %v3521, 4
    %v3731 = vmul.f32 %v3726, %v3729
    %3733 = vrot.lane.b32.xlu0 %v3727, 64
    %v3734 = vpop.permute.xlu0 %3733
    %v3736 = vmul.f32 %v3726, %v3734
    %3738 = vrot.lane.b32.xlu0 %v3736, 32
    %v3739 = vpop.permute.xlu0 %3738
    %v3741 = vadd.f32 %v3731, %v3739
    %v3742 = vtanh.pop %v3741
    %3744 = vrot.lane.b32.xlu0 %v3742, 64
    %v3745 = vpop.permute.xlu0 %3744
    %v3747 = vmul.f32 %v3726, %v3745
    %3749 = vrot.lane.b32.xlu0 %v3644, 32
    %v3750 = vpop.permute.xlu0 %3749
    %s3752 = scalar_lea.vmem [#allocation3], 60
    %3753 = vst.msk [vmem:[%s3752 - $0x4] sm:$0xf0] %vm458, %v3750
    %3755 = vrot.lane.b32.xlu0 %v3747, 32
    %v3756 = vpop.permute.xlu0 %3755
    %3758 = vst.msk [vmem:[#allocation4] sm:$0xf] %vm451, %v3756
    %s3759 = sld [smem:[#allocation6]]
    %s3760 = sld [smem:[#allocation6 + $0x1]]
    %s3761 = ssub.s32 %s3759, 1
    %p3762 = scmp.lt.s32.totalorder %s3761, 0
    %s3763 = scalar_select %p3762, 15, %s3761
    %s3764 = sadd.s32 %s3760, 1
    %p3765 = scmp.gt.s32.totalorder %s3764, 15
    %s3766 = scalar_select %p3765, 15, %s3764
    %s3767 = smul.u32 %s3760, 4
    %s3768 = scalar_lea.vmem [#allocation3], %s3767
    %v3769 = vld [vmem:[%s3768] sm:$0xf]
    %s3770 = smul.u32 %s3763, 4
    %s3771 = scalar_lea.vmem [#allocation3], %s3770
    %v3772 = vld [vmem:[%s3771] sm:$0xf]
    %s3773 = smul.u32 %s3759, 4
    %s3774 = scalar_lea.vmem [#allocation4], %s3773
    %v3775 = vld [vmem:[%s3774] sm:$0xf]
    %s3776 = smul.u32 %s3766, 4
    %s3777 = scalar_lea.vmem [#allocation4], %s3776
    %v3778 = vld [vmem:[%s3777] sm:$0xf]
    %v3779 = vsub.f32 %v3769, %v3772
    %v3780 = vsub.f32 %v3775, %v3778
    %3782 = vrot.lane.b32.xlu0 %v3780, 32
    %v3783 = vpop.permute.xlu0 %3782
    %3786 = vrot.lane.b32.xlu0 %v3772, 64
    %v3787 = vpop.permute.xlu0 %3786
    %3790 = vrot.lane.b32.xlu0 %v3778, 96
    %v3791 = vpop.permute.xlu0 %3790
    %v3793 = vsel %vm250, %v3779, %v3783
    %v3794 = vsel %vm86, %v3793, %v3787
    %vm3795 = vcmask 785408
    %v3796 = vsel %vm3795, %v3794, %v3791
    %s3797 = sld [smem:[#allocation6 + $0x80]]
    %s3798 = sld [smem:[#allocation6 + $0x81]]
    %s3799 = ssub.s32 %s3797, 1
    %p3800 = scmp.lt.s32.totalorder %s3799, 0
    %s3801 = scalar_select %p3800, 15, %s3799
    %s3802 = sadd.s32 %s3798, 1
    %p3803 = scmp.gt.s32.totalorder %s3802, 15
    %s3804 = scalar_select %p3803, 15, %s3802
    %s3805 = smul.u32 %s3798, 4
    %s3806 = scalar_lea.vmem [#allocation3], %s3805
    %v3807 = vld [vmem:[%s3806] sm:$0xf]
    %s3808 = smul.u32 %s3801, 4
    %s3809 = scalar_lea.vmem [#allocation3], %s3808
    %v3810 = vld [vmem:[%s3809] sm:$0xf]
    %s3811 = smul.u32 %s3797, 4
    %s3812 = scalar_lea.vmem [#allocation4], %s3811
    %v3813 = vld [vmem:[%s3812] sm:$0xf]
    %s3814 = smul.u32 %s3804, 4
    %s3815 = scalar_lea.vmem [#allocation4], %s3814
    %v3816 = vld [vmem:[%s3815] sm:$0xf]
    %v3817 = vsub.f32 %v3807, %v3810
    %v3818 = vsub.f32 %v3813, %v3816
    %3820 = vrot.lane.b32.xlu0 %v3818, 32
    %v3821 = vpop.permute.xlu0 %3820
    %3824 = vrot.lane.b32.xlu0 %v3810, 64
    %v3825 = vpop.permute.xlu0 %3824
    %3828 = vrot.lane.b32.xlu0 %v3816, 96
    %v3829 = vpop.permute.xlu0 %3828
    %v3831 = vsel %vm250, %v3817, %v3821
    %v3832 = vsel %vm86, %v3831, %v3825
    %v3833 = vsel %vm3795, %v3832, %v3829
    %s3834 = sld [smem:[#allocation6 + $0x100]]
    %s3835 = sld [smem:[#allocation6 + $0x101]]
    %s3836 = ssub.s32 %s3834, 1
    %p3837 = scmp.lt.s32.totalorder %s3836, 0
    %s3838 = scalar_select %p3837, 15, %s3836
    %s3839 = sadd.s32 %s3835, 1
    %p3840 = scmp.gt.s32.totalorder %s3839, 15
    %s3841 = scalar_select %p3840, 15, %s3839
    %s3842 = smul.u32 %s3835, 4
    %s3843 = scalar_lea.vmem [#allocation3], %s3842
    %v3844 = vld [vmem:[%s3843] sm:$0xf]
    %s3845 = smul.u32 %s3838, 4
    %s3846 = scalar_lea.vmem [#allocation3], %s3845
    %v3847 = vld [vmem:[%s3846] sm:$0xf]
    %s3848 = smul.u32 %s3834, 4
    %s3849 = scalar_lea.vmem [#allocation4], %s3848
    %v3850 = vld [vmem:[%s3849] sm:$0xf]
    %s3851 = smul.u32 %s3841, 4
    %s3852 = scalar_lea.vmem [#allocation4], %s3851
    %v3853 = vld [vmem:[%s3852] sm:$0xf]
    %v3854 = vsub.f32 %v3844, %v3847
    %v3855 = vsub.f32 %v3850, %v3853
    %3857 = vrot.lane.b32.xlu0 %v3855, 32
    %v3858 = vpop.permute.xlu0 %3857
    %3861 = vrot.lane.b32.xlu0 %v3847, 64
    %v3862 = vpop.permute.xlu0 %3861
    %3865 = vrot.lane.b32.xlu0 %v3853, 96
    %v3866 = vpop.permute.xlu0 %3865
    %v3868 = vsel %vm250, %v3854, %v3858
    %v3869 = vsel %vm86, %v3868, %v3862
    %v3870 = vsel %vm3795, %v3869, %v3866
    %s3871 = sld [smem:[#allocation6 + $0x180]]
    %s3872 = sld [smem:[#allocation6 + $0x181]]
    %s3873 = ssub.s32 %s3871, 1
    %p3874 = scmp.lt.s32.totalorder %s3873, 0
    %s3875 = scalar_select %p3874, 15, %s3873
    %s3876 = sadd.s32 %s3872, 1
    %p3877 = scmp.gt.s32.totalorder %s3876, 15
    %s3878 = scalar_select %p3877, 15, %s3876
    %s3879 = smul.u32 %s3872, 4
    %s3880 = scalar_lea.vmem [#allocation3], %s3879
    %v3881 = vld [vmem:[%s3880] sm:$0xf]
    %s3882 = smul.u32 %s3875, 4
    %s3883 = scalar_lea.vmem [#allocation3], %s3882
    %v3884 = vld [vmem:[%s3883] sm:$0xf]
    %s3885 = smul.u32 %s3871, 4
    %s3886 = scalar_lea.vmem [#allocation4], %s3885
    %v3887 = vld [vmem:[%s3886] sm:$0xf]
    %s3888 = smul.u32 %s3878, 4
    %s3889 = scalar_lea.vmem [#allocation4], %s3888
    %v3890 = vld [vmem:[%s3889] sm:$0xf]
    %v3891 = vsub.f32 %v3881, %v3884
    %v3892 = vsub.f32 %v3887, %v3890
    %3894 = vrot.lane.b32.xlu0 %v3892, 32
    %v3895 = vpop.permute.xlu0 %3894
    %3898 = vrot.lane.b32.xlu0 %v3884, 64
    %v3899 = vpop.permute.xlu0 %3898
    %3902 = vrot.lane.b32.xlu0 %v3890, 96
    %v3903 = vpop.permute.xlu0 %3902
    %v3905 = vsel %vm250, %v3891, %v3895
    %v3906 = vsel %vm86, %v3905, %v3899
    %v3907 = vsel %vm3795, %v3906, %v3903
    %vm3908 = vcmask 1040384
    %v3909 = vsel %vm3908, %v3796, %v3833
    %v3911 = vrot.slane %v3870, 2
    %v3914 = vrot.slane %v3907, 2
    %v3916 = vsel %vm3908, %v3911, %v3914
    %v3917 = vld [vmem:[%s6] sm:$0xff]
    %v3918 = vld [vmem:[%s6 + $0x8] sm:$0xff]
    %v3919 = vld [vmem:[%s6 + $0x10] sm:$0xff]
    %v3920 = vld [vmem:[%s6 + $0x18] sm:$0xff]
    %v3921 = vld [vmem:[%s6 + $0x20] sm:$0xff]
    %v3922 = vld [vmem:[%s6 + $0x28] sm:$0xff]
    %v3923 = vld [vmem:[%s6 + $0x30] sm:$0xff]
    %v3924 = vld [vmem:[%s6 + $0x38] sm:$0xff]
    %v3925 = vld [vmem:[%s6 + $0x40] sm:$0xff]
    %v3926 = vld [vmem:[%s6 + $0x48] sm:$0xff]
    %v3927 = vld [vmem:[%s6 + $0x50] sm:$0xff]
    %v3928 = vld [vmem:[%s6 + $0x58] sm:$0xff]
    %v3929 = vld [vmem:[%s6 + $0x60] sm:$0xff]
    %v3930 = vld [vmem:[%s6 + $0x68] sm:$0xff]
    %v3931 = vld [vmem:[%s6 + $0x70] sm:$0xff]
    %v3932 = vld [vmem:[%s6 + $0x78] sm:$0xff]
    %v3933 = vld [vmem:[%s6 + $0x80] sm:$0xff]
    %v3934 = vld [vmem:[%s6 + $0x88] sm:$0xff]
    %v3935 = vld [vmem:[%s6 + $0x90] sm:$0xff]
    %v3936 = vld [vmem:[%s6 + $0x98] sm:$0xff]
    %v3937 = vld [vmem:[%s6 + $0xa0] sm:$0xff]
    %v3938 = vld [vmem:[%s6 + $0xa8] sm:$0xff]
    %v3939 = vld [vmem:[%s6 + $0xb0] sm:$0xff]
    %v3940 = vld [vmem:[%s6 + $0xb8] sm:$0xff]
    %v3941 = vld [vmem:[%s6 + $0xc0] sm:$0xff]
    %v3942 = vld [vmem:[%s6 + $0xc8] sm:$0xff]
    %v3943 = vld [vmem:[%s6 + $0xd0] sm:$0xff]
    %v3944 = vld [vmem:[%s6 + $0xd8] sm:$0xff]
    %v3945 = vld [vmem:[%s6 + $0xe0] sm:$0xff]
    %v3946 = vld [vmem:[%s6 + $0xe8] sm:$0xff]
    %v3947 = vld [vmem:[%s6 + $0xf0] sm:$0xff]
    %v3948 = vld [vmem:[%s6 + $0xf8] sm:$0xff]
    %v3949 = vld [vmem:[%s7] sm:$0x1]
    %v3951 = vlaneseq
    %v3952 = vshrl.u32 %v3951, 7
    %v3953 = vsub.s32 0, %v3952
    %v3954 = vrot.slane %v3949, %v3953
    %3956 = vmatprep.subr.mxu0 0.0
    %3957 = vmatpush1.msra.mxu0 %v3932
    %3958 = vmatprep.subr.mxu0 0.0
    %3959 = vmatpush1.msra.mxu0 %v3931
    %3960 = vmatprep.subr.mxu0 0.0
    %3961 = vmatpush1.msra.mxu0 %v3930
    %3962 = vmatprep.subr.mxu0 0.0
    %3963 = vmatpush1.msra.mxu0 %v3929
    %3964 = vmatprep.subr.mxu0 0.0
    %3965 = vmatpush1.msra.mxu0 %v3928
    %3966 = vmatprep.subr.mxu0 0.0
    %3967 = vmatpush1.msra.mxu0 %v3927
    %3968 = vmatprep.subr.mxu0 0.0
    %3969 = vmatpush1.msra.mxu0 %v3926
    %3970 = vmatprep.subr.mxu0 0.0
    %3971 = vmatpush1.msra.mxu0 %v3925
    %3972 = vmatprep.subr.mxu0 0.0
    %3973 = vmatpush1.msra.mxu0 %v3924
    %3974 = vmatprep.subr.mxu0 0.0
    %3975 = vmatpush1.msra.mxu0 %v3923
    %3976 = vmatprep.subr.mxu0 0.0
    %3977 = vmatpush1.msra.mxu0 %v3922
    %3978 = vmatprep.subr.mxu0 0.0
    %3979 = vmatpush1.msra.mxu0 %v3921
    %3980 = vmatprep.subr.mxu0 0.0
    %3981 = vmatpush1.msra.mxu0 %v3920
    %3982 = vmatprep.subr.mxu0 0.0
    %3983 = vmatpush1.msra.mxu0 %v3919
    %3984 = vmatprep.subr.mxu0 0.0
    %3985 = vmatpush1.msra.mxu0 %v3918
    %3986 = vmatprep.subr.mxu0 0.0
    %3987 = vmatpush1.msra.mxu0 %v3917
    %3988 = vmatprep.subr.mxu0 0.0
    %3989 = vmatpush2.msra.mxu0 %v3948
    %3990 = vmatprep.subr.mxu0 0.0
    %3991 = vmatpush2.msra.mxu0 %v3947
    %3992 = vmatprep.subr.mxu0 0.0
    %3993 = vmatpush2.msra.mxu0 %v3946
    %3994 = vmatprep.subr.mxu0 0.0
    %3995 = vmatpush2.msra.mxu0 %v3945
    %3996 = vmatprep.subr.mxu0 0.0
    %3997 = vmatpush2.msra.mxu0 %v3944
    %3998 = vmatprep.subr.mxu0 0.0
    %3999 = vmatpush2.msra.mxu0 %v3943
    %4000 = vmatprep.subr.mxu0 0.0
    %4001 = vmatpush2.msra.mxu0 %v3942
    %4002 = vmatprep.subr.mxu0 0.0
    %4003 = vmatpush2.msra.mxu0 %v3941
    %4004 = vmatprep.subr.mxu0 0.0
    %4005 = vmatpush2.msra.mxu0 %v3940
    %4006 = vmatprep.subr.mxu0 0.0
    %4007 = vmatpush2.msra.mxu0 %v3939
    %4008 = vmatprep.subr.mxu0 0.0
    %4009 = vmatpush2.msra.mxu0 %v3938
    %4010 = vmatprep.subr.mxu0 0.0
    %4011 = vmatpush2.msra.mxu0 %v3937
    %4012 = vmatprep.subr.mxu0 0.0
    %4013 = vmatpush2.msra.mxu0 %v3936
    %4014 = vmatprep.subr.mxu0 0.0
    %4015 = vmatpush2.msra.mxu0 %v3935
    %4016 = vmatprep.subr.mxu0 0.0
    %4017 = vmatpush2.msra.mxu0 %v3934
    %4018 = vmatprep.subr.mxu0 0.0
    %4019 = vmatpush2.msra.mxu0 %v3933
    %4020 = vmatprep.mubr.f32.mxu0 %v3916
    %4021 = vmatmul.mubr.f32.gmra.mxu0 %v3909
    %v4022 = vpop.f32.mrf.mxu0
    %v4023 = vadd.f32 %v3954, %v4022
    %v4024 = vpop.f32.mrf.mxu0
    %4025 = vdwg.mxu0
    %v4026 = vmax.f32 %v4023, 0.0
    %v4027 = vld [vmem:[%s8] sm:$0x1]
    %v4029 = vlaneseq
    %v4030 = vshrl.u32 %v4029, 7
    %v4031 = vsub.s32 0, %v4030
    %v4032 = vrot.slane %v4027, %v4031
    %v4034 = vmul.f32 %v4026, %v4032
    %vm4035 = vcmask 254976
    %v4036 = vsel %vm4035, %v4034, 0.0
    %4037 = vadd.xlane.f32.xlu0 %v4036
    %v4038 = vpop.xlane.xlu0 %4037
    %v4039 = vld [vmem:[#allocation5] sm:$0x1]
    %v4041 = vlaneseq
    %v4042 = vshrl.u32 %v4041, 7
    %v4043 = vsub.s32 0, %v4042
    %v4044 = vrot.slane %v4039, %v4043
    %v4046 = vadd.f32 %v4038, %v4044
    %v4047 = vxor.u32 %v4046, 2147483648
    %v4048 = vmul.f32 %v4047, 1.442695
    %v4049 = vpow.pop %v4048
    %v4050 = vadd.f32 %v4049, 1.0
    %v4051 = vrcp.pop %v4050
    %v4052 = vmul.f32 1.0, %v4051
    %vm4053 = vcmask 1024
    %4054 = vst.msk [vmem:[%s10] sm:$0x3] %vm4053, %v4052
    // Predicated region
    $region46: #{model_adu_relation_forward.1} parent=1 // pred_check
      _
    $region47: #{model_adu_relation_forward.1} parent=1 // pred_check_branch
      %4056 = sbr.rel (0) target = $region49
    $region48: #{model_adu_relation_forward.1} parent=1 // pred_region
      _
    $region49: #{model_adu_relation_forward.1} parent=1 // pred_fallthru
      _
    // Predicated region
    $region50: #{model_adu_relation_forward.1} parent=1 // pred_check
      _
    $region51: #{model_adu_relation_forward.1} parent=1 // pred_check_branch
      %4058 = sbr.rel (0) target = $region53
    $region52: #{model_adu_relation_forward.1} parent=1 // pred_region
      _
    $region53: #{model_adu_relation_forward.1} parent=1 // pred_fallthru
      _
    %4059 = vsyncpa [#allocation7], 1

</llo_original>
